<compile_context>
chip_gen: v5e
topology: v5e:2x2
jax: 0.10.0
libtpu: 0.0.40
codegen_flags: <defaults>
</compile_context>

<pallas_src>
import functools
import math

import jax
import jax.numpy as jnp
from jax.experimental import pallas as pl
from jax.experimental.pallas import tpu as pltpu

F32 = jnp.float32
K0, K1, K2 = 0.63576, 1.8732, 1.48695      # self.k of the reference module
LOG_ALPHA_CLIP = 8.0                        # clip(..., to=8)
EXP_NEG_CLIP = math.exp(-LOG_ALPHA_CLIP)    # exp(-log_alpha) at the +8 clip
EXP_POS_CLIP = math.exp(LOG_ALPHA_CLIP)     # exp(-log_alpha) at the -8 clip
THRESHOLD = 3.0                             # eval-mode zeroing threshold
VAR_EPS = 1e-6                              # sqrt(var + 1e-06)


# --------------------------------- kernels -----------------------------------

def _vd_train_kernel(x_ref, theta_ref, ls2_ref, bias_ref, eps_ref,
                     out_ref, kldn_ref, *, kl_dtype):
    """Fused VariationalDropout training step for one output-channel tile.

    out  = sqrt(x^2 @ exp(log_sigma2) + 1e-6) * eps + x @ theta + bias
    kldn = per-lane (column) partial sums of the negative-KL integrand; the
           scalar finalize happens in the wrapper so the grid axis stays
           fully parallel (no accumulator revisiting).
    """
    x = x_ref[...]
    theta = theta_ref[...]
    ls2 = ls2_ref[...]

    # exp(log_sigma2): needed for the variance matmul AND reused by the KL
    # epilogue below (zero extra EUP exps for that term).
    exp_ls2 = jnp.exp(ls2)

    # ---- stochastic forward (training branch) ----
    # Default matmul precision passes the 1e-2 parity check; pass an explicit
    # precision via jnp.dot if tighter parity vs Precision.HIGHEST is needed.
    mu = jnp.dot(x, theta, preferred_element_type=jnp.float32)
    var = jnp.dot(x * x, exp_ls2, preferred_element_type=jnp.float32)
    out_ref[...] = jnp.sqrt(var + VAR_EPS) * eps_ref[...] + mu + bias_ref[...]

    # ---- negative-KL integrand on the SAME theta/log_sigma2 tiles ----
    # Elementwise transcendental work in kl_dtype (bf16 on v6e/v7x, f32 else);
    # the k-axis (sublane) reduction is accumulated in f32.
    t = theta.astype(kl_dtype)
    t2 = t * t
    raw_la = ls2.astype(kl_dtype) - jnp.log(t2)                      # 1 log
    log_alpha = jnp.clip(raw_la, -LOG_ALPHA_CLIP, LOG_ALPHA_CLIP)

    # exp(-log_alpha) WITHOUT another EUP exp: in the unclipped range
    #   exp(-log_alpha) = theta^2 / exp(log_sigma2)
    # and where the clip is active select the boundary constants.
    inv_exp_ls2 = pl.reciprocal(exp_ls2, approx=True)                # approx vrcp
    exp_neg_la = t2 * inv_exp_ls2.astype(kl_dtype)
    exp_neg_la = jnp.where(raw_la > LOG_ALPHA_CLIP, EXP_NEG_CLIP, exp_neg_la)
    exp_neg_la = jnp.where(raw_la < -LOG_ALPHA_CLIP, EXP_POS_CLIP, exp_neg_la)

    sig_den = 1.0 + jnp.exp(-(K1 + K2 * log_alpha))                  # 1 exp
    sig = pl.reciprocal(sig_den.astype(jnp.float32), approx=True)    # approx vrcp
    softplus = jnp.log(1.0 + exp_neg_la)                             # 1 log

    neg_kl = K0 * sig - 0.5 * softplus.astype(jnp.float32) - K0      # f32
    kldn_ref[...] = jnp.sum(neg_kl, axis=0, keepdims=True)           # (1, TN)


def _vd_eval_kernel(x_ref, theta_ref, ls2_ref, bias_ref, out_ref, *, threshold):
    """Eval branch, module-faithful: mask built in-kernel from both params."""
    theta = theta_ref[...]
    log_alpha = jnp.clip(ls2_ref[...] - jnp.log(theta * theta),
                         -LOG_ALPHA_CLIP, LOG_ALPHA_CLIP)
    theta_m = jnp.where(log_alpha > threshold, 0.0, theta)
    out_ref[...] = (jnp.dot(x_ref[...], theta_m,
                            preferred_element_type=jnp.float32)
                    + bias_ref[...])


def _vd_eval_premasked_kernel(x_ref, theta_ref, bias_ref, out_ref):
    """Eval fast path: masked theta precomputed once outside; half the HBM bytes."""
    out_ref[...] = (jnp.dot(x_ref[...], theta_ref[...],
                            preferred_element_type=jnp.float32)
                    + bias_ref[...])


# ------------------------------ tiling helpers --------------------------------

def _device_kind():
    try:
        return jax.devices()[0].device_kind.lower()
    except Exception:
        return ""


def _kl_compute_dtype():
    """bf16 EUP exists on v6e/v7x; keep f32 on earlier chips (no bf16 VPU/EUP)."""
    kind = _device_kind()
    return jnp.bfloat16 if ("v6" in kind or "v7" in kind) else jnp.float32


def _vmem_capacity_bytes():
    try:
        return int(pltpu.get_tpu_info().vmem_capacity_bytes)
    except Exception:
        return 64 << 20          # v7x per-TC physical VMEM (smallest current gen)


def _pick_tile_n(n, k):
    """Lane-dense output-channel tile width.

    Wants: a multiple of 128, >=2 (ideally an even number of) grid steps so the
    'parallel' axis balances across both v7x TensorCores, and the double-
    buffered (k, tn) theta/log_sigma2 blocks within a VMEM budget.
    """
    if n % 128 != 0:
        # TODO(synk): pad out_size to a 128 multiple for lane-dense stores.
        return n
    budget = _vmem_capacity_bytes() // 4          # share for the param buffers
    fits = lambda tn: 2 * 2 * k * tn * 4 <= budget  # 2 params x 2 bufs x f32
    cands = [tn for tn in range(n, 0, -128) if n % tn == 0]
    for want_even in (True, False):
        for tn in cands:
            steps = n // tn
            if steps < 2 or (want_even and steps % 2):
                continue
            if fits(tn):
                return tn
    for tn in cands:                              # n == 128, or nothing "nice" fits
        if fits(tn):
            return tn
    # TODO(synk): for very large input_size add an 'arbitrary' K grid axis with
    # VMEM accumulators instead of shrinking tn below one lane-dense tile.
    return 128


def _vmem_limit_bytes(k, tn, bp):
    """Scoped-VMEM limit sized to the actual double-buffered working set."""
    params = 2 * 2 * k * tn * 4                   # theta + log_sigma2 blocks
    acts = 2 * (bp * k + 3 * bp * tn + 2 * tn) * 4
    need = params + acts + (4 << 20)              # headroom for internal scratch
    cap = _vmem_capacity_bytes()
    return int(min(max(need, 32 << 20), cap - (8 << 20)))


def _pad_rows(a, rows):
    pad = rows - a.shape[0]
    return a if pad == 0 else jnp.pad(a, ((0, pad), (0, 0)))


# --------------------------------- wrappers -----------------------------------

def variational_dropout_train(x, theta, log_sigma2, bias, eps):
    """Training-mode forward: returns (std * eps + mu + bias, kld)."""
    x = x.astype(F32)
    theta = theta.astype(F32)
    log_sigma2 = log_sigma2.astype(F32)
    bias = bias.astype(F32)
    eps = eps.astype(F32)

    b, k = x.shape
    k2, n = theta.shape
    assert k2 == k and eps.shape == (b, n) and bias.shape == (n,)

    tn = _pick_tile_n(n, k)
    bp = ((b + 7) // 8) * 8                    # pad batch to an 8-sublane tile
    xp = _pad_rows(x, bp)
    ep = _pad_rows(eps, bp)
    bias2 = bias.reshape(1, n)
    grid = (n // tn,)

    kernel = functools.partial(_vd_train_kernel, kl_dtype=_kl_compute_dtype())

    out_p, kld_neg = pl.pallas_call(
        kernel,
        grid=grid,
        in_specs=[
            pl.BlockSpec((bp, k), lambda j: (0, 0)),     # x: resident across tiles
            pl.BlockSpec((k, tn), lambda j: (0, j)),     # theta tile
            pl.BlockSpec((k, tn), lambda j: (0, j)),     # log_sigma2 tile
            pl.BlockSpec((1, tn), lambda j: (0, j)),     # bias tile
            pl.BlockSpec((bp, tn), lambda j: (0, j)),    # eps tile
        ],
        out_specs=(
            pl.BlockSpec((bp, tn), lambda j: (0, j)),    # lane-dense output tile
            pl.BlockSpec((1, tn), lambda j: (0, j)),     # per-lane KL partials
        ),
        out_shape=(
            jax.ShapeDtypeStruct((bp, n), F32),
            jax.ShapeDtypeStruct((1, n), F32),
        ),
        compiler_params=pltpu.CompilerParams(
            dimension_semantics=("parallel",),           # megacore split on v7x
            vmem_limit_bytes=_vmem_limit_bytes(k, tn, bp)),
    )(xp, theta, log_sigma2, bias2, ep)

    kld = -jnp.sum(kld_neg) / float(k * n)
    return out_p[:b], kld


def variational_dropout_eval(x, theta, log_sigma2, bias, threshold=THRESHOLD):
    """Eval-mode forward (module-faithful): mask built in-kernel from both params."""
    x = x.astype(F32)
    theta = theta.astype(F32)
    log_sigma2 = log_sigma2.astype(F32)
    bias = bias.astype(F32)

    b, k = x.shape
    k2, n = theta.shape
    assert k2 == k and bias.shape == (n,)

    tn = _pick_tile_n(n, k)
    bp = ((b + 7) // 8) * 8
    xp = _pad_rows(x, bp)
    bias2 = bias.reshape(1, n)
    grid = (n // tn,)

    out_p = pl.pallas_call(
        functools.partial(_vd_eval_kernel, threshold=float(threshold)),
        grid=grid,
        in_specs=[
            pl.BlockSpec((bp, k), lambda j: (0, 0)),
            pl.BlockSpec((k, tn), lambda j: (0, j)),
            pl.BlockSpec((k, tn), lambda j: (0, j)),
            pl.BlockSpec((1, tn), lambda j: (0, j)),
        ],
        out_specs=pl.BlockSpec((bp, tn), lambda j: (0, j)),
        out_shape=jax.ShapeDtypeStruct((bp, n), F32),
        compiler_params=pltpu.CompilerParams(
            dimension_semantics=("parallel",),
            vmem_limit_bytes=_vmem_limit_bytes(k, tn, bp)),
    )(xp, theta, log_sigma2, bias2)

    return out_p[:b]


def precompute_eval_theta(theta, log_sigma2, threshold=THRESHOLD):
    """One-time (per weight update) precompute of the eval masked weights."""
    theta = theta.astype(F32)
    log_alpha = jnp.clip(log_sigma2.astype(F32) - jnp.log(theta * theta),
                         -LOG_ALPHA_CLIP, LOG_ALPHA_CLIP)
    return jnp.where(log_alpha > threshold, 0.0, theta)


def variational_dropout_eval_premasked(x, theta_masked, bias):
    """Eval fast path: streams only the precomputed masked theta (half HBM traffic)."""
    x = x.astype(F32)
    theta_masked = theta_masked.astype(F32)
    bias = bias.astype(F32)

    b, k = x.shape
    k2, n = theta_masked.shape
    assert k2 == k and bias.shape == (n,)

    tn = _pick_tile_n(n, k)
    bp = ((b + 7) // 8) * 8
    xp = _pad_rows(x, bp)
    bias2 = bias.reshape(1, n)
    grid = (n // tn,)

    out_p = pl.pallas_call(
        _vd_eval_premasked_kernel,
        grid=grid,
        in_specs=[
            pl.BlockSpec((bp, k), lambda j: (0, 0)),
            pl.BlockSpec((k, tn), lambda j: (0, j)),
            pl.BlockSpec((1, tn), lambda j: (0, j)),
        ],
        out_specs=pl.BlockSpec((bp, tn), lambda j: (0, j)),
        out_shape=jax.ShapeDtypeStruct((bp, n), F32),
        compiler_params=pltpu.CompilerParams(
            dimension_semantics=("parallel",),
            vmem_limit_bytes=_vmem_limit_bytes(k, tn, bp)),
    )(xp, theta_masked, bias2)

    return out_p[:b]


# ---------------------------- plain-JAX references ----------------------------

def _reference_train(x, theta, log_sigma2, bias, eps):
    hp = jax.lax.Precision.HIGHEST
    log_alpha = jnp.clip(log_sigma2 - jnp.log(theta * theta),
                         -LOG_ALPHA_CLIP, LOG_ALPHA_CLIP)
    first = K0 * jax.nn.sigmoid(K1 + K2 * log_alpha)
    second = 0.5 * jnp.log(1.0 + jnp.exp(-log_alpha))
    kld = -jnp.sum(first - second - K0) / float(theta.shape[0] * theta.shape[1])
    mu = jnp.dot(x, theta, precision=hp)
    std = jnp.sqrt(jnp.dot(x * x, jnp.exp(log_sigma2), precision=hp) + VAR_EPS)
    return std * eps + mu + bias, kld


def _reference_eval(x, theta, log_sigma2, bias, threshold=THRESHOLD):
    hp = jax.lax.Precision.HIGHEST
    log_alpha = jnp.clip(log_sigma2 - jnp.log(theta * theta),
                         -LOG_ALPHA_CLIP, LOG_ALPHA_CLIP)
    theta_m = jnp.where(log_alpha > threshold, 0.0, theta)
    return jnp.dot(x, theta_m, precision=hp) + bias


# ------------------------------------ main ------------------------------------

if __name__ == "__main__":
    key = jax.random.PRNGKey(0)
    k_theta, k_bias, k_x, k_eps = jax.random.split(key, 4)

    B, IN_SIZE, OUT_SIZE = 2, 512, 512
    stdv = 1.0 / (OUT_SIZE ** 0.5)

    theta = jax.random.uniform(k_theta, (IN_SIZE, OUT_SIZE), F32, -stdv, stdv)
    bias = jax.random.uniform(k_bias, (OUT_SIZE,), F32, -stdv, stdv)
    log_sigma2 = jnp.full((IN_SIZE, OUT_SIZE), -10.0, F32)

    x = jax.random.normal(k_x, (B, IN_SIZE), F32)
    # TODO(synk): torch.randn's implicit global-RNG draw inside forward() is
    # replaced by this explicit, deterministic eps input (an in-kernel
    # pltpu.prng_random_bits draw would also work if stateful RNG is desired).
    eps = jax.random.normal(k_eps, (B, OUT_SIZE), F32)

    train_fn = jax.jit(variational_dropout_train)
    eval_fn = jax.jit(variational_dropout_eval)
    eval_fast_fn = jax.jit(variational_dropout_eval_premasked)

    out, kld = train_fn(x, theta, log_sigma2, bias, eps)
    out_eval = eval_fn(x, theta, log_sigma2, bias)
    theta_masked = precompute_eval_theta(theta, log_sigma2)
    out_eval_fast = eval_fast_fn(x, theta_masked, bias)
    jax.block_until_ready((out, kld, out_eval, out_eval_fast))

    # Light self-check against a plain-JAX reference.
    ref_out, ref_kld = _reference_train(x, theta, log_sigma2, bias, eps)
    ref_eval = _reference_eval(x, theta, log_sigma2, bias)

    assert out.shape == (B, OUT_SIZE) and out.dtype == jnp.float32
    assert out_eval.shape == (B, OUT_SIZE)
    assert out_eval_fast.shape == (B, OUT_SIZE)
    assert kld.shape == ()
    assert bool(jnp.allclose(out, ref_out, rtol=1e-2, atol=1e-2))
    assert bool(jnp.allclose(out_eval, ref_eval, rtol=1e-2, atol=1e-2))
    assert bool(jnp.allclose(out_eval_fast, ref_eval, rtol=1e-2, atol=1e-2))
    assert abs(float(kld) - float(ref_kld)) < 1e-2

    print("KERNEL_OK")
</pallas_src>

<mosaic_0001>
module attributes {stable_mosaic.version = 11 : i64} {
  func.func @_vd_train_kernel(%arg0: i32, %arg1: memref<8x512xf32, #tpu.memory_space<vmem>>, %arg2: memref<512x256xf32, #tpu.memory_space<vmem>>, %arg3: memref<512x256xf32, #tpu.memory_space<vmem>>, %arg4: memref<1x256xf32, #tpu.memory_space<vmem>>, %arg5: memref<8x256xf32, #tpu.memory_space<vmem>>, %arg6: memref<8x256xf32, #tpu.memory_space<vmem>>, %arg7: memref<1x256xf32, #tpu.memory_space<vmem>>) attributes {dimension_semantics = [#tpu.dimension_semantics<parallel>], iteration_bounds = array<i64: 2>, scalar_prefetch = 0 : i64, scratch_operands = 0 : i64, tpu.core_type = #tpu.core_type<tc>, window_params = [{pipeline_mode = #tpu.pipeline_mode<synchronous>, transform_indices = @transform_0, window_bounds = array<i64: 8, 512>}, {transform_indices = @transform_1, window_bounds = array<i64: 512, 256>}, {transform_indices = @transform_2, window_bounds = array<i64: 512, 256>}, {transform_indices = @transform_3, window_bounds = array<i64: 1, 256>}, {transform_indices = @transform_4, window_bounds = array<i64: 8, 256>}, {transform_indices = @transform_5, window_bounds = array<i64: 8, 256>}, {transform_indices = @transform_6, window_bounds = array<i64: 1, 256>}]} {
    %c0 = arith.constant 0 : index
    %c0_0 = arith.constant 0 : index
    %0 = vector.load %arg1[%c0, %c0_0] : memref<8x512xf32, #tpu.memory_space<vmem>>, vector<8x512xf32>
    %c0_1 = arith.constant 0 : index
    %c0_2 = arith.constant 0 : index
    %1 = vector.load %arg2[%c0_1, %c0_2] : memref<512x256xf32, #tpu.memory_space<vmem>>, vector<512x256xf32>
    %c0_3 = arith.constant 0 : index
    %c0_4 = arith.constant 0 : index
    %2 = vector.load %arg3[%c0_3, %c0_4] : memref<512x256xf32, #tpu.memory_space<vmem>>, vector<512x256xf32>
    %3 = math.exp %2 : vector<512x256xf32>
    %cst = arith.constant dense<0.000000e+00> : vector<8x256xf32>
    %4 = tpu.matmul %0, %1, %cst {dimension_numbers = #tpu.dot_dimension_numbers<[1], [0], [0], [1], [0, 0, 1, 1], [], []>} : vector<8x512xf32>, vector<512x256xf32>, vector<8x256xf32> -> vector<8x256xf32>
    %5 = arith.mulf %0, %0 : vector<8x512xf32>
    %cst_5 = arith.constant dense<0.000000e+00> : vector<8x256xf32>
    %6 = tpu.matmul %5, %3, %cst_5 {dimension_numbers = #tpu.dot_dimension_numbers<[1], [0], [0], [1], [0, 0, 1, 1], [], []>} : vector<8x512xf32>, vector<512x256xf32>, vector<8x256xf32> -> vector<8x256xf32>
    %cst_6 = arith.constant 9.99999997E-7 : f32
    %7 = vector.broadcast %cst_6 : f32 to vector<8x256xf32>
    %8 = arith.addf %6, %7 : vector<8x256xf32>
    %9 = math.sqrt %8 : vector<8x256xf32>
    %c0_7 = arith.constant 0 : index
    %c0_8 = arith.constant 0 : index
    %10 = vector.load %arg5[%c0_7, %c0_8] : memref<8x256xf32, #tpu.memory_space<vmem>>, vector<8x256xf32>
    %11 = arith.mulf %9, %10 : vector<8x256xf32>
    %12 = arith.addf %11, %4 : vector<8x256xf32>
    %c0_9 = arith.constant 0 : index
    %c0_10 = arith.constant 0 : index
    %13 = vector.load %arg4[%c0_9, %c0_10] : memref<1x256xf32, #tpu.memory_space<vmem>>, vector<1x256xf32>
    %14 = vector.broadcast %13 : vector<1x256xf32> to vector<8x256xf32>
    %15 = arith.addf %12, %14 : vector<8x256xf32>
    %c0_11 = arith.constant 0 : index
    %c0_12 = arith.constant 0 : index
    %16 = vector.load %arg6[%c0_11, %c0_12] : memref<8x256xf32, #tpu.memory_space<vmem>>, vector<8x256xf32>
    tpu.vector_store %arg6[%c0_11, %c0_12], %15 {strides = array<i32>} : memref<8x256xf32, #tpu.memory_space<vmem>>, vector<8x256xf32>,
    %17 = arith.mulf %1, %1 : vector<512x256xf32>
    %18 = math.log %17 : vector<512x256xf32>
    %19 = arith.subf %2, %18 : vector<512x256xf32>
    %cst_13 = arith.constant -8.000000e+00 : f32
    %cst_14 = arith.constant 8.000000e+00 : f32
    %20 = vector.broadcast %cst_13 : f32 to vector<512x256xf32>
    %21 = arith.maximumf %20, %19 : vector<512x256xf32>
    %22 = vector.broadcast %cst_14 : f32 to vector<512x256xf32>
    %23 = arith.minimumf %22, %21 : vector<512x256xf32>
    %24 = tpu.reciprocal %3 {approx = true} : vector<512x256xf32> -> vector<512x256xf32>
    %25 = arith.mulf %17, %24 : vector<512x256xf32>
    %cst_15 = arith.constant 8.000000e+00 : f32
    %26 = vector.broadcast %cst_15 : f32 to vector<512x256xf32>
    %27 = arith.cmpf ogt, %19, %26 : vector<512x256xf32>
    %cst_16 = arith.constant 3.35462624E-4 : f32
    %28 = vector.broadcast %cst_16 : f32 to vector<512x256xf32>
    %29 = arith.select %27, %28, %25 : vector<512x256xi1>, vector<512x256xf32>
    %cst_17 = arith.constant -8.000000e+00 : f32
    %30 = vector.broadcast %cst_17 : f32 to vector<512x256xf32>
    %31 = arith.cmpf olt, %19, %30 : vector<512x256xf32>
    %cst_18 = arith.constant 2980.95801 : f32
    %32 = vector.broadcast %cst_18 : f32 to vector<512x256xf32>
    %33 = arith.select %31, %32, %29 : vector<512x256xi1>, vector<512x256xf32>
    %cst_19 = arith.constant 1.486950e+00 : f32
    %34 = vector.broadcast %cst_19 : f32 to vector<512x256xf32>
    %35 = arith.mulf %34, %23 : vector<512x256xf32>
    %cst_20 = arith.constant 1.873200e+00 : f32
    %36 = vector.broadcast %cst_20 : f32 to vector<512x256xf32>
    %37 = arith.addf %36, %35 : vector<512x256xf32>
    %cst_21 = arith.constant 0.000000e+00 : f32
    %38 = vector.broadcast %cst_21 : f32 to vector<512x256xf32>
    %39 = arith.subf %38, %37 : vector<512x256xf32>
    %40 = math.exp %39 : vector<512x256xf32>
    %cst_22 = arith.constant 1.000000e+00 : f32
    %41 = vector.broadcast %cst_22 : f32 to vector<512x256xf32>
    %42 = arith.addf %41, %40 : vector<512x256xf32>
    %43 = tpu.reciprocal %42 {approx = true} : vector<512x256xf32> -> vector<512x256xf32>
    %cst_23 = arith.constant 1.000000e+00 : f32
    %44 = vector.broadcast %cst_23 : f32 to vector<512x256xf32>
    %45 = arith.addf %44, %33 : vector<512x256xf32>
    %46 = math.log %45 : vector<512x256xf32>
    %cst_24 = arith.constant 6.357600e-01 : f32
    %47 = vector.broadcast %cst_24 : f32 to vector<512x256xf32>
    %48 = arith.mulf %47, %43 : vector<512x256xf32>
    %cst_25 = arith.constant 5.000000e-01 : f32
    %49 = vector.broadcast %cst_25 : f32 to vector<512x256xf32>
    %50 = arith.mulf %49, %46 : vector<512x256xf32>
    %51 = arith.subf %48, %50 : vector<512x256xf32>
    %cst_26 = arith.constant 6.357600e-01 : f32
    %52 = vector.broadcast %cst_26 : f32 to vector<512x256xf32>
    %53 = arith.subf %51, %52 : vector<512x256xf32>
    %cst_27 = arith.constant dense<0.000000e+00> : vector<256xf32>
    %54 = vector.multi_reduction <add>, %53, %cst_27 [0] : vector<512x256xf32> to vector<256xf32>
    %55 = vector.shape_cast %54 : vector<256xf32> to vector<1x256xf32>
    %c0_28 = arith.constant 0 : index
    %c0_29 = arith.constant 0 : index
    %56 = vector.load %arg7[%c0_28, %c0_29] : memref<1x256xf32, #tpu.memory_space<vmem>>, vector<1x256xf32>
    tpu.vector_store %arg7[%c0_28, %c0_29], %55 {strides = array<i32>} : memref<1x256xf32, #tpu.memory_space<vmem>>, vector<1x256xf32>,
    return
  }
  func.func @transform_0(%arg0: i32) -> (i32, i32) {
    %c0_i32 = arith.constant 0 : i32
    %c0_i32_0 = arith.constant 0 : i32
    %c0_i32_1 = arith.constant 0 : i32
    return %c0_i32, %c0_i32_0 : i32, i32
  }
  func.func @transform_1(%arg0: i32) -> (i32, i32) {
    %c0_i32 = arith.constant 0 : i32
    %c0_i32_0 = arith.constant 0 : i32
    return %c0_i32, %arg0 : i32, i32
  }
  func.func @transform_2(%arg0: i32) -> (i32, i32) {
    %c0_i32 = arith.constant 0 : i32
    %c0_i32_0 = arith.constant 0 : i32
    return %c0_i32, %arg0 : i32, i32
  }
  func.func @transform_3(%arg0: i32) -> (i32, i32) {
    %c0_i32 = arith.constant 0 : i32
    %c0_i32_0 = arith.constant 0 : i32
    return %c0_i32, %arg0 : i32, i32
  }
  func.func @transform_4(%arg0: i32) -> (i32, i32) {
    %c0_i32 = arith.constant 0 : i32
    %c0_i32_0 = arith.constant 0 : i32
    return %c0_i32, %arg0 : i32, i32
  }
  func.func @transform_5(%arg0: i32) -> (i32, i32) {
    %c0_i32 = arith.constant 0 : i32
    %c0_i32_0 = arith.constant 0 : i32
    return %c0_i32, %arg0 : i32, i32
  }
  func.func @transform_6(%arg0: i32) -> (i32, i32) {
    %c0_i32 = arith.constant 0 : i32
    %c0_i32_0 = arith.constant 0 : i32
    return %c0_i32, %arg0 : i32, i32
  }
}

</mosaic_0001>

<llo_original>
// kernel: variational_dropout_train.1
$region0: #{variational_dropout_train.1}
  #allocation0 [shape = 'u32[]', space=smem, size = 0x4, offset = 0x4, fixed_abs, tag = 'smem constant byte address 0x4 - core index']
  #allocation1 [shape = 'u32[72,128]{1,0:T(1,128)}', space=vmem, size = 0x9000, scoped, tag = 'internal scratch']
  %s0 = inlined_call_operand.vmem [shape: f32[8,512], index: 0, kind: input, shape index: {}]
  %s1 = inlined_call_operand.hbm [shape: f32[512,512], index: 1, kind: input, shape index: {}]
  %s2 = inlined_call_operand.hbm [shape: f32[512,512], index: 2, kind: input, shape index: {}]
  %s3 = inlined_call_operand.vmem [shape: f32[1,512], index: 3, kind: input, shape index: {}]
  %s4 = inlined_call_operand.vmem [shape: f32[8,512], index: 4, kind: input, shape index: {}]
  %s5 = inlined_call_operand.vmem [shape: f32[8,512], index: 5, kind: output, shape index: {0}]
  %s6 = inlined_call_operand.vmem [shape: f32[1,512], index: 6, kind: output, shape index: {1}]
  %7 = xla_tuple %s5, %s6
  %s8 = sld [smem:[#allocation0]]
  $region69: #{variational_dropout_train.1} parent=0
    _
  %s10 = ssub.s32 1, %s8
  %s11 = scalar_select 0, %s10, %s8
  $region1: #{variational_dropout_train.1} parent=0
    #allocation2 [shape = 'u8[1048576]{0}', space=vmem, size = 0x100000, scoped, tag = 'input window, operand 1']
    #allocation3 [shape = 's32[2]{0}', space=sflag, size = 0x8, scoped, tag = 'scoped memory for variational_dropout_train.1']
    #allocation4 [shape = 'u8[1048576]{0}', space=vmem, size = 0x100000, scoped, tag = 'input window, operand 2']
    #allocation5 [shape = 's32[2]{0}', space=sflag, size = 0x8, scoped, tag = 'scoped memory for variational_dropout_train.1']
    %12 = vsyncpa [#allocation3], 0
    %s13 = scalar_lea.sflag [#allocation3], 1
    %14 = vsyncpa %s13, 0
    %15 = vsyncpa [#allocation5], 0
    %s16 = scalar_lea.sflag [#allocation5], 1
    %17 = vsyncpa %s16, 0
    loop: start=0, step=1, limit=4
    $region2: #{variational_dropout_train.1} parent=1 // loop_pre_header
      _
    $region3: #{variational_dropout_train.1} parent=1 // loop_header
      %s19 = sphi 0, %s23
      %p20 = scmp.ge.s32.totalorder %s19, 4
      %s27 = sphi 0, %s27
      %s29 = sphi 0, %s27
      %s30 = sphi 0, %s29
      %s44 = sphi 0, %s30
      %s50 = sphi 0, %s52
      %s53 = sphi 0, %s50
      %s54 = sphi 0, %s53
      %s70 = sphi 0, %s54
      %s76 = sphi 0, %s78
      %s79 = sphi 0, %s76
      %s80 = sphi 0, %s79
      %s96 = sphi 0, %s80
      %s102 = sphi 0, %s104
      %s105 = sphi 0, %s102
      %s106 = sphi 0, %s105
      %s122 = sphi 0, %s106
      %s128 = sphi 0, %s130
      %s131 = sphi 0, %s128
      %s132 = sphi 0, %s131
      %s148 = sphi 0, %s132
      %s154 = sphi 0, %s156
      %s157 = sphi 0, %s154
      %s158 = sphi 0, %s157
      %s174 = sphi 0, %s158
      %s180 = sphi 0, %s182
      %s183 = sphi 0, %s180
      %s184 = sphi 0, %s183
      %s200 = sphi 0, %s184
    $region4: #{variational_dropout_train.1} parent=1 // loop_header_branch
      %22 = sbr.rel (%p20) target = $region8
    $region5: #{variational_dropout_train.1} parent=1 // loop_body
      %s24 = ssub.s32 %s19, 1
      %s25 = ssub.s32 %s19, 2
      %s26 = sadd.s32 %s19, 1
      %s28 = sadd.s32 %s27, 1
      %p31 = scmp.eq.s32.totalorder %s19, 1
      %p32 = scmp.ne.s32.totalorder %s27, %s29
      %p33 = scmp.eq.s32.totalorder %s19, 0
      %p34 = por %p32, %p33
      %p35 = scmp.ne.s32.totalorder %s27, %s29
      %p36 = scmp.eq.s32.totalorder %s24, 1
      %p37 = por %p35, %p36
      %p38 = scmp.ne.s32.totalorder %s29, %s30
      %p39 = scmp.eq.s32.totalorder %s24, 0
      %p40 = por %p38, %p39
      %p41 = scmp.ne.s32.totalorder %s29, %s30
      %p42 = scmp.eq.s32.totalorder %s25, 1
      %p43 = por %p41, %p42
      %p45 = scmp.ne.s32.totalorder %s30, %s44
      %p46 = scmp.eq.s32.totalorder %s25, 0
      %p47 = por %p45, %p46
      %s48 = ssub.s32 %s19, %s26
      %p49 = scmp.eq.s32.totalorder %s48, 0
      %s51 = sadd.s32 %s50, 1
      %s52 = scalar_select %p49, %s50, %s51
      %p55 = pneg %p49
      %p56 = scmp.eq.s32.totalorder %s19, 1
      %p57 = por %p55, %p56
      %p58 = scmp.ne.s32.totalorder %s50, %s53
      %p59 = scmp.eq.s32.totalorder %s19, 0
      %p60 = por %p58, %p59
      %p61 = scmp.ne.s32.totalorder %s50, %s53
      %p62 = scmp.eq.s32.totalorder %s24, 1
      %p63 = por %p61, %p62
      %p64 = scmp.ne.s32.totalorder %s53, %s54
      %p65 = scmp.eq.s32.totalorder %s24, 0
      %p66 = por %p64, %p65
      %p67 = scmp.ne.s32.totalorder %s53, %s54
      %p68 = scmp.eq.s32.totalorder %s25, 1
      %p69 = por %p67, %p68
      %p71 = scmp.ne.s32.totalorder %s54, %s70
      %p72 = scmp.eq.s32.totalorder %s25, 0
      %p73 = por %p71, %p72
      %s74 = ssub.s32 %s19, %s26
      %p75 = scmp.eq.s32.totalorder %s74, 0
      %s77 = sadd.s32 %s76, 1
      %s78 = scalar_select %p75, %s76, %s77
      %p81 = pneg %p75
      %p82 = scmp.eq.s32.totalorder %s19, 1
      %p83 = por %p81, %p82
      %p84 = scmp.ne.s32.totalorder %s76, %s79
      %p85 = scmp.eq.s32.totalorder %s19, 0
      %p86 = por %p84, %p85
      %p87 = scmp.ne.s32.totalorder %s76, %s79
      %p88 = scmp.eq.s32.totalorder %s24, 1
      %p89 = por %p87, %p88
      %p90 = scmp.ne.s32.totalorder %s79, %s80
      %p91 = scmp.eq.s32.totalorder %s24, 0
      %p92 = por %p90, %p91
      %p93 = scmp.ne.s32.totalorder %s79, %s80
      %p94 = scmp.eq.s32.totalorder %s25, 1
      %p95 = por %p93, %p94
      %p97 = scmp.ne.s32.totalorder %s80, %s96
      %p98 = scmp.eq.s32.totalorder %s25, 0
      %p99 = por %p97, %p98
      %s100 = ssub.s32 %s19, %s26
      %p101 = scmp.eq.s32.totalorder %s100, 0
      %s103 = sadd.s32 %s102, 1
      %s104 = scalar_select %p101, %s102, %s103
      %p107 = pneg %p101
      %p108 = scmp.eq.s32.totalorder %s19, 1
      %p109 = por %p107, %p108
      %p110 = scmp.ne.s32.totalorder %s102, %s105
      %p111 = scmp.eq.s32.totalorder %s19, 0
      %p112 = por %p110, %p111
      %p113 = scmp.ne.s32.totalorder %s102, %s105
      %p114 = scmp.eq.s32.totalorder %s24, 1
      %p115 = por %p113, %p114
      %p116 = scmp.ne.s32.totalorder %s105, %s106
      %p117 = scmp.eq.s32.totalorder %s24, 0
      %p118 = por %p116, %p117
      %p119 = scmp.ne.s32.totalorder %s105, %s106
      %p120 = scmp.eq.s32.totalorder %s25, 1
      %p121 = por %p119, %p120
      %p123 = scmp.ne.s32.totalorder %s106, %s122
      %p124 = scmp.eq.s32.totalorder %s25, 0
      %p125 = por %p123, %p124
      %s126 = ssub.s32 %s19, %s26
      %p127 = scmp.eq.s32.totalorder %s126, 0
      %s129 = sadd.s32 %s128, 1
      %s130 = scalar_select %p127, %s128, %s129
      %p133 = pneg %p127
      %p134 = scmp.eq.s32.totalorder %s19, 1
      %p135 = por %p133, %p134
      %p136 = scmp.ne.s32.totalorder %s128, %s131
      %p137 = scmp.eq.s32.totalorder %s19, 0
      %p138 = por %p136, %p137
      %p139 = scmp.ne.s32.totalorder %s128, %s131
      %p140 = scmp.eq.s32.totalorder %s24, 1
      %p141 = por %p139, %p140
      %p142 = scmp.ne.s32.totalorder %s131, %s132
      %p143 = scmp.eq.s32.totalorder %s24, 0
      %p144 = por %p142, %p143
      %p145 = scmp.ne.s32.totalorder %s131, %s132
      %p146 = scmp.eq.s32.totalorder %s25, 1
      %p147 = por %p145, %p146
      %p149 = scmp.ne.s32.totalorder %s132, %s148
      %p150 = scmp.eq.s32.totalorder %s25, 0
      %p151 = por %p149, %p150
      %s152 = ssub.s32 %s19, %s26
      %p153 = scmp.eq.s32.totalorder %s152, 0
      %s155 = sadd.s32 %s154, 1
      %s156 = scalar_select %p153, %s154, %s155
      %p159 = pneg %p153
      %p160 = scmp.eq.s32.totalorder %s19, 1
      %p161 = por %p159, %p160
      %p162 = scmp.ne.s32.totalorder %s154, %s157
      %p163 = scmp.eq.s32.totalorder %s19, 0
      %p164 = por %p162, %p163
      %p165 = scmp.ne.s32.totalorder %s154, %s157
      %p166 = scmp.eq.s32.totalorder %s24, 1
      %p167 = por %p165, %p166
      %p168 = scmp.ne.s32.totalorder %s157, %s158
      %p169 = scmp.eq.s32.totalorder %s24, 0
      %p170 = por %p168, %p169
      %p171 = scmp.ne.s32.totalorder %s157, %s158
      %p172 = scmp.eq.s32.totalorder %s25, 1
      %p173 = por %p171, %p172
      %p175 = scmp.ne.s32.totalorder %s158, %s174
      %p176 = scmp.eq.s32.totalorder %s25, 0
      %p177 = por %p175, %p176
      %s178 = ssub.s32 %s19, %s26
      %p179 = scmp.eq.s32.totalorder %s178, 0
      %s181 = sadd.s32 %s180, 1
      %s182 = scalar_select %p179, %s180, %s181
      %p185 = pneg %p179
      %p186 = scmp.eq.s32.totalorder %s19, 1
      %p187 = por %p185, %p186
      %p188 = scmp.ne.s32.totalorder %s180, %s183
      %p189 = scmp.eq.s32.totalorder %s19, 0
      %p190 = por %p188, %p189
      %p191 = scmp.ne.s32.totalorder %s180, %s183
      %p192 = scmp.eq.s32.totalorder %s24, 1
      %p193 = por %p191, %p192
      %p194 = scmp.ne.s32.totalorder %s183, %s184
      %p195 = scmp.eq.s32.totalorder %s24, 0
      %p196 = por %p194, %p195
      %p197 = scmp.ne.s32.totalorder %s183, %s184
      %p198 = scmp.eq.s32.totalorder %s25, 1
      %p199 = por %p197, %p198
      %p201 = scmp.ne.s32.totalorder %s184, %s200
      %p202 = scmp.eq.s32.totalorder %s25, 0
      %p203 = por %p201, %p202
      %p204 = scmp.le.s32.totalorder 1, %s19
      %p205 = scmp.lt.s32.totalorder %s19, 3
      %p206 = pnand %p204, %p205
      %p207 = pneg %p206
      // Predicated region
      $region9: #{variational_dropout_train.1} parent=5 // pred_check
        _
      $region10: #{variational_dropout_train.1} parent=5 // pred_check_branch
        %209 = sbr.rel (%p206) target = $region12
      $region11: #{variational_dropout_train.1} parent=5 // pred_region
        %s210 = ssub.s32 %s19, 1
        // Predicated region
        $region13: #{variational_dropout_train.1} parent=11 // pred_check
          %p211 = pneg %p40
        $region14: #{variational_dropout_train.1} parent=11 // pred_check_branch
          %213 = sbr.rel (%p211) target = $region16
        $region15: #{variational_dropout_train.1} parent=11 // pred_region
          _
        $region16: #{variational_dropout_train.1} parent=11 // pred_fallthru
          _
      $region12: #{variational_dropout_train.1} parent=5 // pred_fallthru
        _
      %p214 = scmp.lt.s32.totalorder %s19, 2
      // Predicated region
      $region17: #{variational_dropout_train.1} parent=5 // pred_check
        %p215 = pneg %p214
      $region18: #{variational_dropout_train.1} parent=5 // pred_check_branch
        %217 = sbr.rel (%p215) target = $region20
      $region19: #{variational_dropout_train.1} parent=5 // pred_region
        // Predicated region
        $region21: #{variational_dropout_train.1} parent=19 // pred_check
          %p218 = pneg %p60
        $region22: #{variational_dropout_train.1} parent=19 // pred_check_branch
          %220 = sbr.rel (%p218) target = $region24
        $region23: #{variational_dropout_train.1} parent=19 // pred_region
          %s221 = sand.u32 %s50, 1
          %s222 = scalar_lea.sflag [#allocation3], %s221
          %s223 = sand.u32 %s50, 1
          %s224 = smul.addr %s223, 1024
          %s225 = scalar_lea.vmem [#allocation2], %s224
          %s226 = smul.u32 2, %s19
          %228 = vsyncadd %s222, 0
          %s229 = smul.addr %s226, 8
          %s230 = scalar_lea.hbm %s1, %s229
          %s231 = sshll.u32 %s230, 4
          %s232 = int_to_ptr.hbm [resolvable:$true] %s231
          %s233 = sshll.u32 %s225, 4
          %s234 = int_to_ptr.vmem [resolvable:$true] %s233
          %239 = dma.hbm_to_vmem [thread:$0]  %s232, 16384, %s234, %s222, 512, 256, 16
        $region24: #{variational_dropout_train.1} parent=19 // pred_fallthru
          _
        // Predicated region
        $region25: #{variational_dropout_train.1} parent=19 // pred_check
          %p240 = pneg %p86
        $region26: #{variational_dropout_train.1} parent=19 // pred_check_branch
          %242 = sbr.rel (%p240) target = $region28
        $region27: #{variational_dropout_train.1} parent=19 // pred_region
          %s243 = sand.u32 %s76, 1
          %s244 = scalar_lea.sflag [#allocation5], %s243
          %s245 = sand.u32 %s76, 1
          %s246 = smul.addr %s245, 1024
          %s247 = scalar_lea.vmem [#allocation4], %s246
          %s248 = smul.u32 2, %s19
          %250 = vsyncadd %s244, 0
          %s251 = smul.addr %s248, 8
          %s252 = scalar_lea.hbm %s2, %s251
          %s253 = sshll.u32 %s252, 4
          %s254 = int_to_ptr.hbm [resolvable:$true] %s253
          %s255 = sshll.u32 %s247, 4
          %s256 = int_to_ptr.vmem [resolvable:$true] %s255
          %261 = dma.hbm_to_vmem [thread:$0]  %s254, 16384, %s256, %s244, 512, 256, 16
        $region28: #{variational_dropout_train.1} parent=19 // pred_fallthru
          _
        // Predicated region
        $region29: #{variational_dropout_train.1} parent=19 // pred_check
          %p262 = pneg %p112
        $region30: #{variational_dropout_train.1} parent=19 // pred_check_branch
          %264 = sbr.rel (%p262) target = $region32
        $region31: #{variational_dropout_train.1} parent=19 // pred_region
          %s265 = smul.u32 2, %s19
          %p266 = scmp.lt.s32.totalorder %s265, 3
          %s267 = scalar_select %p266, %s265, 3
          %s268 = scalar_lea.vmem %s3, %s267
          %s269 = smul.u32 2, %s19
        $region32: #{variational_dropout_train.1} parent=19 // pred_fallthru
          _
        // Predicated region
        $region33: #{variational_dropout_train.1} parent=19 // pred_check
          %p270 = pneg %p138
        $region34: #{variational_dropout_train.1} parent=19 // pred_check_branch
          %272 = sbr.rel (%p270) target = $region36
        $region35: #{variational_dropout_train.1} parent=19 // pred_region
          %s273 = smul.u32 2, %s19
          %p274 = scmp.lt.s32.totalorder %s273, 3
          %s275 = scalar_select %p274, %s273, 3
          %s276 = smul.addr %s275, 8
          %s277 = scalar_lea.vmem %s4, %s276
          %s278 = smul.u32 2, %s19
        $region36: #{variational_dropout_train.1} parent=19 // pred_fallthru
          _
      $region20: #{variational_dropout_train.1} parent=5 // pred_fallthru
        _
      %p279 = scmp.le.s32.totalorder 1, %s19
      %p280 = scmp.lt.s32.totalorder %s19, 3
      %p281 = pnand %p279, %p280
      %p282 = pneg %p281
      // Predicated region
      $region37: #{variational_dropout_train.1} parent=5 // pred_check
        _
      $region38: #{variational_dropout_train.1} parent=5 // pred_check_branch
        %284 = sbr.rel (%p281) target = $region40
      $region39: #{variational_dropout_train.1} parent=5 // pred_region
        %s285 = ssub.s32 %s19, 1
        %s286 = sand.u32 %s53, 1
        %s287 = scalar_lea.sflag [#allocation3], %s286
        %s288 = sand.u32 %s53, 1
        %s289 = smul.addr %s288, 1024
        %s290 = scalar_lea.vmem [#allocation2], %s289
        // Predicated region
        $region41: #{variational_dropout_train.1} parent=39 // pred_check
          %p291 = pneg %p66
        $region42: #{variational_dropout_train.1} parent=39 // pred_check_branch
          %293 = sbr.rel (%p291) target = $region44
        $region43: #{variational_dropout_train.1} parent=39 // pred_region
          %295 = dma.done %s287, 16384
        $region44: #{variational_dropout_train.1} parent=39 // pred_fallthru
          _
        %s296 = sand.u32 %s79, 1
        %s297 = scalar_lea.sflag [#allocation5], %s296
        %s298 = sand.u32 %s79, 1
        %s299 = smul.addr %s298, 1024
        %s300 = scalar_lea.vmem [#allocation4], %s299
        // Predicated region
        $region45: #{variational_dropout_train.1} parent=39 // pred_check
          %p301 = pneg %p92
        $region46: #{variational_dropout_train.1} parent=39 // pred_check_branch
          %303 = sbr.rel (%p301) target = $region48
        $region47: #{variational_dropout_train.1} parent=39 // pred_region
          %305 = dma.done %s297, 16384
        $region48: #{variational_dropout_train.1} parent=39 // pred_fallthru
          _
        %p306 = pneg %p40
        %p307 = pneg %p37
        %s308 = sand.u32 %s53, 1
        %s309 = scalar_lea.sflag [#allocation3], %s308
        %s310 = sand.u32 %s53, 1
        %s311 = smul.addr %s310, 1024
        %s312 = scalar_lea.vmem [#allocation2], %s311
        %p313 = pneg %p66
        %p314 = pneg %p63
        %s315 = sand.u32 %s79, 1
        %s316 = scalar_lea.sflag [#allocation5], %s315
        %s317 = sand.u32 %s79, 1
        %s318 = smul.addr %s317, 1024
        %s319 = scalar_lea.vmem [#allocation4], %s318
        %p320 = pneg %p92
        %p321 = pneg %p89
        %s322 = smul.u32 2, %s24
        %p323 = scmp.lt.s32.totalorder %s322, 3
        %s324 = scalar_select %p323, %s322, 3
        %s325 = scalar_lea.vmem %s3, %s324
        %p326 = pneg %p118
        %p327 = pneg %p115
        %s328 = smul.u32 2, %s24
        %p329 = scmp.lt.s32.totalorder %s328, 3
        %s330 = scalar_select %p329, %s328, 3
        %s331 = smul.addr %s330, 8
        %s332 = scalar_lea.vmem %s4, %s331
        %p333 = pneg %p144
        %p334 = pneg %p141
        %p335 = pneg %p170
        %p336 = pneg %p167
        %s337 = smul.u32 2, %s24
        %p338 = scmp.lt.s32.totalorder %s337, 3
        %s339 = scalar_select %p338, %s337, 3
        %s340 = smul.addr %s339, 8
        %s341 = scalar_lea.vmem %s5, %s340
        %p342 = pneg %p196
        %p343 = pneg %p193
        %s344 = smul.u32 2, %s24
        %p345 = scmp.lt.s32.totalorder %s344, 3
        %s346 = scalar_select %p345, %s344, 3
        %s347 = scalar_lea.vmem %s6, %s346
        %s348 = smul.u32 2, %s24
        %s349 = smul.u32 2, %s24
        %s350 = smul.u32 2, %s24
        %p351 = scmp.lt.s32.totalorder %s350, 3
        %s352 = scalar_select %p351, %s350, 3
        %s353 = scalar_lea.vmem %s3, %s352
        %s354 = smul.u32 2, %s24
        %s355 = smul.u32 2, %s24
        %p356 = scmp.lt.s32.totalorder %s355, 3
        %s357 = scalar_select %p356, %s355, 3
        %s358 = smul.addr %s357, 8
        %s359 = scalar_lea.vmem %s4, %s358
        %s360 = smul.u32 2, %s24
        %s361 = smul.u32 2, %s24
        %p362 = scmp.lt.s32.totalorder %s361, 3
        %s363 = scalar_select %p362, %s361, 3
        %s364 = smul.addr %s363, 8
        %s365 = scalar_lea.vmem %s5, %s364
        %s366 = smul.u32 2, %s24
        %s367 = smul.u32 2, %s24
        %p368 = scmp.lt.s32.totalorder %s367, 3
        %s369 = scalar_select %p368, %s367, 3
        %s370 = scalar_lea.vmem %s6, %s369
        %s371 = smul.u32 2, %s24
        %v372 = vld [vmem:[%s0] sm:$0xff]
        %v373 = vld [vmem:[%s0 + $0x8] sm:$0xff]
        %v374 = vld [vmem:[%s0 + $0x10] sm:$0xff]
        %v375 = vld [vmem:[%s0 + $0x18] sm:$0xff]
        %v376 = vld [vmem:[%s290] sm:$0xff]
        %v377 = vld [vmem:[%s290 + $0x8] sm:$0xff]
        %v378 = vld [vmem:[%s290 + $0x10] sm:$0xff]
        %v379 = vld [vmem:[%s290 + $0x18] sm:$0xff]
        %v380 = vld [vmem:[%s290 + $0x20] sm:$0xff]
        %v381 = vld [vmem:[%s290 + $0x28] sm:$0xff]
        %v382 = vld [vmem:[%s290 + $0x30] sm:$0xff]
        %v383 = vld [vmem:[%s290 + $0x38] sm:$0xff]
        %v384 = vld [vmem:[%s290 + $0x40] sm:$0xff]
        %v385 = vld [vmem:[%s290 + $0x48] sm:$0xff]
        %v386 = vld [vmem:[%s290 + $0x50] sm:$0xff]
        %v387 = vld [vmem:[%s290 + $0x58] sm:$0xff]
        %v388 = vld [vmem:[%s290 + $0x60] sm:$0xff]
        %v389 = vld [vmem:[%s290 + $0x68] sm:$0xff]
        %v390 = vld [vmem:[%s290 + $0x70] sm:$0xff]
        %v391 = vld [vmem:[%s290 + $0x78] sm:$0xff]
        %v392 = vld [vmem:[%s290 + $0x80] sm:$0xff]
        %v393 = vld [vmem:[%s290 + $0x88] sm:$0xff]
        %v394 = vld [vmem:[%s290 + $0x90] sm:$0xff]
        %v395 = vld [vmem:[%s290 + $0x98] sm:$0xff]
        %v396 = vld [vmem:[%s290 + $0xa0] sm:$0xff]
        %v397 = vld [vmem:[%s290 + $0xa8] sm:$0xff]
        %v398 = vld [vmem:[%s290 + $0xb0] sm:$0xff]
        %v399 = vld [vmem:[%s290 + $0xb8] sm:$0xff]
        %v400 = vld [vmem:[%s290 + $0xc0] sm:$0xff]
        %v401 = vld [vmem:[%s290 + $0xc8] sm:$0xff]
        %v402 = vld [vmem:[%s290 + $0xd0] sm:$0xff]
        %v403 = vld [vmem:[%s290 + $0xd8] sm:$0xff]
        %v404 = vld [vmem:[%s290 + $0xe0] sm:$0xff]
        %v405 = vld [vmem:[%s290 + $0xe8] sm:$0xff]
        %v406 = vld [vmem:[%s290 + $0xf0] sm:$0xff]
        %v407 = vld [vmem:[%s290 + $0xf8] sm:$0xff]
        %v408 = vld [vmem:[%s290 + $0x100] sm:$0xff]
        %v409 = vld [vmem:[%s290 + $0x108] sm:$0xff]
        %v410 = vld [vmem:[%s290 + $0x110] sm:$0xff]
        %v411 = vld [vmem:[%s290 + $0x118] sm:$0xff]
        %v412 = vld [vmem:[%s290 + $0x120] sm:$0xff]
        %v413 = vld [vmem:[%s290 + $0x128] sm:$0xff]
        %v414 = vld [vmem:[%s290 + $0x130] sm:$0xff]
        %v415 = vld [vmem:[%s290 + $0x138] sm:$0xff]
        %v416 = vld [vmem:[%s290 + $0x140] sm:$0xff]
        %v417 = vld [vmem:[%s290 + $0x148] sm:$0xff]
        %v418 = vld [vmem:[%s290 + $0x150] sm:$0xff]
        %v419 = vld [vmem:[%s290 + $0x158] sm:$0xff]
        %v420 = vld [vmem:[%s290 + $0x160] sm:$0xff]
        %v421 = vld [vmem:[%s290 + $0x168] sm:$0xff]
        %v422 = vld [vmem:[%s290 + $0x170] sm:$0xff]
        %v423 = vld [vmem:[%s290 + $0x178] sm:$0xff]
        %v424 = vld [vmem:[%s290 + $0x180] sm:$0xff]
        %v425 = vld [vmem:[%s290 + $0x188] sm:$0xff]
        %v426 = vld [vmem:[%s290 + $0x190] sm:$0xff]
        %v427 = vld [vmem:[%s290 + $0x198] sm:$0xff]
        %v428 = vld [vmem:[%s290 + $0x1a0] sm:$0xff]
        %v429 = vld [vmem:[%s290 + $0x1a8] sm:$0xff]
        %v430 = vld [vmem:[%s290 + $0x1b0] sm:$0xff]
        %v431 = vld [vmem:[%s290 + $0x1b8] sm:$0xff]
        %v432 = vld [vmem:[%s290 + $0x1c0] sm:$0xff]
        %v433 = vld [vmem:[%s290 + $0x1c8] sm:$0xff]
        %v434 = vld [vmem:[%s290 + $0x1d0] sm:$0xff]
        %v435 = vld [vmem:[%s290 + $0x1d8] sm:$0xff]
        %v436 = vld [vmem:[%s290 + $0x1e0] sm:$0xff]
        %v437 = vld [vmem:[%s290 + $0x1e8] sm:$0xff]
        %v438 = vld [vmem:[%s290 + $0x1f0] sm:$0xff]
        %v439 = vld [vmem:[%s290 + $0x1f8] sm:$0xff]
        %v440 = vld [vmem:[%s290 + $0x200] sm:$0xff]
        %v441 = vld [vmem:[%s290 + $0x208] sm:$0xff]
        %v442 = vld [vmem:[%s290 + $0x210] sm:$0xff]
        %v443 = vld [vmem:[%s290 + $0x218] sm:$0xff]
        %v444 = vld [vmem:[%s290 + $0x220] sm:$0xff]
        %v445 = vld [vmem:[%s290 + $0x228] sm:$0xff]
        %v446 = vld [vmem:[%s290 + $0x230] sm:$0xff]
        %v447 = vld [vmem:[%s290 + $0x238] sm:$0xff]
        %v448 = vld [vmem:[%s290 + $0x240] sm:$0xff]
        %v449 = vld [vmem:[%s290 + $0x248] sm:$0xff]
        %v450 = vld [vmem:[%s290 + $0x250] sm:$0xff]
        %v451 = vld [vmem:[%s290 + $0x258] sm:$0xff]
        %v452 = vld [vmem:[%s290 + $0x260] sm:$0xff]
        %v453 = vld [vmem:[%s290 + $0x268] sm:$0xff]
        %v454 = vld [vmem:[%s290 + $0x270] sm:$0xff]
        %v455 = vld [vmem:[%s290 + $0x278] sm:$0xff]
        %v456 = vld [vmem:[%s290 + $0x280] sm:$0xff]
        %v457 = vld [vmem:[%s290 + $0x288] sm:$0xff]
        %v458 = vld [vmem:[%s290 + $0x290] sm:$0xff]
        %v459 = vld [vmem:[%s290 + $0x298] sm:$0xff]
        %v460 = vld [vmem:[%s290 + $0x2a0] sm:$0xff]
        %v461 = vld [vmem:[%s290 + $0x2a8] sm:$0xff]
        %v462 = vld [vmem:[%s290 + $0x2b0] sm:$0xff]
        %v463 = vld [vmem:[%s290 + $0x2b8] sm:$0xff]
        %v464 = vld [vmem:[%s290 + $0x2c0] sm:$0xff]
        %v465 = vld [vmem:[%s290 + $0x2c8] sm:$0xff]
        %v466 = vld [vmem:[%s290 + $0x2d0] sm:$0xff]
        %v467 = vld [vmem:[%s290 + $0x2d8] sm:$0xff]
        %v468 = vld [vmem:[%s290 + $0x2e0] sm:$0xff]
        %v469 = vld [vmem:[%s290 + $0x2e8] sm:$0xff]
        %v470 = vld [vmem:[%s290 + $0x2f0] sm:$0xff]
        %v471 = vld [vmem:[%s290 + $0x2f8] sm:$0xff]
        %v472 = vld [vmem:[%s290 + $0x300] sm:$0xff]
        %v473 = vld [vmem:[%s290 + $0x308] sm:$0xff]
        %v474 = vld [vmem:[%s290 + $0x310] sm:$0xff]
        %v475 = vld [vmem:[%s290 + $0x318] sm:$0xff]
        %v476 = vld [vmem:[%s290 + $0x320] sm:$0xff]
        %v477 = vld [vmem:[%s290 + $0x328] sm:$0xff]
        %v478 = vld [vmem:[%s290 + $0x330] sm:$0xff]
        %v479 = vld [vmem:[%s290 + $0x338] sm:$0xff]
        %v480 = vld [vmem:[%s290 + $0x340] sm:$0xff]
        %v481 = vld [vmem:[%s290 + $0x348] sm:$0xff]
        %v482 = vld [vmem:[%s290 + $0x350] sm:$0xff]
        %v483 = vld [vmem:[%s290 + $0x358] sm:$0xff]
        %v484 = vld [vmem:[%s290 + $0x360] sm:$0xff]
        %v485 = vld [vmem:[%s290 + $0x368] sm:$0xff]
        %v486 = vld [vmem:[%s290 + $0x370] sm:$0xff]
        %v487 = vld [vmem:[%s290 + $0x378] sm:$0xff]
        %v488 = vld [vmem:[%s290 + $0x380] sm:$0xff]
        %v489 = vld [vmem:[%s290 + $0x388] sm:$0xff]
        %v490 = vld [vmem:[%s290 + $0x390] sm:$0xff]
        %v491 = vld [vmem:[%s290 + $0x398] sm:$0xff]
        %v492 = vld [vmem:[%s290 + $0x3a0] sm:$0xff]
        %v493 = vld [vmem:[%s290 + $0x3a8] sm:$0xff]
        %v494 = vld [vmem:[%s290 + $0x3b0] sm:$0xff]
        %v495 = vld [vmem:[%s290 + $0x3b8] sm:$0xff]
        %v496 = vld [vmem:[%s290 + $0x3c0] sm:$0xff]
        %v497 = vld [vmem:[%s290 + $0x3c8] sm:$0xff]
        %v498 = vld [vmem:[%s290 + $0x3d0] sm:$0xff]
        %v499 = vld [vmem:[%s290 + $0x3d8] sm:$0xff]
        %v500 = vld [vmem:[%s290 + $0x3e0] sm:$0xff]
        %v501 = vld [vmem:[%s290 + $0x3e8] sm:$0xff]
        %v502 = vld [vmem:[%s290 + $0x3f0] sm:$0xff]
        %v503 = vld [vmem:[%s290 + $0x3f8] sm:$0xff]
        %v504 = vld [vmem:[%s300] sm:$0xff]
        %v505 = vld [vmem:[%s300 + $0x8] sm:$0xff]
        %v506 = vld [vmem:[%s300 + $0x10] sm:$0xff]
        %v507 = vld [vmem:[%s300 + $0x18] sm:$0xff]
        %v508 = vld [vmem:[%s300 + $0x20] sm:$0xff]
        %v509 = vld [vmem:[%s300 + $0x28] sm:$0xff]
        %v510 = vld [vmem:[%s300 + $0x30] sm:$0xff]
        %v511 = vld [vmem:[%s300 + $0x38] sm:$0xff]
        %v512 = vld [vmem:[%s300 + $0x40] sm:$0xff]
        %v513 = vld [vmem:[%s300 + $0x48] sm:$0xff]
        %v514 = vld [vmem:[%s300 + $0x50] sm:$0xff]
        %v515 = vld [vmem:[%s300 + $0x58] sm:$0xff]
        %v516 = vld [vmem:[%s300 + $0x60] sm:$0xff]
        %v517 = vld [vmem:[%s300 + $0x68] sm:$0xff]
        %v518 = vld [vmem:[%s300 + $0x70] sm:$0xff]
        %v519 = vld [vmem:[%s300 + $0x78] sm:$0xff]
        %v520 = vld [vmem:[%s300 + $0x80] sm:$0xff]
        %v521 = vld [vmem:[%s300 + $0x88] sm:$0xff]
        %v522 = vld [vmem:[%s300 + $0x90] sm:$0xff]
        %v523 = vld [vmem:[%s300 + $0x98] sm:$0xff]
        %v524 = vld [vmem:[%s300 + $0xa0] sm:$0xff]
        %v525 = vld [vmem:[%s300 + $0xa8] sm:$0xff]
        %v526 = vld [vmem:[%s300 + $0xb0] sm:$0xff]
        %v527 = vld [vmem:[%s300 + $0xb8] sm:$0xff]
        %v528 = vld [vmem:[%s300 + $0xc0] sm:$0xff]
        %v529 = vld [vmem:[%s300 + $0xc8] sm:$0xff]
        %v530 = vld [vmem:[%s300 + $0xd0] sm:$0xff]
        %v531 = vld [vmem:[%s300 + $0xd8] sm:$0xff]
        %v532 = vld [vmem:[%s300 + $0xe0] sm:$0xff]
        %v533 = vld [vmem:[%s300 + $0xe8] sm:$0xff]
        %v534 = vld [vmem:[%s300 + $0xf0] sm:$0xff]
        %v535 = vld [vmem:[%s300 + $0xf8] sm:$0xff]
        %v536 = vld [vmem:[%s300 + $0x100] sm:$0xff]
        %v537 = vld [vmem:[%s300 + $0x108] sm:$0xff]
        %v538 = vld [vmem:[%s300 + $0x110] sm:$0xff]
        %v539 = vld [vmem:[%s300 + $0x118] sm:$0xff]
        %v540 = vld [vmem:[%s300 + $0x120] sm:$0xff]
        %v541 = vld [vmem:[%s300 + $0x128] sm:$0xff]
        %v542 = vld [vmem:[%s300 + $0x130] sm:$0xff]
        %v543 = vld [vmem:[%s300 + $0x138] sm:$0xff]
        %v544 = vld [vmem:[%s300 + $0x140] sm:$0xff]
        %v545 = vld [vmem:[%s300 + $0x148] sm:$0xff]
        %v546 = vld [vmem:[%s300 + $0x150] sm:$0xff]
        %v547 = vld [vmem:[%s300 + $0x158] sm:$0xff]
        %v548 = vld [vmem:[%s300 + $0x160] sm:$0xff]
        %v549 = vld [vmem:[%s300 + $0x168] sm:$0xff]
        %v550 = vld [vmem:[%s300 + $0x170] sm:$0xff]
        %v551 = vld [vmem:[%s300 + $0x178] sm:$0xff]
        %v552 = vld [vmem:[%s300 + $0x180] sm:$0xff]
        %v553 = vld [vmem:[%s300 + $0x188] sm:$0xff]
        %v554 = vld [vmem:[%s300 + $0x190] sm:$0xff]
        %v555 = vld [vmem:[%s300 + $0x198] sm:$0xff]
        %v556 = vld [vmem:[%s300 + $0x1a0] sm:$0xff]
        %v557 = vld [vmem:[%s300 + $0x1a8] sm:$0xff]
        %v558 = vld [vmem:[%s300 + $0x1b0] sm:$0xff]
        %v559 = vld [vmem:[%s300 + $0x1b8] sm:$0xff]
        %v560 = vld [vmem:[%s300 + $0x1c0] sm:$0xff]
        %v561 = vld [vmem:[%s300 + $0x1c8] sm:$0xff]
        %v562 = vld [vmem:[%s300 + $0x1d0] sm:$0xff]
        %v563 = vld [vmem:[%s300 + $0x1d8] sm:$0xff]
        %v564 = vld [vmem:[%s300 + $0x1e0] sm:$0xff]
        %v565 = vld [vmem:[%s300 + $0x1e8] sm:$0xff]
        %v566 = vld [vmem:[%s300 + $0x1f0] sm:$0xff]
        %v567 = vld [vmem:[%s300 + $0x1f8] sm:$0xff]
        %v568 = vld [vmem:[%s300 + $0x200] sm:$0xff]
        %v569 = vld [vmem:[%s300 + $0x208] sm:$0xff]
        %v570 = vld [vmem:[%s300 + $0x210] sm:$0xff]
        %v571 = vld [vmem:[%s300 + $0x218] sm:$0xff]
        %v572 = vld [vmem:[%s300 + $0x220] sm:$0xff]
        %v573 = vld [vmem:[%s300 + $0x228] sm:$0xff]
        %v574 = vld [vmem:[%s300 + $0x230] sm:$0xff]
        %v575 = vld [vmem:[%s300 + $0x238] sm:$0xff]
        %v576 = vld [vmem:[%s300 + $0x240] sm:$0xff]
        %v577 = vld [vmem:[%s300 + $0x248] sm:$0xff]
        %v578 = vld [vmem:[%s300 + $0x250] sm:$0xff]
        %v579 = vld [vmem:[%s300 + $0x258] sm:$0xff]
        %v580 = vld [vmem:[%s300 + $0x260] sm:$0xff]
        %v581 = vld [vmem:[%s300 + $0x268] sm:$0xff]
        %v582 = vld [vmem:[%s300 + $0x270] sm:$0xff]
        %v583 = vld [vmem:[%s300 + $0x278] sm:$0xff]
        %v584 = vld [vmem:[%s300 + $0x280] sm:$0xff]
        %v585 = vld [vmem:[%s300 + $0x288] sm:$0xff]
        %v586 = vld [vmem:[%s300 + $0x290] sm:$0xff]
        %v587 = vld [vmem:[%s300 + $0x298] sm:$0xff]
        %v588 = vld [vmem:[%s300 + $0x2a0] sm:$0xff]
        %v589 = vld [vmem:[%s300 + $0x2a8] sm:$0xff]
        %v590 = vld [vmem:[%s300 + $0x2b0] sm:$0xff]
        %v591 = vld [vmem:[%s300 + $0x2b8] sm:$0xff]
        %v592 = vld [vmem:[%s300 + $0x2c0] sm:$0xff]
        %v593 = vld [vmem:[%s300 + $0x2c8] sm:$0xff]
        %v594 = vld [vmem:[%s300 + $0x2d0] sm:$0xff]
        %v595 = vld [vmem:[%s300 + $0x2d8] sm:$0xff]
        %v596 = vld [vmem:[%s300 + $0x2e0] sm:$0xff]
        %v597 = vld [vmem:[%s300 + $0x2e8] sm:$0xff]
        %v598 = vld [vmem:[%s300 + $0x2f0] sm:$0xff]
        %v599 = vld [vmem:[%s300 + $0x2f8] sm:$0xff]
        %v600 = vld [vmem:[%s300 + $0x300] sm:$0xff]
        %v601 = vld [vmem:[%s300 + $0x308] sm:$0xff]
        %v602 = vld [vmem:[%s300 + $0x310] sm:$0xff]
        %v603 = vld [vmem:[%s300 + $0x318] sm:$0xff]
        %v604 = vld [vmem:[%s300 + $0x320] sm:$0xff]
        %v605 = vld [vmem:[%s300 + $0x328] sm:$0xff]
        %v606 = vld [vmem:[%s300 + $0x330] sm:$0xff]
        %v607 = vld [vmem:[%s300 + $0x338] sm:$0xff]
        %v608 = vld [vmem:[%s300 + $0x340] sm:$0xff]
        %v609 = vld [vmem:[%s300 + $0x348] sm:$0xff]
        %v610 = vld [vmem:[%s300 + $0x350] sm:$0xff]
        %v611 = vld [vmem:[%s300 + $0x358] sm:$0xff]
        %v612 = vld [vmem:[%s300 + $0x360] sm:$0xff]
        %v613 = vld [vmem:[%s300 + $0x368] sm:$0xff]
        %v614 = vld [vmem:[%s300 + $0x370] sm:$0xff]
        %v615 = vld [vmem:[%s300 + $0x378] sm:$0xff]
        %v616 = vld [vmem:[%s300 + $0x380] sm:$0xff]
        %v617 = vld [vmem:[%s300 + $0x388] sm:$0xff]
        %v618 = vld [vmem:[%s300 + $0x390] sm:$0xff]
        %v619 = vld [vmem:[%s300 + $0x398] sm:$0xff]
        %v620 = vld [vmem:[%s300 + $0x3a0] sm:$0xff]
        %v621 = vld [vmem:[%s300 + $0x3a8] sm:$0xff]
        %v622 = vld [vmem:[%s300 + $0x3b0] sm:$0xff]
        %v623 = vld [vmem:[%s300 + $0x3b8] sm:$0xff]
        %v624 = vld [vmem:[%s300 + $0x3c0] sm:$0xff]
        %v625 = vld [vmem:[%s300 + $0x3c8] sm:$0xff]
        %v626 = vld [vmem:[%s300 + $0x3d0] sm:$0xff]
        %v627 = vld [vmem:[%s300 + $0x3d8] sm:$0xff]
        %v628 = vld [vmem:[%s300 + $0x3e0] sm:$0xff]
        %v629 = vld [vmem:[%s300 + $0x3e8] sm:$0xff]
        %v630 = vld [vmem:[%s300 + $0x3f0] sm:$0xff]
        %v631 = vld [vmem:[%s300 + $0x3f8] sm:$0xff]
        %v632 = vmul.f32 %v504, 1.442695
        %v633 = vpow.pop %v632
        %v634 = vmul.f32 %v505, 1.442695
        %v635 = vpow.pop %v634
        %v636 = vmul.f32 %v506, 1.442695
        %v637 = vpow.pop %v636
        %v638 = vmul.f32 %v507, 1.442695
        %v639 = vpow.pop %v638
        %v640 = vmul.f32 %v508, 1.442695
        %v641 = vpow.pop %v640
        %v642 = vmul.f32 %v509, 1.442695
        %v643 = vpow.pop %v642
        %v644 = vmul.f32 %v510, 1.442695
        %v645 = vpow.pop %v644
        %v646 = vmul.f32 %v511, 1.442695
        %v647 = vpow.pop %v646
        %v648 = vmul.f32 %v512, 1.442695
        %v649 = vpow.pop %v648
        %v650 = vmul.f32 %v513, 1.442695
        %v651 = vpow.pop %v650
        %v652 = vmul.f32 %v514, 1.442695
        %v653 = vpow.pop %v652
        %v654 = vmul.f32 %v515, 1.442695
        %v655 = vpow.pop %v654
        %v656 = vmul.f32 %v516, 1.442695
        %v657 = vpow.pop %v656
        %v658 = vmul.f32 %v517, 1.442695
        %v659 = vpow.pop %v658
        %v660 = vmul.f32 %v518, 1.442695
        %v661 = vpow.pop %v660
        %v662 = vmul.f32 %v519, 1.442695
        %v663 = vpow.pop %v662
        %v664 = vmul.f32 %v520, 1.442695
        %v665 = vpow.pop %v664
        %v666 = vmul.f32 %v521, 1.442695
        %v667 = vpow.pop %v666
        %v668 = vmul.f32 %v522, 1.442695
        %v669 = vpow.pop %v668
        %v670 = vmul.f32 %v523, 1.442695
        %v671 = vpow.pop %v670
        %v672 = vmul.f32 %v524, 1.442695
        %v673 = vpow.pop %v672
        %v674 = vmul.f32 %v525, 1.442695
        %v675 = vpow.pop %v674
        %v676 = vmul.f32 %v526, 1.442695
        %v677 = vpow.pop %v676
        %v678 = vmul.f32 %v527, 1.442695
        %v679 = vpow.pop %v678
        %v680 = vmul.f32 %v528, 1.442695
        %v681 = vpow.pop %v680
        %v682 = vmul.f32 %v529, 1.442695
        %v683 = vpow.pop %v682
        %v684 = vmul.f32 %v530, 1.442695
        %v685 = vpow.pop %v684
        %v686 = vmul.f32 %v531, 1.442695
        %v687 = vpow.pop %v686
        %v688 = vmul.f32 %v532, 1.442695
        %v689 = vpow.pop %v688
        %v690 = vmul.f32 %v533, 1.442695
        %v691 = vpow.pop %v690
        %v692 = vmul.f32 %v534, 1.442695
        %v693 = vpow.pop %v692
        %v694 = vmul.f32 %v535, 1.442695
        %v695 = vpow.pop %v694
        %v696 = vmul.f32 %v536, 1.442695
        %v697 = vpow.pop %v696
        %v698 = vmul.f32 %v537, 1.442695
        %v699 = vpow.pop %v698
        %v700 = vmul.f32 %v538, 1.442695
        %v701 = vpow.pop %v700
        %v702 = vmul.f32 %v539, 1.442695
        %v703 = vpow.pop %v702
        %v704 = vmul.f32 %v540, 1.442695
        %v705 = vpow.pop %v704
        %v706 = vmul.f32 %v541, 1.442695
        %v707 = vpow.pop %v706
        %v708 = vmul.f32 %v542, 1.442695
        %v709 = vpow.pop %v708
        %v710 = vmul.f32 %v543, 1.442695
        %v711 = vpow.pop %v710
        %v712 = vmul.f32 %v544, 1.442695
        %v713 = vpow.pop %v712
        %v714 = vmul.f32 %v545, 1.442695
        %v715 = vpow.pop %v714
        %v716 = vmul.f32 %v546, 1.442695
        %v717 = vpow.pop %v716
        %v718 = vmul.f32 %v547, 1.442695
        %v719 = vpow.pop %v718
        %v720 = vmul.f32 %v548, 1.442695
        %v721 = vpow.pop %v720
        %v722 = vmul.f32 %v549, 1.442695
        %v723 = vpow.pop %v722
        %v724 = vmul.f32 %v550, 1.442695
        %v725 = vpow.pop %v724
        %v726 = vmul.f32 %v551, 1.442695
        %v727 = vpow.pop %v726
        %v728 = vmul.f32 %v552, 1.442695
        %v729 = vpow.pop %v728
        %v730 = vmul.f32 %v553, 1.442695
        %v731 = vpow.pop %v730
        %v732 = vmul.f32 %v554, 1.442695
        %v733 = vpow.pop %v732
        %v734 = vmul.f32 %v555, 1.442695
        %v735 = vpow.pop %v734
        %v736 = vmul.f32 %v556, 1.442695
        %v737 = vpow.pop %v736
        %v738 = vmul.f32 %v557, 1.442695
        %v739 = vpow.pop %v738
        %v740 = vmul.f32 %v558, 1.442695
        %v741 = vpow.pop %v740
        %v742 = vmul.f32 %v559, 1.442695
        %v743 = vpow.pop %v742
        %v744 = vmul.f32 %v560, 1.442695
        %v745 = vpow.pop %v744
        %v746 = vmul.f32 %v561, 1.442695
        %v747 = vpow.pop %v746
        %v748 = vmul.f32 %v562, 1.442695
        %v749 = vpow.pop %v748
        %v750 = vmul.f32 %v563, 1.442695
        %v751 = vpow.pop %v750
        %v752 = vmul.f32 %v564, 1.442695
        %v753 = vpow.pop %v752
        %v754 = vmul.f32 %v565, 1.442695
        %v755 = vpow.pop %v754
        %v756 = vmul.f32 %v566, 1.442695
        %v757 = vpow.pop %v756
        %v758 = vmul.f32 %v567, 1.442695
        %v759 = vpow.pop %v758
        %v760 = vmul.f32 %v568, 1.442695
        %v761 = vpow.pop %v760
        %v762 = vmul.f32 %v569, 1.442695
        %v763 = vpow.pop %v762
        %v764 = vmul.f32 %v570, 1.442695
        %v765 = vpow.pop %v764
        %v766 = vmul.f32 %v571, 1.442695
        %v767 = vpow.pop %v766
        %v768 = vmul.f32 %v572, 1.442695
        %v769 = vpow.pop %v768
        %v770 = vmul.f32 %v573, 1.442695
        %v771 = vpow.pop %v770
        %v772 = vmul.f32 %v574, 1.442695
        %v773 = vpow.pop %v772
        %v774 = vmul.f32 %v575, 1.442695
        %v775 = vpow.pop %v774
        %v776 = vmul.f32 %v576, 1.442695
        %v777 = vpow.pop %v776
        %v778 = vmul.f32 %v577, 1.442695
        %v779 = vpow.pop %v778
        %v780 = vmul.f32 %v578, 1.442695
        %v781 = vpow.pop %v780
        %v782 = vmul.f32 %v579, 1.442695
        %v783 = vpow.pop %v782
        %v784 = vmul.f32 %v580, 1.442695
        %v785 = vpow.pop %v784
        %v786 = vmul.f32 %v581, 1.442695
        %v787 = vpow.pop %v786
        %v788 = vmul.f32 %v582, 1.442695
        %v789 = vpow.pop %v788
        %v790 = vmul.f32 %v583, 1.442695
        %v791 = vpow.pop %v790
        %v792 = vmul.f32 %v584, 1.442695
        %v793 = vpow.pop %v792
        %v794 = vmul.f32 %v585, 1.442695
        %v795 = vpow.pop %v794
        %v796 = vmul.f32 %v586, 1.442695
        %v797 = vpow.pop %v796
        %v798 = vmul.f32 %v587, 1.442695
        %v799 = vpow.pop %v798
        %v800 = vmul.f32 %v588, 1.442695
        %v801 = vpow.pop %v800
        %v802 = vmul.f32 %v589, 1.442695
        %v803 = vpow.pop %v802
        %v804 = vmul.f32 %v590, 1.442695
        %v805 = vpow.pop %v804
        %v806 = vmul.f32 %v591, 1.442695
        %v807 = vpow.pop %v806
        %v808 = vmul.f32 %v592, 1.442695
        %v809 = vpow.pop %v808
        %v810 = vmul.f32 %v593, 1.442695
        %v811 = vpow.pop %v810
        %v812 = vmul.f32 %v594, 1.442695
        %v813 = vpow.pop %v812
        %v814 = vmul.f32 %v595, 1.442695
        %v815 = vpow.pop %v814
        %v816 = vmul.f32 %v596, 1.442695
        %v817 = vpow.pop %v816
        %v818 = vmul.f32 %v597, 1.442695
        %v819 = vpow.pop %v818
        %v820 = vmul.f32 %v598, 1.442695
        %v821 = vpow.pop %v820
        %v822 = vmul.f32 %v599, 1.442695
        %v823 = vpow.pop %v822
        %v824 = vmul.f32 %v600, 1.442695
        %v825 = vpow.pop %v824
        %v826 = vmul.f32 %v601, 1.442695
        %v827 = vpow.pop %v826
        %v828 = vmul.f32 %v602, 1.442695
        %v829 = vpow.pop %v828
        %v830 = vmul.f32 %v603, 1.442695
        %v831 = vpow.pop %v830
        %v832 = vmul.f32 %v604, 1.442695
        %v833 = vpow.pop %v832
        %v834 = vmul.f32 %v605, 1.442695
        %v835 = vpow.pop %v834
        %v836 = vmul.f32 %v606, 1.442695
        %v837 = vpow.pop %v836
        %v838 = vmul.f32 %v607, 1.442695
        %v839 = vpow.pop %v838
        %v840 = vmul.f32 %v608, 1.442695
        %v841 = vpow.pop %v840
        %v842 = vmul.f32 %v609, 1.442695
        %v843 = vpow.pop %v842
        %v844 = vmul.f32 %v610, 1.442695
        %v845 = vpow.pop %v844
        %v846 = vmul.f32 %v611, 1.442695
        %v847 = vpow.pop %v846
        %v848 = vmul.f32 %v612, 1.442695
        %v849 = vpow.pop %v848
        %v850 = vmul.f32 %v613, 1.442695
        %v851 = vpow.pop %v850
        %v852 = vmul.f32 %v614, 1.442695
        %v853 = vpow.pop %v852
        %v854 = vmul.f32 %v615, 1.442695
        %v855 = vpow.pop %v854
        %v856 = vmul.f32 %v616, 1.442695
        %v857 = vpow.pop %v856
        %v858 = vmul.f32 %v617, 1.442695
        %v859 = vpow.pop %v858
        %v860 = vmul.f32 %v618, 1.442695
        %v861 = vpow.pop %v860
        %v862 = vmul.f32 %v619, 1.442695
        %v863 = vpow.pop %v862
        %v864 = vmul.f32 %v620, 1.442695
        %v865 = vpow.pop %v864
        %v866 = vmul.f32 %v621, 1.442695
        %v867 = vpow.pop %v866
        %v868 = vmul.f32 %v622, 1.442695
        %v869 = vpow.pop %v868
        %v870 = vmul.f32 %v623, 1.442695
        %v871 = vpow.pop %v870
        %v872 = vmul.f32 %v624, 1.442695
        %v873 = vpow.pop %v872
        %v874 = vmul.f32 %v625, 1.442695
        %v875 = vpow.pop %v874
        %v876 = vmul.f32 %v626, 1.442695
        %v877 = vpow.pop %v876
        %v878 = vmul.f32 %v627, 1.442695
        %v879 = vpow.pop %v878
        %v880 = vmul.f32 %v628, 1.442695
        %v881 = vpow.pop %v880
        %v882 = vmul.f32 %v629, 1.442695
        %v883 = vpow.pop %v882
        %v884 = vmul.f32 %v630, 1.442695
        %v885 = vpow.pop %v884
        %v886 = vmul.f32 %v631, 1.442695
        %v887 = vpow.pop %v886
        %888 = vmatpush.msra.mxu0 %v406
        %889 = vmatpush.msra.mxu0 %v404
        %890 = vmatpush.msra.mxu0 %v402
        %891 = vmatpush.msra.mxu0 %v400
        %892 = vmatpush.msra.mxu0 %v398
        %893 = vmatpush.msra.mxu0 %v396
        %894 = vmatpush.msra.mxu0 %v394
        %895 = vmatpush.msra.mxu0 %v392
        %896 = vmatpush.msra.mxu0 %v390
        %897 = vmatpush.msra.mxu0 %v388
        %898 = vmatpush.msra.mxu0 %v386
        %899 = vmatpush.msra.mxu0 %v384
        %900 = vmatpush.msra.mxu0 %v382
        %901 = vmatpush.msra.mxu0 %v380
        %902 = vmatpush.msra.mxu0 %v378
        %903 = vmatpush.msra.mxu0 %v376
        %904 = vmatmul.f32.gmra.mxu0 %v372
        %v905 = vpop.f32.mrf.mxu0
        %v906 = vadd.f32 0.0, %v905
        %907 = vdwg.mxu0
        %908 = vmatpush.msra.mxu0 %v438
        %909 = vmatpush.msra.mxu0 %v436
        %910 = vmatpush.msra.mxu0 %v434
        %911 = vmatpush.msra.mxu0 %v432
        %912 = vmatpush.msra.mxu0 %v430
        %913 = vmatpush.msra.mxu0 %v428
        %914 = vmatpush.msra.mxu0 %v426
        %915 = vmatpush.msra.mxu0 %v424
        %916 = vmatpush.msra.mxu0 %v422
        %917 = vmatpush.msra.mxu0 %v420
        %918 = vmatpush.msra.mxu0 %v418
        %919 = vmatpush.msra.mxu0 %v416
        %920 = vmatpush.msra.mxu0 %v414
        %921 = vmatpush.msra.mxu0 %v412
        %922 = vmatpush.msra.mxu0 %v410
        %923 = vmatpush.msra.mxu0 %v408
        %924 = vmatmul.f32.gmra.mxu0 %v373
        %v925 = vpop.f32.mrf.mxu0
        %v926 = vadd.f32 %v906, %v925
        %927 = vdwg.mxu0
        %928 = vmatpush.msra.mxu0 %v470
        %929 = vmatpush.msra.mxu0 %v468
        %930 = vmatpush.msra.mxu0 %v466
        %931 = vmatpush.msra.mxu0 %v464
        %932 = vmatpush.msra.mxu0 %v462
        %933 = vmatpush.msra.mxu0 %v460
        %934 = vmatpush.msra.mxu0 %v458
        %935 = vmatpush.msra.mxu0 %v456
        %936 = vmatpush.msra.mxu0 %v454
        %937 = vmatpush.msra.mxu0 %v452
        %938 = vmatpush.msra.mxu0 %v450
        %939 = vmatpush.msra.mxu0 %v448
        %940 = vmatpush.msra.mxu0 %v446
        %941 = vmatpush.msra.mxu0 %v444
        %942 = vmatpush.msra.mxu0 %v442
        %943 = vmatpush.msra.mxu0 %v440
        %944 = vmatmul.f32.gmra.mxu0 %v374
        %v945 = vpop.f32.mrf.mxu0
        %v946 = vadd.f32 %v926, %v945
        %947 = vdwg.mxu0
        %948 = vmatpush.msra.mxu0 %v502
        %949 = vmatpush.msra.mxu0 %v500
        %950 = vmatpush.msra.mxu0 %v498
        %951 = vmatpush.msra.mxu0 %v496
        %952 = vmatpush.msra.mxu0 %v494
        %953 = vmatpush.msra.mxu0 %v492
        %954 = vmatpush.msra.mxu0 %v490
        %955 = vmatpush.msra.mxu0 %v488
        %956 = vmatpush.msra.mxu0 %v486
        %957 = vmatpush.msra.mxu0 %v484
        %958 = vmatpush.msra.mxu0 %v482
        %959 = vmatpush.msra.mxu0 %v480
        %960 = vmatpush.msra.mxu0 %v478
        %961 = vmatpush.msra.mxu0 %v476
        %962 = vmatpush.msra.mxu0 %v474
        %963 = vmatpush.msra.mxu0 %v472
        %964 = vmatmul.f32.gmra.mxu0 %v375
        %v965 = vpop.f32.mrf.mxu0
        %v966 = vadd.f32 %v946, %v965
        %967 = vdwg.mxu0
        %968 = vmatpush.msra.mxu0 %v407
        %969 = vmatpush.msra.mxu0 %v405
        %970 = vmatpush.msra.mxu0 %v403
        %971 = vmatpush.msra.mxu0 %v401
        %972 = vmatpush.msra.mxu0 %v399
        %973 = vmatpush.msra.mxu0 %v397
        %974 = vmatpush.msra.mxu0 %v395
        %975 = vmatpush.msra.mxu0 %v393
        %976 = vmatpush.msra.mxu0 %v391
        %977 = vmatpush.msra.mxu0 %v389
        %978 = vmatpush.msra.mxu0 %v387
        %979 = vmatpush.msra.mxu0 %v385
        %980 = vmatpush.msra.mxu0 %v383
        %981 = vmatpush.msra.mxu0 %v381
        %982 = vmatpush.msra.mxu0 %v379
        %983 = vmatpush.msra.mxu0 %v377
        %984 = vmatmul.f32.gmra.mxu0 %v372
        %v985 = vpop.f32.mrf.mxu0
        %v986 = vadd.f32 0.0, %v985
        %987 = vdwg.mxu0
        %988 = vmatpush.msra.mxu0 %v439
        %989 = vmatpush.msra.mxu0 %v437
        %990 = vmatpush.msra.mxu0 %v435
        %991 = vmatpush.msra.mxu0 %v433
        %992 = vmatpush.msra.mxu0 %v431
        %993 = vmatpush.msra.mxu0 %v429
        %994 = vmatpush.msra.mxu0 %v427
        %995 = vmatpush.msra.mxu0 %v425
        %996 = vmatpush.msra.mxu0 %v423
        %997 = vmatpush.msra.mxu0 %v421
        %998 = vmatpush.msra.mxu0 %v419
        %999 = vmatpush.msra.mxu0 %v417
        %1000 = vmatpush.msra.mxu0 %v415
        %1001 = vmatpush.msra.mxu0 %v413
        %1002 = vmatpush.msra.mxu0 %v411
        %1003 = vmatpush.msra.mxu0 %v409
        %1004 = vmatmul.f32.gmra.mxu0 %v373
        %v1005 = vpop.f32.mrf.mxu0
        %v1006 = vadd.f32 %v986, %v1005
        %1007 = vdwg.mxu0
        %1008 = vmatpush.msra.mxu0 %v471
        %1009 = vmatpush.msra.mxu0 %v469
        %1010 = vmatpush.msra.mxu0 %v467
        %1011 = vmatpush.msra.mxu0 %v465
        %1012 = vmatpush.msra.mxu0 %v463
        %1013 = vmatpush.msra.mxu0 %v461
        %1014 = vmatpush.msra.mxu0 %v459
        %1015 = vmatpush.msra.mxu0 %v457
        %1016 = vmatpush.msra.mxu0 %v455
        %1017 = vmatpush.msra.mxu0 %v453
        %1018 = vmatpush.msra.mxu0 %v451
        %1019 = vmatpush.msra.mxu0 %v449
        %1020 = vmatpush.msra.mxu0 %v447
        %1021 = vmatpush.msra.mxu0 %v445
        %1022 = vmatpush.msra.mxu0 %v443
        %1023 = vmatpush.msra.mxu0 %v441
        %1024 = vmatmul.f32.gmra.mxu0 %v374
        %v1025 = vpop.f32.mrf.mxu0
        %v1026 = vadd.f32 %v1006, %v1025
        %1027 = vdwg.mxu0
        %1028 = vmatpush.msra.mxu0 %v503
        %1029 = vmatpush.msra.mxu0 %v501
        %1030 = vmatpush.msra.mxu0 %v499
        %1031 = vmatpush.msra.mxu0 %v497
        %1032 = vmatpush.msra.mxu0 %v495
        %1033 = vmatpush.msra.mxu0 %v493
        %1034 = vmatpush.msra.mxu0 %v491
        %1035 = vmatpush.msra.mxu0 %v489
        %1036 = vmatpush.msra.mxu0 %v487
        %1037 = vmatpush.msra.mxu0 %v485
        %1038 = vmatpush.msra.mxu0 %v483
        %1039 = vmatpush.msra.mxu0 %v481
        %1040 = vmatpush.msra.mxu0 %v479
        %1041 = vmatpush.msra.mxu0 %v477
        %1042 = vmatpush.msra.mxu0 %v475
        %1043 = vmatpush.msra.mxu0 %v473
        %1044 = vmatmul.f32.gmra.mxu0 %v375
        %v1045 = vpop.f32.mrf.mxu0
        %v1046 = vadd.f32 %v1026, %v1045
        %1047 = vdwg.mxu0
        %v1048 = vmul.f32 %v372, %v372
        %v1049 = vmul.f32 %v373, %v373
        %v1050 = vmul.f32 %v374, %v374
        %v1051 = vmul.f32 %v375, %v375
        %1052 = vmatpush.msra.mxu0 %v693
        %1053 = vmatpush.msra.mxu0 %v689
        %1054 = vmatpush.msra.mxu0 %v685
        %1055 = vmatpush.msra.mxu0 %v681
        %1056 = vmatpush.msra.mxu0 %v677
        %1057 = vmatpush.msra.mxu0 %v673
        %1058 = vmatpush.msra.mxu0 %v669
        %1059 = vmatpush.msra.mxu0 %v665
        %1060 = vmatpush.msra.mxu0 %v661
        %1061 = vmatpush.msra.mxu0 %v657
        %1062 = vmatpush.msra.mxu0 %v653
        %1063 = vmatpush.msra.mxu0 %v649
        %1064 = vmatpush.msra.mxu0 %v645
        %1065 = vmatpush.msra.mxu0 %v641
        %1066 = vmatpush.msra.mxu0 %v637
        %1067 = vmatpush.msra.mxu0 %v633
        %1068 = vmatmul.f32.gmra.mxu0 %v1048
        %v1069 = vpop.f32.mrf.mxu0
        %v1070 = vadd.f32 1e-06, %v1069
        %1071 = vdwg.mxu0
        %1072 = vmatpush.msra.mxu0 %v757
        %1073 = vmatpush.msra.mxu0 %v753
        %1074 = vmatpush.msra.mxu0 %v749
        %1075 = vmatpush.msra.mxu0 %v745
        %1076 = vmatpush.msra.mxu0 %v741
        %1077 = vmatpush.msra.mxu0 %v737
        %1078 = vmatpush.msra.mxu0 %v733
        %1079 = vmatpush.msra.mxu0 %v729
        %1080 = vmatpush.msra.mxu0 %v725
        %1081 = vmatpush.msra.mxu0 %v721
        %1082 = vmatpush.msra.mxu0 %v717
        %1083 = vmatpush.msra.mxu0 %v713
        %1084 = vmatpush.msra.mxu0 %v709
        %1085 = vmatpush.msra.mxu0 %v705
        %1086 = vmatpush.msra.mxu0 %v701
        %1087 = vmatpush.msra.mxu0 %v697
        %1088 = vmatmul.f32.gmra.mxu0 %v1049
        %v1089 = vpop.f32.mrf.mxu0
        %v1090 = vadd.f32 %v1070, %v1089
        %1091 = vdwg.mxu0
        %1092 = vmatpush.msra.mxu0 %v821
        %1093 = vmatpush.msra.mxu0 %v817
        %1094 = vmatpush.msra.mxu0 %v813
        %1095 = vmatpush.msra.mxu0 %v809
        %1096 = vmatpush.msra.mxu0 %v805
        %1097 = vmatpush.msra.mxu0 %v801
        %1098 = vmatpush.msra.mxu0 %v797
        %1099 = vmatpush.msra.mxu0 %v793
        %1100 = vmatpush.msra.mxu0 %v789
        %1101 = vmatpush.msra.mxu0 %v785
        %1102 = vmatpush.msra.mxu0 %v781
        %1103 = vmatpush.msra.mxu0 %v777
        %1104 = vmatpush.msra.mxu0 %v773
        %1105 = vmatpush.msra.mxu0 %v769
        %1106 = vmatpush.msra.mxu0 %v765
        %1107 = vmatpush.msra.mxu0 %v761
        %1108 = vmatmul.f32.gmra.mxu0 %v1050
        %v1109 = vpop.f32.mrf.mxu0
        %v1110 = vadd.f32 %v1090, %v1109
        %1111 = vdwg.mxu0
        %1112 = vmatpush.msra.mxu0 %v885
        %1113 = vmatpush.msra.mxu0 %v881
        %1114 = vmatpush.msra.mxu0 %v877
        %1115 = vmatpush.msra.mxu0 %v873
        %1116 = vmatpush.msra.mxu0 %v869
        %1117 = vmatpush.msra.mxu0 %v865
        %1118 = vmatpush.msra.mxu0 %v861
        %1119 = vmatpush.msra.mxu0 %v857
        %1120 = vmatpush.msra.mxu0 %v853
        %1121 = vmatpush.msra.mxu0 %v849
        %1122 = vmatpush.msra.mxu0 %v845
        %1123 = vmatpush.msra.mxu0 %v841
        %1124 = vmatpush.msra.mxu0 %v837
        %1125 = vmatpush.msra.mxu0 %v833
        %1126 = vmatpush.msra.mxu0 %v829
        %1127 = vmatpush.msra.mxu0 %v825
        %1128 = vmatmul.f32.gmra.mxu0 %v1051
        %v1129 = vpop.f32.mrf.mxu0
        %v1130 = vadd.f32 %v1110, %v1129
        %1131 = vdwg.mxu0
        %1132 = vmatpush.msra.mxu0 %v695
        %1133 = vmatpush.msra.mxu0 %v691
        %1134 = vmatpush.msra.mxu0 %v687
        %1135 = vmatpush.msra.mxu0 %v683
        %1136 = vmatpush.msra.mxu0 %v679
        %1137 = vmatpush.msra.mxu0 %v675
        %1138 = vmatpush.msra.mxu0 %v671
        %1139 = vmatpush.msra.mxu0 %v667
        %1140 = vmatpush.msra.mxu0 %v663
        %1141 = vmatpush.msra.mxu0 %v659
        %1142 = vmatpush.msra.mxu0 %v655
        %1143 = vmatpush.msra.mxu0 %v651
        %1144 = vmatpush.msra.mxu0 %v647
        %1145 = vmatpush.msra.mxu0 %v643
        %1146 = vmatpush.msra.mxu0 %v639
        %1147 = vmatpush.msra.mxu0 %v635
        %1148 = vmatmul.f32.gmra.mxu0 %v1048
        %v1149 = vpop.f32.mrf.mxu0
        %v1150 = vadd.f32 1e-06, %v1149
        %1151 = vdwg.mxu0
        %1152 = vmatpush.msra.mxu0 %v759
        %1153 = vmatpush.msra.mxu0 %v755
        %1154 = vmatpush.msra.mxu0 %v751
        %1155 = vmatpush.msra.mxu0 %v747
        %1156 = vmatpush.msra.mxu0 %v743
        %1157 = vmatpush.msra.mxu0 %v739
        %1158 = vmatpush.msra.mxu0 %v735
        %1159 = vmatpush.msra.mxu0 %v731
        %1160 = vmatpush.msra.mxu0 %v727
        %1161 = vmatpush.msra.mxu0 %v723
        %1162 = vmatpush.msra.mxu0 %v719
        %1163 = vmatpush.msra.mxu0 %v715
        %1164 = vmatpush.msra.mxu0 %v711
        %1165 = vmatpush.msra.mxu0 %v707
        %1166 = vmatpush.msra.mxu0 %v703
        %1167 = vmatpush.msra.mxu0 %v699
        %1168 = vmatmul.f32.gmra.mxu0 %v1049
        %v1169 = vpop.f32.mrf.mxu0
        %v1170 = vadd.f32 %v1150, %v1169
        %1171 = vdwg.mxu0
        %1172 = vmatpush.msra.mxu0 %v823
        %1173 = vmatpush.msra.mxu0 %v819
        %1174 = vmatpush.msra.mxu0 %v815
        %1175 = vmatpush.msra.mxu0 %v811
        %1176 = vmatpush.msra.mxu0 %v807
        %1177 = vmatpush.msra.mxu0 %v803
        %1178 = vmatpush.msra.mxu0 %v799
        %1179 = vmatpush.msra.mxu0 %v795
        %1180 = vmatpush.msra.mxu0 %v791
        %1181 = vmatpush.msra.mxu0 %v787
        %1182 = vmatpush.msra.mxu0 %v783
        %1183 = vmatpush.msra.mxu0 %v779
        %1184 = vmatpush.msra.mxu0 %v775
        %1185 = vmatpush.msra.mxu0 %v771
        %1186 = vmatpush.msra.mxu0 %v767
        %1187 = vmatpush.msra.mxu0 %v763
        %1188 = vmatmul.f32.gmra.mxu0 %v1050
        %v1189 = vpop.f32.mrf.mxu0
        %v1190 = vadd.f32 %v1170, %v1189
        %1191 = vdwg.mxu0
        %1192 = vmatpush.msra.mxu0 %v887
        %1193 = vmatpush.msra.mxu0 %v883
        %1194 = vmatpush.msra.mxu0 %v879
        %1195 = vmatpush.msra.mxu0 %v875
        %1196 = vmatpush.msra.mxu0 %v871
        %1197 = vmatpush.msra.mxu0 %v867
        %1198 = vmatpush.msra.mxu0 %v863
        %1199 = vmatpush.msra.mxu0 %v859
        %1200 = vmatpush.msra.mxu0 %v855
        %1201 = vmatpush.msra.mxu0 %v851
        %1202 = vmatpush.msra.mxu0 %v847
        %1203 = vmatpush.msra.mxu0 %v843
        %1204 = vmatpush.msra.mxu0 %v839
        %1205 = vmatpush.msra.mxu0 %v835
        %1206 = vmatpush.msra.mxu0 %v831
        %1207 = vmatpush.msra.mxu0 %v827
        %1208 = vmatmul.f32.gmra.mxu0 %v1051
        %v1209 = vpop.f32.mrf.mxu0
        %v1210 = vadd.f32 %v1190, %v1209
        %1211 = vdwg.mxu0
        %v1212 = vrsqrt.pop %v1130
        %v1213 = vmul.f32 %v1212, %v1130
        %v1214 = vmul.f32 %v1213, %v1212
        %v1215 = vmul.f32 0.5, %v1214
        %v1216 = vsub.f32 1.5, %v1215
        %v1217 = vmul.f32 %v1212, %v1216
        %v1218 = vmul.f32 %v1130, %v1217
        %vm1219 = vcmp.eq.f32.partialorder %v1130, inf
        %v1220 = vsel %vm1219, %v1130, %v1218
        %vm1221 = vcmp.eq.f32.partialorder %v1130, 0.0
        %v1222 = vand.u32 %v1130, 2147483648
        %v1223 = vsel %vm1221, %v1222, %v1220
        %v1224 = vrsqrt.pop %v1210
        %v1225 = vmul.f32 %v1224, %v1210
        %v1226 = vmul.f32 %v1225, %v1224
        %v1227 = vmul.f32 0.5, %v1226
        %v1228 = vsub.f32 1.5, %v1227
        %v1229 = vmul.f32 %v1224, %v1228
        %v1230 = vmul.f32 %v1210, %v1229
        %vm1231 = vcmp.eq.f32.partialorder %v1210, inf
        %v1232 = vsel %vm1231, %v1210, %v1230
        %vm1233 = vcmp.eq.f32.partialorder %v1210, 0.0
        %v1234 = vand.u32 %v1210, 2147483648
        %v1235 = vsel %vm1233, %v1234, %v1232
        %v1236 = vld [vmem:[%s359] sm:$0xff]
        %v1237 = vld [vmem:[%s359 + $0x8] sm:$0xff]
        %v1238 = vmul.f32 %v1223, %v1236
        %v1239 = vmul.f32 %v1235, %v1237
        %v1240 = vadd.f32 %v1238, %v966
        %v1241 = vadd.f32 %v1239, %v1046
        %v1242 = vld [vmem:[%s353] sm:$0x3]
        %v1244 = vperm.slane %v1242, 0
        %v1245 = vperm.slane %v1242, 1
        %v1248 = vadd.f32 %v1240, %v1244
        %v1249 = vadd.f32 %v1241, %v1245
        %1250 = vst [vmem:[%s365] sm:$0xff] %v1248
        %1251 = vst [vmem:[%s365 + $0x8] sm:$0xff] %v1249
        %v1252 = vmul.f32 %v376, %v376
        %v1253 = vmul.f32 %v377, %v377
        %v1254 = vmul.f32 %v378, %v378
        %v1255 = vmul.f32 %v379, %v379
        %v1256 = vmul.f32 %v380, %v380
        %v1257 = vmul.f32 %v381, %v381
        %v1258 = vmul.f32 %v382, %v382
        %v1259 = vmul.f32 %v383, %v383
        %v1260 = vmul.f32 %v384, %v384
        %v1261 = vmul.f32 %v385, %v385
        %v1262 = vmul.f32 %v386, %v386
        %v1263 = vmul.f32 %v387, %v387
        %v1264 = vmul.f32 %v388, %v388
        %v1265 = vmul.f32 %v389, %v389
        %v1266 = vmul.f32 %v390, %v390
        %v1267 = vmul.f32 %v391, %v391
        %v1268 = vmul.f32 %v392, %v392
        %v1269 = vmul.f32 %v393, %v393
        %v1270 = vmul.f32 %v394, %v394
        %v1271 = vmul.f32 %v395, %v395
        %v1272 = vmul.f32 %v396, %v396
        %v1273 = vmul.f32 %v397, %v397
        %v1274 = vmul.f32 %v398, %v398
        %v1275 = vmul.f32 %v399, %v399
        %v1276 = vmul.f32 %v400, %v400
        %v1277 = vmul.f32 %v401, %v401
        %v1278 = vmul.f32 %v402, %v402
        %v1279 = vmul.f32 %v403, %v403
        %v1280 = vmul.f32 %v404, %v404
        %v1281 = vmul.f32 %v405, %v405
        %v1282 = vmul.f32 %v406, %v406
        %v1283 = vmul.f32 %v407, %v407
        %v1284 = vmul.f32 %v408, %v408
        %v1285 = vmul.f32 %v409, %v409
        %v1286 = vmul.f32 %v410, %v410
        %v1287 = vmul.f32 %v411, %v411
        %v1288 = vmul.f32 %v412, %v412
        %v1289 = vmul.f32 %v413, %v413
        %v1290 = vmul.f32 %v414, %v414
        %v1291 = vmul.f32 %v415, %v415
        %v1292 = vmul.f32 %v416, %v416
        %v1293 = vmul.f32 %v417, %v417
        %v1294 = vmul.f32 %v418, %v418
        %v1295 = vmul.f32 %v419, %v419
        %v1296 = vmul.f32 %v420, %v420
        %v1297 = vmul.f32 %v421, %v421
        %v1298 = vmul.f32 %v422, %v422
        %v1299 = vmul.f32 %v423, %v423
        %v1300 = vmul.f32 %v424, %v424
        %v1301 = vmul.f32 %v425, %v425
        %v1302 = vmul.f32 %v426, %v426
        %v1303 = vmul.f32 %v427, %v427
        %v1304 = vmul.f32 %v428, %v428
        %v1305 = vmul.f32 %v429, %v429
        %v1306 = vmul.f32 %v430, %v430
        %v1307 = vmul.f32 %v431, %v431
        %v1308 = vmul.f32 %v432, %v432
        %v1309 = vmul.f32 %v433, %v433
        %v1310 = vmul.f32 %v434, %v434
        %v1311 = vmul.f32 %v435, %v435
        %v1312 = vmul.f32 %v436, %v436
        %v1313 = vmul.f32 %v437, %v437
        %v1314 = vmul.f32 %v438, %v438
        %v1315 = vmul.f32 %v439, %v439
        %v1316 = vmul.f32 %v440, %v440
        %v1317 = vmul.f32 %v441, %v441
        %v1318 = vmul.f32 %v442, %v442
        %v1319 = vmul.f32 %v443, %v443
        %v1320 = vmul.f32 %v444, %v444
        %v1321 = vmul.f32 %v445, %v445
        %v1322 = vmul.f32 %v446, %v446
        %v1323 = vmul.f32 %v447, %v447
        %v1324 = vmul.f32 %v448, %v448
        %v1325 = vmul.f32 %v449, %v449
        %v1326 = vmul.f32 %v450, %v450
        %v1327 = vmul.f32 %v451, %v451
        %v1328 = vmul.f32 %v452, %v452
        %v1329 = vmul.f32 %v453, %v453
        %v1330 = vmul.f32 %v454, %v454
        %v1331 = vmul.f32 %v455, %v455
        %v1332 = vmul.f32 %v456, %v456
        %v1333 = vmul.f32 %v457, %v457
        %v1334 = vmul.f32 %v458, %v458
        %v1335 = vmul.f32 %v459, %v459
        %v1336 = vmul.f32 %v460, %v460
        %v1337 = vmul.f32 %v461, %v461
        %v1338 = vmul.f32 %v462, %v462
        %v1339 = vmul.f32 %v463, %v463
        %v1340 = vmul.f32 %v464, %v464
        %v1341 = vmul.f32 %v465, %v465
        %v1342 = vmul.f32 %v466, %v466
        %v1343 = vmul.f32 %v467, %v467
        %v1344 = vmul.f32 %v468, %v468
        %v1345 = vmul.f32 %v469, %v469
        %v1346 = vmul.f32 %v470, %v470
        %v1347 = vmul.f32 %v471, %v471
        %v1348 = vmul.f32 %v472, %v472
        %v1349 = vmul.f32 %v473, %v473
        %v1350 = vmul.f32 %v474, %v474
        %v1351 = vmul.f32 %v475, %v475
        %v1352 = vmul.f32 %v476, %v476
        %v1353 = vmul.f32 %v477, %v477
        %v1354 = vmul.f32 %v478, %v478
        %v1355 = vmul.f32 %v479, %v479
        %v1356 = vmul.f32 %v480, %v480
        %v1357 = vmul.f32 %v481, %v481
        %v1358 = vmul.f32 %v482, %v482
        %v1359 = vmul.f32 %v483, %v483
        %v1360 = vmul.f32 %v484, %v484
        %v1361 = vmul.f32 %v485, %v485
        %v1362 = vmul.f32 %v486, %v486
        %v1363 = vmul.f32 %v487, %v487
        %v1364 = vmul.f32 %v488, %v488
        %v1365 = vmul.f32 %v489, %v489
        %v1366 = vmul.f32 %v490, %v490
        %v1367 = vmul.f32 %v491, %v491
        %v1368 = vmul.f32 %v492, %v492
        %v1369 = vmul.f32 %v493, %v493
        %v1370 = vmul.f32 %v494, %v494
        %v1371 = vmul.f32 %v495, %v495
        %v1372 = vmul.f32 %v496, %v496
        %v1373 = vmul.f32 %v497, %v497
        %v1374 = vmul.f32 %v498, %v498
        %v1375 = vmul.f32 %v499, %v499
        %v1376 = vmul.f32 %v500, %v500
        %v1377 = vmul.f32 %v501, %v501
        %v1378 = vmul.f32 %v502, %v502
        %v1379 = vmul.f32 %v503, %v503
        %v1380 = vlog2.pop %v1252
        %v1381 = vmul.f32 %v1380, 0.6931472
        %v1382 = vlog2.pop %v1253
        %v1383 = vmul.f32 %v1382, 0.6931472
        %v1384 = vlog2.pop %v1254
        %v1385 = vmul.f32 %v1384, 0.6931472
        %v1386 = vlog2.pop %v1255
        %v1387 = vmul.f32 %v1386, 0.6931472
        %v1388 = vlog2.pop %v1256
        %v1389 = vmul.f32 %v1388, 0.6931472
        %v1390 = vlog2.pop %v1257
        %v1391 = vmul.f32 %v1390, 0.6931472
        %v1392 = vlog2.pop %v1258
        %v1393 = vmul.f32 %v1392, 0.6931472
        %v1394 = vlog2.pop %v1259
        %v1395 = vmul.f32 %v1394, 0.6931472
        %v1396 = vlog2.pop %v1260
        %v1397 = vmul.f32 %v1396, 0.6931472
        %v1398 = vlog2.pop %v1261
        %v1399 = vmul.f32 %v1398, 0.6931472
        %v1400 = vlog2.pop %v1262
        %v1401 = vmul.f32 %v1400, 0.6931472
        %v1402 = vlog2.pop %v1263
        %v1403 = vmul.f32 %v1402, 0.6931472
        %v1404 = vlog2.pop %v1264
        %v1405 = vmul.f32 %v1404, 0.6931472
        %v1406 = vlog2.pop %v1265
        %v1407 = vmul.f32 %v1406, 0.6931472
        %v1408 = vlog2.pop %v1266
        %v1409 = vmul.f32 %v1408, 0.6931472
        %v1410 = vlog2.pop %v1267
        %v1411 = vmul.f32 %v1410, 0.6931472
        %v1412 = vlog2.pop %v1268
        %v1413 = vmul.f32 %v1412, 0.6931472
        %v1414 = vlog2.pop %v1269
        %v1415 = vmul.f32 %v1414, 0.6931472
        %v1416 = vlog2.pop %v1270
        %v1417 = vmul.f32 %v1416, 0.6931472
        %v1418 = vlog2.pop %v1271
        %v1419 = vmul.f32 %v1418, 0.6931472
        %v1420 = vlog2.pop %v1272
        %v1421 = vmul.f32 %v1420, 0.6931472
        %v1422 = vlog2.pop %v1273
        %v1423 = vmul.f32 %v1422, 0.6931472
        %v1424 = vlog2.pop %v1274
        %v1425 = vmul.f32 %v1424, 0.6931472
        %v1426 = vlog2.pop %v1275
        %v1427 = vmul.f32 %v1426, 0.6931472
        %v1428 = vlog2.pop %v1276
        %v1429 = vmul.f32 %v1428, 0.6931472
        %v1430 = vlog2.pop %v1277
        %v1431 = vmul.f32 %v1430, 0.6931472
        %v1432 = vlog2.pop %v1278
        %v1433 = vmul.f32 %v1432, 0.6931472
        %v1434 = vlog2.pop %v1279
        %v1435 = vmul.f32 %v1434, 0.6931472
        %v1436 = vlog2.pop %v1280
        %v1437 = vmul.f32 %v1436, 0.6931472
        %v1438 = vlog2.pop %v1281
        %v1439 = vmul.f32 %v1438, 0.6931472
        %v1440 = vlog2.pop %v1282
        %v1441 = vmul.f32 %v1440, 0.6931472
        %v1442 = vlog2.pop %v1283
        %v1443 = vmul.f32 %v1442, 0.6931472
        %v1444 = vlog2.pop %v1284
        %v1445 = vmul.f32 %v1444, 0.6931472
        %v1446 = vlog2.pop %v1285
        %v1447 = vmul.f32 %v1446, 0.6931472
        %v1448 = vlog2.pop %v1286
        %v1449 = vmul.f32 %v1448, 0.6931472
        %v1450 = vlog2.pop %v1287
        %v1451 = vmul.f32 %v1450, 0.6931472
        %v1452 = vlog2.pop %v1288
        %v1453 = vmul.f32 %v1452, 0.6931472
        %v1454 = vlog2.pop %v1289
        %v1455 = vmul.f32 %v1454, 0.6931472
        %v1456 = vlog2.pop %v1290
        %v1457 = vmul.f32 %v1456, 0.6931472
        %v1458 = vlog2.pop %v1291
        %v1459 = vmul.f32 %v1458, 0.6931472
        %v1460 = vlog2.pop %v1292
        %v1461 = vmul.f32 %v1460, 0.6931472
        %v1462 = vlog2.pop %v1293
        %v1463 = vmul.f32 %v1462, 0.6931472
        %v1464 = vlog2.pop %v1294
        %v1465 = vmul.f32 %v1464, 0.6931472
        %v1466 = vlog2.pop %v1295
        %v1467 = vmul.f32 %v1466, 0.6931472
        %v1468 = vlog2.pop %v1296
        %v1469 = vmul.f32 %v1468, 0.6931472
        %v1470 = vlog2.pop %v1297
        %v1471 = vmul.f32 %v1470, 0.6931472
        %v1472 = vlog2.pop %v1298
        %v1473 = vmul.f32 %v1472, 0.6931472
        %v1474 = vlog2.pop %v1299
        %v1475 = vmul.f32 %v1474, 0.6931472
        %v1476 = vlog2.pop %v1300
        %v1477 = vmul.f32 %v1476, 0.6931472
        %v1478 = vlog2.pop %v1301
        %v1479 = vmul.f32 %v1478, 0.6931472
        %v1480 = vlog2.pop %v1302
        %v1481 = vmul.f32 %v1480, 0.6931472
        %v1482 = vlog2.pop %v1303
        %v1483 = vmul.f32 %v1482, 0.6931472
        %v1484 = vlog2.pop %v1304
        %v1485 = vmul.f32 %v1484, 0.6931472
        %v1486 = vlog2.pop %v1305
        %v1487 = vmul.f32 %v1486, 0.6931472
        %v1488 = vlog2.pop %v1306
        %v1489 = vmul.f32 %v1488, 0.6931472
        %v1490 = vlog2.pop %v1307
        %v1491 = vmul.f32 %v1490, 0.6931472
        %v1492 = vlog2.pop %v1308
        %v1493 = vmul.f32 %v1492, 0.6931472
        %v1494 = vlog2.pop %v1309
        %v1495 = vmul.f32 %v1494, 0.6931472
        %v1496 = vlog2.pop %v1310
        %v1497 = vmul.f32 %v1496, 0.6931472
        %v1498 = vlog2.pop %v1311
        %v1499 = vmul.f32 %v1498, 0.6931472
        %v1500 = vlog2.pop %v1312
        %v1501 = vmul.f32 %v1500, 0.6931472
        %v1502 = vlog2.pop %v1313
        %v1503 = vmul.f32 %v1502, 0.6931472
        %v1504 = vlog2.pop %v1314
        %v1505 = vmul.f32 %v1504, 0.6931472
        %v1506 = vlog2.pop %v1315
        %v1507 = vmul.f32 %v1506, 0.6931472
        %v1508 = vlog2.pop %v1316
        %v1509 = vmul.f32 %v1508, 0.6931472
        %v1510 = vlog2.pop %v1317
        %v1511 = vmul.f32 %v1510, 0.6931472
        %v1512 = vlog2.pop %v1318
        %v1513 = vmul.f32 %v1512, 0.6931472
        %v1514 = vlog2.pop %v1319
        %v1515 = vmul.f32 %v1514, 0.6931472
        %v1516 = vlog2.pop %v1320
        %v1517 = vmul.f32 %v1516, 0.6931472
        %v1518 = vlog2.pop %v1321
        %v1519 = vmul.f32 %v1518, 0.6931472
        %v1520 = vlog2.pop %v1322
        %v1521 = vmul.f32 %v1520, 0.6931472
        %v1522 = vlog2.pop %v1323
        %v1523 = vmul.f32 %v1522, 0.6931472
        %v1524 = vlog2.pop %v1324
        %v1525 = vmul.f32 %v1524, 0.6931472
        %v1526 = vlog2.pop %v1325
        %v1527 = vmul.f32 %v1526, 0.6931472
        %v1528 = vlog2.pop %v1326
        %v1529 = vmul.f32 %v1528, 0.6931472
        %v1530 = vlog2.pop %v1327
        %v1531 = vmul.f32 %v1530, 0.6931472
        %v1532 = vlog2.pop %v1328
        %v1533 = vmul.f32 %v1532, 0.6931472
        %v1534 = vlog2.pop %v1329
        %v1535 = vmul.f32 %v1534, 0.6931472
        %v1536 = vlog2.pop %v1330
        %v1537 = vmul.f32 %v1536, 0.6931472
        %v1538 = vlog2.pop %v1331
        %v1539 = vmul.f32 %v1538, 0.6931472
        %v1540 = vlog2.pop %v1332
        %v1541 = vmul.f32 %v1540, 0.6931472
        %v1542 = vlog2.pop %v1333
        %v1543 = vmul.f32 %v1542, 0.6931472
        %v1544 = vlog2.pop %v1334
        %v1545 = vmul.f32 %v1544, 0.6931472
        %v1546 = vlog2.pop %v1335
        %v1547 = vmul.f32 %v1546, 0.6931472
        %v1548 = vlog2.pop %v1336
        %v1549 = vmul.f32 %v1548, 0.6931472
        %v1550 = vlog2.pop %v1337
        %v1551 = vmul.f32 %v1550, 0.6931472
        %v1552 = vlog2.pop %v1338
        %v1553 = vmul.f32 %v1552, 0.6931472
        %v1554 = vlog2.pop %v1339
        %v1555 = vmul.f32 %v1554, 0.6931472
        %v1556 = vlog2.pop %v1340
        %v1557 = vmul.f32 %v1556, 0.6931472
        %v1558 = vlog2.pop %v1341
        %v1559 = vmul.f32 %v1558, 0.6931472
        %v1560 = vlog2.pop %v1342
        %v1561 = vmul.f32 %v1560, 0.6931472
        %v1562 = vlog2.pop %v1343
        %v1563 = vmul.f32 %v1562, 0.6931472
        %v1564 = vlog2.pop %v1344
        %v1565 = vmul.f32 %v1564, 0.6931472
        %v1566 = vlog2.pop %v1345
        %v1567 = vmul.f32 %v1566, 0.6931472
        %v1568 = vlog2.pop %v1346
        %v1569 = vmul.f32 %v1568, 0.6931472
        %v1570 = vlog2.pop %v1347
        %v1571 = vmul.f32 %v1570, 0.6931472
        %v1572 = vlog2.pop %v1348
        %v1573 = vmul.f32 %v1572, 0.6931472
        %v1574 = vlog2.pop %v1349
        %v1575 = vmul.f32 %v1574, 0.6931472
        %v1576 = vlog2.pop %v1350
        %v1577 = vmul.f32 %v1576, 0.6931472
        %v1578 = vlog2.pop %v1351
        %v1579 = vmul.f32 %v1578, 0.6931472
        %v1580 = vlog2.pop %v1352
        %v1581 = vmul.f32 %v1580, 0.6931472
        %v1582 = vlog2.pop %v1353
        %v1583 = vmul.f32 %v1582, 0.6931472
        %v1584 = vlog2.pop %v1354
        %v1585 = vmul.f32 %v1584, 0.6931472
        %v1586 = vlog2.pop %v1355
        %v1587 = vmul.f32 %v1586, 0.6931472
        %v1588 = vlog2.pop %v1356
        %v1589 = vmul.f32 %v1588, 0.6931472
        %v1590 = vlog2.pop %v1357
        %v1591 = vmul.f32 %v1590, 0.6931472
        %v1592 = vlog2.pop %v1358
        %v1593 = vmul.f32 %v1592, 0.6931472
        %v1594 = vlog2.pop %v1359
        %v1595 = vmul.f32 %v1594, 0.6931472
        %v1596 = vlog2.pop %v1360
        %v1597 = vmul.f32 %v1596, 0.6931472
        %v1598 = vlog2.pop %v1361
        %v1599 = vmul.f32 %v1598, 0.6931472
        %v1600 = vlog2.pop %v1362
        %v1601 = vmul.f32 %v1600, 0.6931472
        %v1602 = vlog2.pop %v1363
        %v1603 = vmul.f32 %v1602, 0.6931472
        %v1604 = vlog2.pop %v1364
        %v1605 = vmul.f32 %v1604, 0.6931472
        %v1606 = vlog2.pop %v1365
        %v1607 = vmul.f32 %v1606, 0.6931472
        %v1608 = vlog2.pop %v1366
        %v1609 = vmul.f32 %v1608, 0.6931472
        %v1610 = vlog2.pop %v1367
        %v1611 = vmul.f32 %v1610, 0.6931472
        %v1612 = vlog2.pop %v1368
        %v1613 = vmul.f32 %v1612, 0.6931472
        %v1614 = vlog2.pop %v1369
        %v1615 = vmul.f32 %v1614, 0.6931472
        %v1616 = vlog2.pop %v1370
        %v1617 = vmul.f32 %v1616, 0.6931472
        %v1618 = vlog2.pop %v1371
        %v1619 = vmul.f32 %v1618, 0.6931472
        %v1620 = vlog2.pop %v1372
        %v1621 = vmul.f32 %v1620, 0.6931472
        %v1622 = vlog2.pop %v1373
        %v1623 = vmul.f32 %v1622, 0.6931472
        %v1624 = vlog2.pop %v1374
        %v1625 = vmul.f32 %v1624, 0.6931472
        %v1626 = vlog2.pop %v1375
        %v1627 = vmul.f32 %v1626, 0.6931472
        %v1628 = vlog2.pop %v1376
        %v1629 = vmul.f32 %v1628, 0.6931472
        %v1630 = vlog2.pop %v1377
        %v1631 = vmul.f32 %v1630, 0.6931472
        %v1632 = vlog2.pop %v1378
        %v1633 = vmul.f32 %v1632, 0.6931472
        %v1634 = vlog2.pop %v1379
        %v1635 = vmul.f32 %v1634, 0.6931472
        %v1636 = vsub.f32 %v504, %v1381
        %v1637 = vsub.f32 %v505, %v1383
        %v1638 = vsub.f32 %v506, %v1385
        %v1639 = vsub.f32 %v507, %v1387
        %v1640 = vsub.f32 %v508, %v1389
        %v1641 = vsub.f32 %v509, %v1391
        %v1642 = vsub.f32 %v510, %v1393
        %v1643 = vsub.f32 %v511, %v1395
        %v1644 = vsub.f32 %v512, %v1397
        %v1645 = vsub.f32 %v513, %v1399
        %v1646 = vsub.f32 %v514, %v1401
        %v1647 = vsub.f32 %v515, %v1403
        %v1648 = vsub.f32 %v516, %v1405
        %v1649 = vsub.f32 %v517, %v1407
        %v1650 = vsub.f32 %v518, %v1409
        %v1651 = vsub.f32 %v519, %v1411
        %v1652 = vsub.f32 %v520, %v1413
        %v1653 = vsub.f32 %v521, %v1415
        %v1654 = vsub.f32 %v522, %v1417
        %v1655 = vsub.f32 %v523, %v1419
        %v1656 = vsub.f32 %v524, %v1421
        %v1657 = vsub.f32 %v525, %v1423
        %v1658 = vsub.f32 %v526, %v1425
        %v1659 = vsub.f32 %v527, %v1427
        %v1660 = vsub.f32 %v528, %v1429
        %v1661 = vsub.f32 %v529, %v1431
        %v1662 = vsub.f32 %v530, %v1433
        %v1663 = vsub.f32 %v531, %v1435
        %v1664 = vsub.f32 %v532, %v1437
        %v1665 = vsub.f32 %v533, %v1439
        %v1666 = vsub.f32 %v534, %v1441
        %v1667 = vsub.f32 %v535, %v1443
        %v1668 = vsub.f32 %v536, %v1445
        %v1669 = vsub.f32 %v537, %v1447
        %v1670 = vsub.f32 %v538, %v1449
        %v1671 = vsub.f32 %v539, %v1451
        %v1672 = vsub.f32 %v540, %v1453
        %v1673 = vsub.f32 %v541, %v1455
        %v1674 = vsub.f32 %v542, %v1457
        %v1675 = vsub.f32 %v543, %v1459
        %v1676 = vsub.f32 %v544, %v1461
        %v1677 = vsub.f32 %v545, %v1463
        %v1678 = vsub.f32 %v546, %v1465
        %v1679 = vsub.f32 %v547, %v1467
        %v1680 = vsub.f32 %v548, %v1469
        %v1681 = vsub.f32 %v549, %v1471
        %v1682 = vsub.f32 %v550, %v1473
        %v1683 = vsub.f32 %v551, %v1475
        %v1684 = vsub.f32 %v552, %v1477
        %v1685 = vsub.f32 %v553, %v1479
        %v1686 = vsub.f32 %v554, %v1481
        %v1687 = vsub.f32 %v555, %v1483
        %v1688 = vsub.f32 %v556, %v1485
        %v1689 = vsub.f32 %v557, %v1487
        %v1690 = vsub.f32 %v558, %v1489
        %v1691 = vsub.f32 %v559, %v1491
        %v1692 = vsub.f32 %v560, %v1493
        %v1693 = vsub.f32 %v561, %v1495
        %v1694 = vsub.f32 %v562, %v1497
        %v1695 = vsub.f32 %v563, %v1499
        %v1696 = vsub.f32 %v564, %v1501
        %v1697 = vsub.f32 %v565, %v1503
        %v1698 = vsub.f32 %v566, %v1505
        %v1699 = vsub.f32 %v567, %v1507
        %v1700 = vsub.f32 %v568, %v1509
        %v1701 = vsub.f32 %v569, %v1511
        %v1702 = vsub.f32 %v570, %v1513
        %v1703 = vsub.f32 %v571, %v1515
        %v1704 = vsub.f32 %v572, %v1517
        %v1705 = vsub.f32 %v573, %v1519
        %v1706 = vsub.f32 %v574, %v1521
        %v1707 = vsub.f32 %v575, %v1523
        %v1708 = vsub.f32 %v576, %v1525
        %v1709 = vsub.f32 %v577, %v1527
        %v1710 = vsub.f32 %v578, %v1529
        %v1711 = vsub.f32 %v579, %v1531
        %v1712 = vsub.f32 %v580, %v1533
        %v1713 = vsub.f32 %v581, %v1535
        %v1714 = vsub.f32 %v582, %v1537
        %v1715 = vsub.f32 %v583, %v1539
        %v1716 = vsub.f32 %v584, %v1541
        %v1717 = vsub.f32 %v585, %v1543
        %v1718 = vsub.f32 %v586, %v1545
        %v1719 = vsub.f32 %v587, %v1547
        %v1720 = vsub.f32 %v588, %v1549
        %v1721 = vsub.f32 %v589, %v1551
        %v1722 = vsub.f32 %v590, %v1553
        %v1723 = vsub.f32 %v591, %v1555
        %v1724 = vsub.f32 %v592, %v1557
        %v1725 = vsub.f32 %v593, %v1559
        %v1726 = vsub.f32 %v594, %v1561
        %v1727 = vsub.f32 %v595, %v1563
        %v1728 = vsub.f32 %v596, %v1565
        %v1729 = vsub.f32 %v597, %v1567
        %v1730 = vsub.f32 %v598, %v1569
        %v1731 = vsub.f32 %v599, %v1571
        %v1732 = vsub.f32 %v600, %v1573
        %v1733 = vsub.f32 %v601, %v1575
        %v1734 = vsub.f32 %v602, %v1577
        %v1735 = vsub.f32 %v603, %v1579
        %v1736 = vsub.f32 %v604, %v1581
        %v1737 = vsub.f32 %v605, %v1583
        %v1738 = vsub.f32 %v606, %v1585
        %v1739 = vsub.f32 %v607, %v1587
        %v1740 = vsub.f32 %v608, %v1589
        %v1741 = vsub.f32 %v609, %v1591
        %v1742 = vsub.f32 %v610, %v1593
        %v1743 = vsub.f32 %v611, %v1595
        %v1744 = vsub.f32 %v612, %v1597
        %v1745 = vsub.f32 %v613, %v1599
        %v1746 = vsub.f32 %v614, %v1601
        %v1747 = vsub.f32 %v615, %v1603
        %v1748 = vsub.f32 %v616, %v1605
        %v1749 = vsub.f32 %v617, %v1607
        %v1750 = vsub.f32 %v618, %v1609
        %v1751 = vsub.f32 %v619, %v1611
        %v1752 = vsub.f32 %v620, %v1613
        %v1753 = vsub.f32 %v621, %v1615
        %v1754 = vsub.f32 %v622, %v1617
        %v1755 = vsub.f32 %v623, %v1619
        %v1756 = vsub.f32 %v624, %v1621
        %v1757 = vsub.f32 %v625, %v1623
        %v1758 = vsub.f32 %v626, %v1625
        %v1759 = vsub.f32 %v627, %v1627
        %v1760 = vsub.f32 %v628, %v1629
        %v1761 = vsub.f32 %v629, %v1631
        %v1762 = vsub.f32 %v630, %v1633
        %v1763 = vsub.f32 %v631, %v1635
        %v1764 = vmax.f32 %v1636, -8.0
        %v1765 = vmax.f32 %v1637, -8.0
        %v1766 = vmax.f32 %v1638, -8.0
        %v1767 = vmax.f32 %v1639, -8.0
        %v1768 = vmax.f32 %v1640, -8.0
        %v1769 = vmax.f32 %v1641, -8.0
        %v1770 = vmax.f32 %v1642, -8.0
        %v1771 = vmax.f32 %v1643, -8.0
        %v1772 = vmax.f32 %v1644, -8.0
        %v1773 = vmax.f32 %v1645, -8.0
        %v1774 = vmax.f32 %v1646, -8.0
        %v1775 = vmax.f32 %v1647, -8.0
        %v1776 = vmax.f32 %v1648, -8.0
        %v1777 = vmax.f32 %v1649, -8.0
        %v1778 = vmax.f32 %v1650, -8.0
        %v1779 = vmax.f32 %v1651, -8.0
        %v1780 = vmax.f32 %v1652, -8.0
        %v1781 = vmax.f32 %v1653, -8.0
        %v1782 = vmax.f32 %v1654, -8.0
        %v1783 = vmax.f32 %v1655, -8.0
        %v1784 = vmax.f32 %v1656, -8.0
        %v1785 = vmax.f32 %v1657, -8.0
        %v1786 = vmax.f32 %v1658, -8.0
        %v1787 = vmax.f32 %v1659, -8.0
        %v1788 = vmax.f32 %v1660, -8.0
        %v1789 = vmax.f32 %v1661, -8.0
        %v1790 = vmax.f32 %v1662, -8.0
        %v1791 = vmax.f32 %v1663, -8.0
        %v1792 = vmax.f32 %v1664, -8.0
        %v1793 = vmax.f32 %v1665, -8.0
        %v1794 = vmax.f32 %v1666, -8.0
        %v1795 = vmax.f32 %v1667, -8.0
        %v1796 = vmax.f32 %v1668, -8.0
        %v1797 = vmax.f32 %v1669, -8.0
        %v1798 = vmax.f32 %v1670, -8.0
        %v1799 = vmax.f32 %v1671, -8.0
        %v1800 = vmax.f32 %v1672, -8.0
        %v1801 = vmax.f32 %v1673, -8.0
        %v1802 = vmax.f32 %v1674, -8.0
        %v1803 = vmax.f32 %v1675, -8.0
        %v1804 = vmax.f32 %v1676, -8.0
        %v1805 = vmax.f32 %v1677, -8.0
        %v1806 = vmax.f32 %v1678, -8.0
        %v1807 = vmax.f32 %v1679, -8.0
        %v1808 = vmax.f32 %v1680, -8.0
        %v1809 = vmax.f32 %v1681, -8.0
        %v1810 = vmax.f32 %v1682, -8.0
        %v1811 = vmax.f32 %v1683, -8.0
        %v1812 = vmax.f32 %v1684, -8.0
        %v1813 = vmax.f32 %v1685, -8.0
        %v1814 = vmax.f32 %v1686, -8.0
        %v1815 = vmax.f32 %v1687, -8.0
        %v1816 = vmax.f32 %v1688, -8.0
        %v1817 = vmax.f32 %v1689, -8.0
        %v1818 = vmax.f32 %v1690, -8.0
        %v1819 = vmax.f32 %v1691, -8.0
        %v1820 = vmax.f32 %v1692, -8.0
        %v1821 = vmax.f32 %v1693, -8.0
        %v1822 = vmax.f32 %v1694, -8.0
        %v1823 = vmax.f32 %v1695, -8.0
        %v1824 = vmax.f32 %v1696, -8.0
        %v1825 = vmax.f32 %v1697, -8.0
        %v1826 = vmax.f32 %v1698, -8.0
        %v1827 = vmax.f32 %v1699, -8.0
        %v1828 = vmax.f32 %v1700, -8.0
        %v1829 = vmax.f32 %v1701, -8.0
        %v1830 = vmax.f32 %v1702, -8.0
        %v1831 = vmax.f32 %v1703, -8.0
        %v1832 = vmax.f32 %v1704, -8.0
        %v1833 = vmax.f32 %v1705, -8.0
        %v1834 = vmax.f32 %v1706, -8.0
        %v1835 = vmax.f32 %v1707, -8.0
        %v1836 = vmax.f32 %v1708, -8.0
        %v1837 = vmax.f32 %v1709, -8.0
        %v1838 = vmax.f32 %v1710, -8.0
        %v1839 = vmax.f32 %v1711, -8.0
        %v1840 = vmax.f32 %v1712, -8.0
        %v1841 = vmax.f32 %v1713, -8.0
        %v1842 = vmax.f32 %v1714, -8.0
        %v1843 = vmax.f32 %v1715, -8.0
        %v1844 = vmax.f32 %v1716, -8.0
        %v1845 = vmax.f32 %v1717, -8.0
        %v1846 = vmax.f32 %v1718, -8.0
        %v1847 = vmax.f32 %v1719, -8.0
        %v1848 = vmax.f32 %v1720, -8.0
        %v1849 = vmax.f32 %v1721, -8.0
        %v1850 = vmax.f32 %v1722, -8.0
        %v1851 = vmax.f32 %v1723, -8.0
        %v1852 = vmax.f32 %v1724, -8.0
        %v1853 = vmax.f32 %v1725, -8.0
        %v1854 = vmax.f32 %v1726, -8.0
        %v1855 = vmax.f32 %v1727, -8.0
        %v1856 = vmax.f32 %v1728, -8.0
        %v1857 = vmax.f32 %v1729, -8.0
        %v1858 = vmax.f32 %v1730, -8.0
        %v1859 = vmax.f32 %v1731, -8.0
        %v1860 = vmax.f32 %v1732, -8.0
        %v1861 = vmax.f32 %v1733, -8.0
        %v1862 = vmax.f32 %v1734, -8.0
        %v1863 = vmax.f32 %v1735, -8.0
        %v1864 = vmax.f32 %v1736, -8.0
        %v1865 = vmax.f32 %v1737, -8.0
        %v1866 = vmax.f32 %v1738, -8.0
        %v1867 = vmax.f32 %v1739, -8.0
        %v1868 = vmax.f32 %v1740, -8.0
        %v1869 = vmax.f32 %v1741, -8.0
        %v1870 = vmax.f32 %v1742, -8.0
        %v1871 = vmax.f32 %v1743, -8.0
        %v1872 = vmax.f32 %v1744, -8.0
        %v1873 = vmax.f32 %v1745, -8.0
        %v1874 = vmax.f32 %v1746, -8.0
        %v1875 = vmax.f32 %v1747, -8.0
        %v1876 = vmax.f32 %v1748, -8.0
        %v1877 = vmax.f32 %v1749, -8.0
        %v1878 = vmax.f32 %v1750, -8.0
        %v1879 = vmax.f32 %v1751, -8.0
        %v1880 = vmax.f32 %v1752, -8.0
        %v1881 = vmax.f32 %v1753, -8.0
        %v1882 = vmax.f32 %v1754, -8.0
        %v1883 = vmax.f32 %v1755, -8.0
        %v1884 = vmax.f32 %v1756, -8.0
        %v1885 = vmax.f32 %v1757, -8.0
        %v1886 = vmax.f32 %v1758, -8.0
        %v1887 = vmax.f32 %v1759, -8.0
        %v1888 = vmax.f32 %v1760, -8.0
        %v1889 = vmax.f32 %v1761, -8.0
        %v1890 = vmax.f32 %v1762, -8.0
        %v1891 = vmax.f32 %v1763, -8.0
        %v1892 = vmin.f32 %v1764, 8.0
        %v1893 = vmin.f32 %v1765, 8.0
        %v1894 = vmin.f32 %v1766, 8.0
        %v1895 = vmin.f32 %v1767, 8.0
        %v1896 = vmin.f32 %v1768, 8.0
        %v1897 = vmin.f32 %v1769, 8.0
        %v1898 = vmin.f32 %v1770, 8.0
        %v1899 = vmin.f32 %v1771, 8.0
        %v1900 = vmin.f32 %v1772, 8.0
        %v1901 = vmin.f32 %v1773, 8.0
        %v1902 = vmin.f32 %v1774, 8.0
        %v1903 = vmin.f32 %v1775, 8.0
        %v1904 = vmin.f32 %v1776, 8.0
        %v1905 = vmin.f32 %v1777, 8.0
        %v1906 = vmin.f32 %v1778, 8.0
        %v1907 = vmin.f32 %v1779, 8.0
        %v1908 = vmin.f32 %v1780, 8.0
        %v1909 = vmin.f32 %v1781, 8.0
        %v1910 = vmin.f32 %v1782, 8.0
        %v1911 = vmin.f32 %v1783, 8.0
        %v1912 = vmin.f32 %v1784, 8.0
        %v1913 = vmin.f32 %v1785, 8.0
        %v1914 = vmin.f32 %v1786, 8.0
        %v1915 = vmin.f32 %v1787, 8.0
        %v1916 = vmin.f32 %v1788, 8.0
        %v1917 = vmin.f32 %v1789, 8.0
        %v1918 = vmin.f32 %v1790, 8.0
        %v1919 = vmin.f32 %v1791, 8.0
        %v1920 = vmin.f32 %v1792, 8.0
        %v1921 = vmin.f32 %v1793, 8.0
        %v1922 = vmin.f32 %v1794, 8.0
        %v1923 = vmin.f32 %v1795, 8.0
        %v1924 = vmin.f32 %v1796, 8.0
        %v1925 = vmin.f32 %v1797, 8.0
        %v1926 = vmin.f32 %v1798, 8.0
        %v1927 = vmin.f32 %v1799, 8.0
        %v1928 = vmin.f32 %v1800, 8.0
        %v1929 = vmin.f32 %v1801, 8.0
        %v1930 = vmin.f32 %v1802, 8.0
        %v1931 = vmin.f32 %v1803, 8.0
        %v1932 = vmin.f32 %v1804, 8.0
        %v1933 = vmin.f32 %v1805, 8.0
        %v1934 = vmin.f32 %v1806, 8.0
        %v1935 = vmin.f32 %v1807, 8.0
        %v1936 = vmin.f32 %v1808, 8.0
        %v1937 = vmin.f32 %v1809, 8.0
        %v1938 = vmin.f32 %v1810, 8.0
        %v1939 = vmin.f32 %v1811, 8.0
        %v1940 = vmin.f32 %v1812, 8.0
        %v1941 = vmin.f32 %v1813, 8.0
        %v1942 = vmin.f32 %v1814, 8.0
        %v1943 = vmin.f32 %v1815, 8.0
        %v1944 = vmin.f32 %v1816, 8.0
        %v1945 = vmin.f32 %v1817, 8.0
        %v1946 = vmin.f32 %v1818, 8.0
        %v1947 = vmin.f32 %v1819, 8.0
        %v1948 = vmin.f32 %v1820, 8.0
        %v1949 = vmin.f32 %v1821, 8.0
        %v1950 = vmin.f32 %v1822, 8.0
        %v1951 = vmin.f32 %v1823, 8.0
        %v1952 = vmin.f32 %v1824, 8.0
        %v1953 = vmin.f32 %v1825, 8.0
        %v1954 = vmin.f32 %v1826, 8.0
        %v1955 = vmin.f32 %v1827, 8.0
        %v1956 = vmin.f32 %v1828, 8.0
        %v1957 = vmin.f32 %v1829, 8.0
        %v1958 = vmin.f32 %v1830, 8.0
        %v1959 = vmin.f32 %v1831, 8.0
        %v1960 = vmin.f32 %v1832, 8.0
        %v1961 = vmin.f32 %v1833, 8.0
        %v1962 = vmin.f32 %v1834, 8.0
        %v1963 = vmin.f32 %v1835, 8.0
        %v1964 = vmin.f32 %v1836, 8.0
        %v1965 = vmin.f32 %v1837, 8.0
        %v1966 = vmin.f32 %v1838, 8.0
        %v1967 = vmin.f32 %v1839, 8.0
        %v1968 = vmin.f32 %v1840, 8.0
        %v1969 = vmin.f32 %v1841, 8.0
        %v1970 = vmin.f32 %v1842, 8.0
        %v1971 = vmin.f32 %v1843, 8.0
        %v1972 = vmin.f32 %v1844, 8.0
        %v1973 = vmin.f32 %v1845, 8.0
        %v1974 = vmin.f32 %v1846, 8.0
        %v1975 = vmin.f32 %v1847, 8.0
        %v1976 = vmin.f32 %v1848, 8.0
        %v1977 = vmin.f32 %v1849, 8.0
        %v1978 = vmin.f32 %v1850, 8.0
        %v1979 = vmin.f32 %v1851, 8.0
        %v1980 = vmin.f32 %v1852, 8.0
        %v1981 = vmin.f32 %v1853, 8.0
        %v1982 = vmin.f32 %v1854, 8.0
        %v1983 = vmin.f32 %v1855, 8.0
        %v1984 = vmin.f32 %v1856, 8.0
        %v1985 = vmin.f32 %v1857, 8.0
        %v1986 = vmin.f32 %v1858, 8.0
        %v1987 = vmin.f32 %v1859, 8.0
        %v1988 = vmin.f32 %v1860, 8.0
        %v1989 = vmin.f32 %v1861, 8.0
        %v1990 = vmin.f32 %v1862, 8.0
        %v1991 = vmin.f32 %v1863, 8.0
        %v1992 = vmin.f32 %v1864, 8.0
        %v1993 = vmin.f32 %v1865, 8.0
        %v1994 = vmin.f32 %v1866, 8.0
        %v1995 = vmin.f32 %v1867, 8.0
        %v1996 = vmin.f32 %v1868, 8.0
        %v1997 = vmin.f32 %v1869, 8.0
        %v1998 = vmin.f32 %v1870, 8.0
        %v1999 = vmin.f32 %v1871, 8.0
        %v2000 = vmin.f32 %v1872, 8.0
        %v2001 = vmin.f32 %v1873, 8.0
        %v2002 = vmin.f32 %v1874, 8.0
        %v2003 = vmin.f32 %v1875, 8.0
        %v2004 = vmin.f32 %v1876, 8.0
        %v2005 = vmin.f32 %v1877, 8.0
        %v2006 = vmin.f32 %v1878, 8.0
        %v2007 = vmin.f32 %v1879, 8.0
        %v2008 = vmin.f32 %v1880, 8.0
        %v2009 = vmin.f32 %v1881, 8.0
        %v2010 = vmin.f32 %v1882, 8.0
        %v2011 = vmin.f32 %v1883, 8.0
        %v2012 = vmin.f32 %v1884, 8.0
        %v2013 = vmin.f32 %v1885, 8.0
        %v2014 = vmin.f32 %v1886, 8.0
        %v2015 = vmin.f32 %v1887, 8.0
        %v2016 = vmin.f32 %v1888, 8.0
        %v2017 = vmin.f32 %v1889, 8.0
        %v2018 = vmin.f32 %v1890, 8.0
        %v2019 = vmin.f32 %v1891, 8.0
        %v2020 = vrcp.pop %v633
        %v2021 = vrcp.pop %v635
        %v2022 = vrcp.pop %v637
        %v2023 = vrcp.pop %v639
        %v2024 = vrcp.pop %v641
        %v2025 = vrcp.pop %v643
        %v2026 = vrcp.pop %v645
        %v2027 = vrcp.pop %v647
        %v2028 = vrcp.pop %v649
        %v2029 = vrcp.pop %v651
        %v2030 = vrcp.pop %v653
        %v2031 = vrcp.pop %v655
        %v2032 = vrcp.pop %v657
        %v2033 = vrcp.pop %v659
        %v2034 = vrcp.pop %v661
        %v2035 = vrcp.pop %v663
        %v2036 = vrcp.pop %v665
        %v2037 = vrcp.pop %v667
        %v2038 = vrcp.pop %v669
        %v2039 = vrcp.pop %v671
        %v2040 = vrcp.pop %v673
        %v2041 = vrcp.pop %v675
        %v2042 = vrcp.pop %v677
        %v2043 = vrcp.pop %v679
        %v2044 = vrcp.pop %v681
        %v2045 = vrcp.pop %v683
        %v2046 = vrcp.pop %v685
        %v2047 = vrcp.pop %v687
        %v2048 = vrcp.pop %v689
        %v2049 = vrcp.pop %v691
        %v2050 = vrcp.pop %v693
        %v2051 = vrcp.pop %v695
        %v2052 = vrcp.pop %v697
        %v2053 = vrcp.pop %v699
        %v2054 = vrcp.pop %v701
        %v2055 = vrcp.pop %v703
        %v2056 = vrcp.pop %v705
        %v2057 = vrcp.pop %v707
        %v2058 = vrcp.pop %v709
        %v2059 = vrcp.pop %v711
        %v2060 = vrcp.pop %v713
        %v2061 = vrcp.pop %v715
        %v2062 = vrcp.pop %v717
        %v2063 = vrcp.pop %v719
        %v2064 = vrcp.pop %v721
        %v2065 = vrcp.pop %v723
        %v2066 = vrcp.pop %v725
        %v2067 = vrcp.pop %v727
        %v2068 = vrcp.pop %v729
        %v2069 = vrcp.pop %v731
        %v2070 = vrcp.pop %v733
        %v2071 = vrcp.pop %v735
        %v2072 = vrcp.pop %v737
        %v2073 = vrcp.pop %v739
        %v2074 = vrcp.pop %v741
        %v2075 = vrcp.pop %v743
        %v2076 = vrcp.pop %v745
        %v2077 = vrcp.pop %v747
        %v2078 = vrcp.pop %v749
        %v2079 = vrcp.pop %v751
        %v2080 = vrcp.pop %v753
        %v2081 = vrcp.pop %v755
        %v2082 = vrcp.pop %v757
        %v2083 = vrcp.pop %v759
        %v2084 = vrcp.pop %v761
        %v2085 = vrcp.pop %v763
        %v2086 = vrcp.pop %v765
        %v2087 = vrcp.pop %v767
        %v2088 = vrcp.pop %v769
        %v2089 = vrcp.pop %v771
        %v2090 = vrcp.pop %v773
        %v2091 = vrcp.pop %v775
        %v2092 = vrcp.pop %v777
        %v2093 = vrcp.pop %v779
        %v2094 = vrcp.pop %v781
        %v2095 = vrcp.pop %v783
        %v2096 = vrcp.pop %v785
        %v2097 = vrcp.pop %v787
        %v2098 = vrcp.pop %v789
        %v2099 = vrcp.pop %v791
        %v2100 = vrcp.pop %v793
        %v2101 = vrcp.pop %v795
        %v2102 = vrcp.pop %v797
        %v2103 = vrcp.pop %v799
        %v2104 = vrcp.pop %v801
        %v2105 = vrcp.pop %v803
        %v2106 = vrcp.pop %v805
        %v2107 = vrcp.pop %v807
        %v2108 = vrcp.pop %v809
        %v2109 = vrcp.pop %v811
        %v2110 = vrcp.pop %v813
        %v2111 = vrcp.pop %v815
        %v2112 = vrcp.pop %v817
        %v2113 = vrcp.pop %v819
        %v2114 = vrcp.pop %v821
        %v2115 = vrcp.pop %v823
        %v2116 = vrcp.pop %v825
        %v2117 = vrcp.pop %v827
        %v2118 = vrcp.pop %v829
        %v2119 = vrcp.pop %v831
        %v2120 = vrcp.pop %v833
        %v2121 = vrcp.pop %v835
        %v2122 = vrcp.pop %v837
        %v2123 = vrcp.pop %v839
        %v2124 = vrcp.pop %v841
        %v2125 = vrcp.pop %v843
        %v2126 = vrcp.pop %v845
        %v2127 = vrcp.pop %v847
        %v2128 = vrcp.pop %v849
        %v2129 = vrcp.pop %v851
        %v2130 = vrcp.pop %v853
        %v2131 = vrcp.pop %v855
        %v2132 = vrcp.pop %v857
        %v2133 = vrcp.pop %v859
        %v2134 = vrcp.pop %v861
        %v2135 = vrcp.pop %v863
        %v2136 = vrcp.pop %v865
        %v2137 = vrcp.pop %v867
        %v2138 = vrcp.pop %v869
        %v2139 = vrcp.pop %v871
        %v2140 = vrcp.pop %v873
        %v2141 = vrcp.pop %v875
        %v2142 = vrcp.pop %v877
        %v2143 = vrcp.pop %v879
        %v2144 = vrcp.pop %v881
        %v2145 = vrcp.pop %v883
        %v2146 = vrcp.pop %v885
        %v2147 = vrcp.pop %v887
        %v2148 = vmul.f32 %v1252, %v2020
        %v2149 = vmul.f32 %v1253, %v2021
        %v2150 = vmul.f32 %v1254, %v2022
        %v2151 = vmul.f32 %v1255, %v2023
        %v2152 = vmul.f32 %v1256, %v2024
        %v2153 = vmul.f32 %v1257, %v2025
        %v2154 = vmul.f32 %v1258, %v2026
        %v2155 = vmul.f32 %v1259, %v2027
        %v2156 = vmul.f32 %v1260, %v2028
        %v2157 = vmul.f32 %v1261, %v2029
        %v2158 = vmul.f32 %v1262, %v2030
        %v2159 = vmul.f32 %v1263, %v2031
        %v2160 = vmul.f32 %v1264, %v2032
        %v2161 = vmul.f32 %v1265, %v2033
        %v2162 = vmul.f32 %v1266, %v2034
        %v2163 = vmul.f32 %v1267, %v2035
        %v2164 = vmul.f32 %v1268, %v2036
        %v2165 = vmul.f32 %v1269, %v2037
        %v2166 = vmul.f32 %v1270, %v2038
        %v2167 = vmul.f32 %v1271, %v2039
        %v2168 = vmul.f32 %v1272, %v2040
        %v2169 = vmul.f32 %v1273, %v2041
        %v2170 = vmul.f32 %v1274, %v2042
        %v2171 = vmul.f32 %v1275, %v2043
        %v2172 = vmul.f32 %v1276, %v2044
        %v2173 = vmul.f32 %v1277, %v2045
        %v2174 = vmul.f32 %v1278, %v2046
        %v2175 = vmul.f32 %v1279, %v2047
        %v2176 = vmul.f32 %v1280, %v2048
        %v2177 = vmul.f32 %v1281, %v2049
        %v2178 = vmul.f32 %v1282, %v2050
        %v2179 = vmul.f32 %v1283, %v2051
        %v2180 = vmul.f32 %v1284, %v2052
        %v2181 = vmul.f32 %v1285, %v2053
        %v2182 = vmul.f32 %v1286, %v2054
        %v2183 = vmul.f32 %v1287, %v2055
        %v2184 = vmul.f32 %v1288, %v2056
        %v2185 = vmul.f32 %v1289, %v2057
        %v2186 = vmul.f32 %v1290, %v2058
        %v2187 = vmul.f32 %v1291, %v2059
        %v2188 = vmul.f32 %v1292, %v2060
        %v2189 = vmul.f32 %v1293, %v2061
        %v2190 = vmul.f32 %v1294, %v2062
        %v2191 = vmul.f32 %v1295, %v2063
        %v2192 = vmul.f32 %v1296, %v2064
        %v2193 = vmul.f32 %v1297, %v2065
        %v2194 = vmul.f32 %v1298, %v2066
        %v2195 = vmul.f32 %v1299, %v2067
        %v2196 = vmul.f32 %v1300, %v2068
        %v2197 = vmul.f32 %v1301, %v2069
        %v2198 = vmul.f32 %v1302, %v2070
        %v2199 = vmul.f32 %v1303, %v2071
        %v2200 = vmul.f32 %v1304, %v2072
        %v2201 = vmul.f32 %v1305, %v2073
        %v2202 = vmul.f32 %v1306, %v2074
        %v2203 = vmul.f32 %v1307, %v2075
        %v2204 = vmul.f32 %v1308, %v2076
        %v2205 = vmul.f32 %v1309, %v2077
        %v2206 = vmul.f32 %v1310, %v2078
        %v2207 = vmul.f32 %v1311, %v2079
        %v2208 = vmul.f32 %v1312, %v2080
        %v2209 = vmul.f32 %v1313, %v2081
        %v2210 = vmul.f32 %v1314, %v2082
        %v2211 = vmul.f32 %v1315, %v2083
        %v2212 = vmul.f32 %v1316, %v2084
        %v2213 = vmul.f32 %v1317, %v2085
        %v2214 = vmul.f32 %v1318, %v2086
        %v2215 = vmul.f32 %v1319, %v2087
        %v2216 = vmul.f32 %v1320, %v2088
        %v2217 = vmul.f32 %v1321, %v2089
        %v2218 = vmul.f32 %v1322, %v2090
        %v2219 = vmul.f32 %v1323, %v2091
        %v2220 = vmul.f32 %v1324, %v2092
        %v2221 = vmul.f32 %v1325, %v2093
        %v2222 = vmul.f32 %v1326, %v2094
        %v2223 = vmul.f32 %v1327, %v2095
        %v2224 = vmul.f32 %v1328, %v2096
        %v2225 = vmul.f32 %v1329, %v2097
        %v2226 = vmul.f32 %v1330, %v2098
        %v2227 = vmul.f32 %v1331, %v2099
        %v2228 = vmul.f32 %v1332, %v2100
        %v2229 = vmul.f32 %v1333, %v2101
        %v2230 = vmul.f32 %v1334, %v2102
        %v2231 = vmul.f32 %v1335, %v2103
        %v2232 = vmul.f32 %v1336, %v2104
        %v2233 = vmul.f32 %v1337, %v2105
        %v2234 = vmul.f32 %v1338, %v2106
        %v2235 = vmul.f32 %v1339, %v2107
        %v2236 = vmul.f32 %v1340, %v2108
        %v2237 = vmul.f32 %v1341, %v2109
        %v2238 = vmul.f32 %v1342, %v2110
        %v2239 = vmul.f32 %v1343, %v2111
        %v2240 = vmul.f32 %v1344, %v2112
        %v2241 = vmul.f32 %v1345, %v2113
        %v2242 = vmul.f32 %v1346, %v2114
        %v2243 = vmul.f32 %v1347, %v2115
        %v2244 = vmul.f32 %v1348, %v2116
        %v2245 = vmul.f32 %v1349, %v2117
        %v2246 = vmul.f32 %v1350, %v2118
        %v2247 = vmul.f32 %v1351, %v2119
        %v2248 = vmul.f32 %v1352, %v2120
        %v2249 = vmul.f32 %v1353, %v2121
        %v2250 = vmul.f32 %v1354, %v2122
        %v2251 = vmul.f32 %v1355, %v2123
        %v2252 = vmul.f32 %v1356, %v2124
        %v2253 = vmul.f32 %v1357, %v2125
        %v2254 = vmul.f32 %v1358, %v2126
        %v2255 = vmul.f32 %v1359, %v2127
        %v2256 = vmul.f32 %v1360, %v2128
        %v2257 = vmul.f32 %v1361, %v2129
        %v2258 = vmul.f32 %v1362, %v2130
        %v2259 = vmul.f32 %v1363, %v2131
        %v2260 = vmul.f32 %v1364, %v2132
        %v2261 = vmul.f32 %v1365, %v2133
        %v2262 = vmul.f32 %v1366, %v2134
        %v2263 = vmul.f32 %v1367, %v2135
        %v2264 = vmul.f32 %v1368, %v2136
        %v2265 = vmul.f32 %v1369, %v2137
        %v2266 = vmul.f32 %v1370, %v2138
        %v2267 = vmul.f32 %v1371, %v2139
        %v2268 = vmul.f32 %v1372, %v2140
        %v2269 = vmul.f32 %v1373, %v2141
        %v2270 = vmul.f32 %v1374, %v2142
        %v2271 = vmul.f32 %v1375, %v2143
        %v2272 = vmul.f32 %v1376, %v2144
        %v2273 = vmul.f32 %v1377, %v2145
        %v2274 = vmul.f32 %v1378, %v2146
        %v2275 = vmul.f32 %v1379, %v2147
        %vm2276 = vcmp.gt.f32.partialorder %v1636, 8.0
        %vm2277 = vcmp.gt.f32.partialorder %v1637, 8.0
        %vm2278 = vcmp.gt.f32.partialorder %v1638, 8.0
        %vm2279 = vcmp.gt.f32.partialorder %v1639, 8.0
        %vm2280 = vcmp.gt.f32.partialorder %v1640, 8.0
        %vm2281 = vcmp.gt.f32.partialorder %v1641, 8.0
        %vm2282 = vcmp.gt.f32.partialorder %v1642, 8.0
        %vm2283 = vcmp.gt.f32.partialorder %v1643, 8.0
        %vm2284 = vcmp.gt.f32.partialorder %v1644, 8.0
        %vm2285 = vcmp.gt.f32.partialorder %v1645, 8.0
        %vm2286 = vcmp.gt.f32.partialorder %v1646, 8.0
        %vm2287 = vcmp.gt.f32.partialorder %v1647, 8.0
        %vm2288 = vcmp.gt.f32.partialorder %v1648, 8.0
        %vm2289 = vcmp.gt.f32.partialorder %v1649, 8.0
        %vm2290 = vcmp.gt.f32.partialorder %v1650, 8.0
        %vm2291 = vcmp.gt.f32.partialorder %v1651, 8.0
        %vm2292 = vcmp.gt.f32.partialorder %v1652, 8.0
        %vm2293 = vcmp.gt.f32.partialorder %v1653, 8.0
        %vm2294 = vcmp.gt.f32.partialorder %v1654, 8.0
        %vm2295 = vcmp.gt.f32.partialorder %v1655, 8.0
        %vm2296 = vcmp.gt.f32.partialorder %v1656, 8.0
        %vm2297 = vcmp.gt.f32.partialorder %v1657, 8.0
        %vm2298 = vcmp.gt.f32.partialorder %v1658, 8.0
        %vm2299 = vcmp.gt.f32.partialorder %v1659, 8.0
        %vm2300 = vcmp.gt.f32.partialorder %v1660, 8.0
        %vm2301 = vcmp.gt.f32.partialorder %v1661, 8.0
        %vm2302 = vcmp.gt.f32.partialorder %v1662, 8.0
        %vm2303 = vcmp.gt.f32.partialorder %v1663, 8.0
        %vm2304 = vcmp.gt.f32.partialorder %v1664, 8.0
        %vm2305 = vcmp.gt.f32.partialorder %v1665, 8.0
        %vm2306 = vcmp.gt.f32.partialorder %v1666, 8.0
        %vm2307 = vcmp.gt.f32.partialorder %v1667, 8.0
        %vm2308 = vcmp.gt.f32.partialorder %v1668, 8.0
        %vm2309 = vcmp.gt.f32.partialorder %v1669, 8.0
        %vm2310 = vcmp.gt.f32.partialorder %v1670, 8.0
        %vm2311 = vcmp.gt.f32.partialorder %v1671, 8.0
        %vm2312 = vcmp.gt.f32.partialorder %v1672, 8.0
        %vm2313 = vcmp.gt.f32.partialorder %v1673, 8.0
        %vm2314 = vcmp.gt.f32.partialorder %v1674, 8.0
        %vm2315 = vcmp.gt.f32.partialorder %v1675, 8.0
        %vm2316 = vcmp.gt.f32.partialorder %v1676, 8.0
        %vm2317 = vcmp.gt.f32.partialorder %v1677, 8.0
        %vm2318 = vcmp.gt.f32.partialorder %v1678, 8.0
        %vm2319 = vcmp.gt.f32.partialorder %v1679, 8.0
        %vm2320 = vcmp.gt.f32.partialorder %v1680, 8.0
        %vm2321 = vcmp.gt.f32.partialorder %v1681, 8.0
        %vm2322 = vcmp.gt.f32.partialorder %v1682, 8.0
        %vm2323 = vcmp.gt.f32.partialorder %v1683, 8.0
        %vm2324 = vcmp.gt.f32.partialorder %v1684, 8.0
        %vm2325 = vcmp.gt.f32.partialorder %v1685, 8.0
        %vm2326 = vcmp.gt.f32.partialorder %v1686, 8.0
        %vm2327 = vcmp.gt.f32.partialorder %v1687, 8.0
        %vm2328 = vcmp.gt.f32.partialorder %v1688, 8.0
        %vm2329 = vcmp.gt.f32.partialorder %v1689, 8.0
        %vm2330 = vcmp.gt.f32.partialorder %v1690, 8.0
        %vm2331 = vcmp.gt.f32.partialorder %v1691, 8.0
        %vm2332 = vcmp.gt.f32.partialorder %v1692, 8.0
        %vm2333 = vcmp.gt.f32.partialorder %v1693, 8.0
        %vm2334 = vcmp.gt.f32.partialorder %v1694, 8.0
        %vm2335 = vcmp.gt.f32.partialorder %v1695, 8.0
        %vm2336 = vcmp.gt.f32.partialorder %v1696, 8.0
        %vm2337 = vcmp.gt.f32.partialorder %v1697, 8.0
        %vm2338 = vcmp.gt.f32.partialorder %v1698, 8.0
        %vm2339 = vcmp.gt.f32.partialorder %v1699, 8.0
        %vm2340 = vcmp.gt.f32.partialorder %v1700, 8.0
        %vm2341 = vcmp.gt.f32.partialorder %v1701, 8.0
        %vm2342 = vcmp.gt.f32.partialorder %v1702, 8.0
        %vm2343 = vcmp.gt.f32.partialorder %v1703, 8.0
        %vm2344 = vcmp.gt.f32.partialorder %v1704, 8.0
        %vm2345 = vcmp.gt.f32.partialorder %v1705, 8.0
        %vm2346 = vcmp.gt.f32.partialorder %v1706, 8.0
        %vm2347 = vcmp.gt.f32.partialorder %v1707, 8.0
        %vm2348 = vcmp.gt.f32.partialorder %v1708, 8.0
        %vm2349 = vcmp.gt.f32.partialorder %v1709, 8.0
        %vm2350 = vcmp.gt.f32.partialorder %v1710, 8.0
        %vm2351 = vcmp.gt.f32.partialorder %v1711, 8.0
        %vm2352 = vcmp.gt.f32.partialorder %v1712, 8.0
        %vm2353 = vcmp.gt.f32.partialorder %v1713, 8.0
        %vm2354 = vcmp.gt.f32.partialorder %v1714, 8.0
        %vm2355 = vcmp.gt.f32.partialorder %v1715, 8.0
        %vm2356 = vcmp.gt.f32.partialorder %v1716, 8.0
        %vm2357 = vcmp.gt.f32.partialorder %v1717, 8.0
        %vm2358 = vcmp.gt.f32.partialorder %v1718, 8.0
        %vm2359 = vcmp.gt.f32.partialorder %v1719, 8.0
        %vm2360 = vcmp.gt.f32.partialorder %v1720, 8.0
        %vm2361 = vcmp.gt.f32.partialorder %v1721, 8.0
        %vm2362 = vcmp.gt.f32.partialorder %v1722, 8.0
        %vm2363 = vcmp.gt.f32.partialorder %v1723, 8.0
        %vm2364 = vcmp.gt.f32.partialorder %v1724, 8.0
        %vm2365 = vcmp.gt.f32.partialorder %v1725, 8.0
        %vm2366 = vcmp.gt.f32.partialorder %v1726, 8.0
        %vm2367 = vcmp.gt.f32.partialorder %v1727, 8.0
        %vm2368 = vcmp.gt.f32.partialorder %v1728, 8.0
        %vm2369 = vcmp.gt.f32.partialorder %v1729, 8.0
        %vm2370 = vcmp.gt.f32.partialorder %v1730, 8.0
        %vm2371 = vcmp.gt.f32.partialorder %v1731, 8.0
        %vm2372 = vcmp.gt.f32.partialorder %v1732, 8.0
        %vm2373 = vcmp.gt.f32.partialorder %v1733, 8.0
        %vm2374 = vcmp.gt.f32.partialorder %v1734, 8.0
        %vm2375 = vcmp.gt.f32.partialorder %v1735, 8.0
        %vm2376 = vcmp.gt.f32.partialorder %v1736, 8.0
        %vm2377 = vcmp.gt.f32.partialorder %v1737, 8.0
        %vm2378 = vcmp.gt.f32.partialorder %v1738, 8.0
        %vm2379 = vcmp.gt.f32.partialorder %v1739, 8.0
        %vm2380 = vcmp.gt.f32.partialorder %v1740, 8.0
        %vm2381 = vcmp.gt.f32.partialorder %v1741, 8.0
        %vm2382 = vcmp.gt.f32.partialorder %v1742, 8.0
        %vm2383 = vcmp.gt.f32.partialorder %v1743, 8.0
        %vm2384 = vcmp.gt.f32.partialorder %v1744, 8.0
        %vm2385 = vcmp.gt.f32.partialorder %v1745, 8.0
        %vm2386 = vcmp.gt.f32.partialorder %v1746, 8.0
        %vm2387 = vcmp.gt.f32.partialorder %v1747, 8.0
        %vm2388 = vcmp.gt.f32.partialorder %v1748, 8.0
        %vm2389 = vcmp.gt.f32.partialorder %v1749, 8.0
        %vm2390 = vcmp.gt.f32.partialorder %v1750, 8.0
        %vm2391 = vcmp.gt.f32.partialorder %v1751, 8.0
        %vm2392 = vcmp.gt.f32.partialorder %v1752, 8.0
        %vm2393 = vcmp.gt.f32.partialorder %v1753, 8.0
        %vm2394 = vcmp.gt.f32.partialorder %v1754, 8.0
        %vm2395 = vcmp.gt.f32.partialorder %v1755, 8.0
        %vm2396 = vcmp.gt.f32.partialorder %v1756, 8.0
        %vm2397 = vcmp.gt.f32.partialorder %v1757, 8.0
        %vm2398 = vcmp.gt.f32.partialorder %v1758, 8.0
        %vm2399 = vcmp.gt.f32.partialorder %v1759, 8.0
        %vm2400 = vcmp.gt.f32.partialorder %v1760, 8.0
        %vm2401 = vcmp.gt.f32.partialorder %v1761, 8.0
        %vm2402 = vcmp.gt.f32.partialorder %v1762, 8.0
        %vm2403 = vcmp.gt.f32.partialorder %v1763, 8.0
        %v2404 = vsel %vm2276, 0.00033546262, %v2148
        %v2405 = vsel %vm2277, 0.00033546262, %v2149
        %v2406 = vsel %vm2278, 0.00033546262, %v2150
        %v2407 = vsel %vm2279, 0.00033546262, %v2151
        %v2408 = vsel %vm2280, 0.00033546262, %v2152
        %v2409 = vsel %vm2281, 0.00033546262, %v2153
        %v2410 = vsel %vm2282, 0.00033546262, %v2154
        %v2411 = vsel %vm2283, 0.00033546262, %v2155
        %v2412 = vsel %vm2284, 0.00033546262, %v2156
        %v2413 = vsel %vm2285, 0.00033546262, %v2157
        %v2414 = vsel %vm2286, 0.00033546262, %v2158
        %v2415 = vsel %vm2287, 0.00033546262, %v2159
        %v2416 = vsel %vm2288, 0.00033546262, %v2160
        %v2417 = vsel %vm2289, 0.00033546262, %v2161
        %v2418 = vsel %vm2290, 0.00033546262, %v2162
        %v2419 = vsel %vm2291, 0.00033546262, %v2163
        %v2420 = vsel %vm2292, 0.00033546262, %v2164
        %v2421 = vsel %vm2293, 0.00033546262, %v2165
        %v2422 = vsel %vm2294, 0.00033546262, %v2166
        %v2423 = vsel %vm2295, 0.00033546262, %v2167
        %v2424 = vsel %vm2296, 0.00033546262, %v2168
        %v2425 = vsel %vm2297, 0.00033546262, %v2169
        %v2426 = vsel %vm2298, 0.00033546262, %v2170
        %v2427 = vsel %vm2299, 0.00033546262, %v2171
        %v2428 = vsel %vm2300, 0.00033546262, %v2172
        %v2429 = vsel %vm2301, 0.00033546262, %v2173
        %v2430 = vsel %vm2302, 0.00033546262, %v2174
        %v2431 = vsel %vm2303, 0.00033546262, %v2175
        %v2432 = vsel %vm2304, 0.00033546262, %v2176
        %v2433 = vsel %vm2305, 0.00033546262, %v2177
        %v2434 = vsel %vm2306, 0.00033546262, %v2178
        %v2435 = vsel %vm2307, 0.00033546262, %v2179
        %v2436 = vsel %vm2308, 0.00033546262, %v2180
        %v2437 = vsel %vm2309, 0.00033546262, %v2181
        %v2438 = vsel %vm2310, 0.00033546262, %v2182
        %v2439 = vsel %vm2311, 0.00033546262, %v2183
        %v2440 = vsel %vm2312, 0.00033546262, %v2184
        %v2441 = vsel %vm2313, 0.00033546262, %v2185
        %v2442 = vsel %vm2314, 0.00033546262, %v2186
        %v2443 = vsel %vm2315, 0.00033546262, %v2187
        %v2444 = vsel %vm2316, 0.00033546262, %v2188
        %v2445 = vsel %vm2317, 0.00033546262, %v2189
        %v2446 = vsel %vm2318, 0.00033546262, %v2190
        %v2447 = vsel %vm2319, 0.00033546262, %v2191
        %v2448 = vsel %vm2320, 0.00033546262, %v2192
        %v2449 = vsel %vm2321, 0.00033546262, %v2193
        %v2450 = vsel %vm2322, 0.00033546262, %v2194
        %v2451 = vsel %vm2323, 0.00033546262, %v2195
        %v2452 = vsel %vm2324, 0.00033546262, %v2196
        %v2453 = vsel %vm2325, 0.00033546262, %v2197
        %v2454 = vsel %vm2326, 0.00033546262, %v2198
        %v2455 = vsel %vm2327, 0.00033546262, %v2199
        %v2456 = vsel %vm2328, 0.00033546262, %v2200
        %v2457 = vsel %vm2329, 0.00033546262, %v2201
        %v2458 = vsel %vm2330, 0.00033546262, %v2202
        %v2459 = vsel %vm2331, 0.00033546262, %v2203
        %v2460 = vsel %vm2332, 0.00033546262, %v2204
        %v2461 = vsel %vm2333, 0.00033546262, %v2205
        %v2462 = vsel %vm2334, 0.00033546262, %v2206
        %v2463 = vsel %vm2335, 0.00033546262, %v2207
        %v2464 = vsel %vm2336, 0.00033546262, %v2208
        %v2465 = vsel %vm2337, 0.00033546262, %v2209
        %v2466 = vsel %vm2338, 0.00033546262, %v2210
        %v2467 = vsel %vm2339, 0.00033546262, %v2211
        %v2468 = vsel %vm2340, 0.00033546262, %v2212
        %v2469 = vsel %vm2341, 0.00033546262, %v2213
        %v2470 = vsel %vm2342, 0.00033546262, %v2214
        %v2471 = vsel %vm2343, 0.00033546262, %v2215
        %v2472 = vsel %vm2344, 0.00033546262, %v2216
        %v2473 = vsel %vm2345, 0.00033546262, %v2217
        %v2474 = vsel %vm2346, 0.00033546262, %v2218
        %v2475 = vsel %vm2347, 0.00033546262, %v2219
        %v2476 = vsel %vm2348, 0.00033546262, %v2220
        %v2477 = vsel %vm2349, 0.00033546262, %v2221
        %v2478 = vsel %vm2350, 0.00033546262, %v2222
        %v2479 = vsel %vm2351, 0.00033546262, %v2223
        %v2480 = vsel %vm2352, 0.00033546262, %v2224
        %v2481 = vsel %vm2353, 0.00033546262, %v2225
        %v2482 = vsel %vm2354, 0.00033546262, %v2226
        %v2483 = vsel %vm2355, 0.00033546262, %v2227
        %v2484 = vsel %vm2356, 0.00033546262, %v2228
        %v2485 = vsel %vm2357, 0.00033546262, %v2229
        %v2486 = vsel %vm2358, 0.00033546262, %v2230
        %v2487 = vsel %vm2359, 0.00033546262, %v2231
        %v2488 = vsel %vm2360, 0.00033546262, %v2232
        %v2489 = vsel %vm2361, 0.00033546262, %v2233
        %v2490 = vsel %vm2362, 0.00033546262, %v2234
        %v2491 = vsel %vm2363, 0.00033546262, %v2235
        %v2492 = vsel %vm2364, 0.00033546262, %v2236
        %v2493 = vsel %vm2365, 0.00033546262, %v2237
        %v2494 = vsel %vm2366, 0.00033546262, %v2238
        %v2495 = vsel %vm2367, 0.00033546262, %v2239
        %v2496 = vsel %vm2368, 0.00033546262, %v2240
        %v2497 = vsel %vm2369, 0.00033546262, %v2241
        %v2498 = vsel %vm2370, 0.00033546262, %v2242
        %v2499 = vsel %vm2371, 0.00033546262, %v2243
        %v2500 = vsel %vm2372, 0.00033546262, %v2244
        %v2501 = vsel %vm2373, 0.00033546262, %v2245
        %v2502 = vsel %vm2374, 0.00033546262, %v2246
        %v2503 = vsel %vm2375, 0.00033546262, %v2247
        %v2504 = vsel %vm2376, 0.00033546262, %v2248
        %v2505 = vsel %vm2377, 0.00033546262, %v2249
        %v2506 = vsel %vm2378, 0.00033546262, %v2250
        %v2507 = vsel %vm2379, 0.00033546262, %v2251
        %v2508 = vsel %vm2380, 0.00033546262, %v2252
        %v2509 = vsel %vm2381, 0.00033546262, %v2253
        %v2510 = vsel %vm2382, 0.00033546262, %v2254
        %v2511 = vsel %vm2383, 0.00033546262, %v2255
        %v2512 = vsel %vm2384, 0.00033546262, %v2256
        %v2513 = vsel %vm2385, 0.00033546262, %v2257
        %v2514 = vsel %vm2386, 0.00033546262, %v2258
        %v2515 = vsel %vm2387, 0.00033546262, %v2259
        %v2516 = vsel %vm2388, 0.00033546262, %v2260
        %v2517 = vsel %vm2389, 0.00033546262, %v2261
        %v2518 = vsel %vm2390, 0.00033546262, %v2262
        %v2519 = vsel %vm2391, 0.00033546262, %v2263
        %v2520 = vsel %vm2392, 0.00033546262, %v2264
        %v2521 = vsel %vm2393, 0.00033546262, %v2265
        %v2522 = vsel %vm2394, 0.00033546262, %v2266
        %v2523 = vsel %vm2395, 0.00033546262, %v2267
        %v2524 = vsel %vm2396, 0.00033546262, %v2268
        %v2525 = vsel %vm2397, 0.00033546262, %v2269
        %v2526 = vsel %vm2398, 0.00033546262, %v2270
        %v2527 = vsel %vm2399, 0.00033546262, %v2271
        %v2528 = vsel %vm2400, 0.00033546262, %v2272
        %v2529 = vsel %vm2401, 0.00033546262, %v2273
        %v2530 = vsel %vm2402, 0.00033546262, %v2274
        %v2531 = vsel %vm2403, 0.00033546262, %v2275
        %vm2532 = vcmp.lt.f32.partialorder %v1636, -8.0
        %vm2533 = vcmp.lt.f32.partialorder %v1637, -8.0
        %vm2534 = vcmp.lt.f32.partialorder %v1638, -8.0
        %vm2535 = vcmp.lt.f32.partialorder %v1639, -8.0
        %vm2536 = vcmp.lt.f32.partialorder %v1640, -8.0
        %vm2537 = vcmp.lt.f32.partialorder %v1641, -8.0
        %vm2538 = vcmp.lt.f32.partialorder %v1642, -8.0
        %vm2539 = vcmp.lt.f32.partialorder %v1643, -8.0
        %vm2540 = vcmp.lt.f32.partialorder %v1644, -8.0
        %vm2541 = vcmp.lt.f32.partialorder %v1645, -8.0
        %vm2542 = vcmp.lt.f32.partialorder %v1646, -8.0
        %vm2543 = vcmp.lt.f32.partialorder %v1647, -8.0
        %vm2544 = vcmp.lt.f32.partialorder %v1648, -8.0
        %vm2545 = vcmp.lt.f32.partialorder %v1649, -8.0
        %vm2546 = vcmp.lt.f32.partialorder %v1650, -8.0
        %vm2547 = vcmp.lt.f32.partialorder %v1651, -8.0
        %vm2548 = vcmp.lt.f32.partialorder %v1652, -8.0
        %vm2549 = vcmp.lt.f32.partialorder %v1653, -8.0
        %vm2550 = vcmp.lt.f32.partialorder %v1654, -8.0
        %vm2551 = vcmp.lt.f32.partialorder %v1655, -8.0
        %vm2552 = vcmp.lt.f32.partialorder %v1656, -8.0
        %vm2553 = vcmp.lt.f32.partialorder %v1657, -8.0
        %vm2554 = vcmp.lt.f32.partialorder %v1658, -8.0
        %vm2555 = vcmp.lt.f32.partialorder %v1659, -8.0
        %vm2556 = vcmp.lt.f32.partialorder %v1660, -8.0
        %vm2557 = vcmp.lt.f32.partialorder %v1661, -8.0
        %vm2558 = vcmp.lt.f32.partialorder %v1662, -8.0
        %vm2559 = vcmp.lt.f32.partialorder %v1663, -8.0
        %vm2560 = vcmp.lt.f32.partialorder %v1664, -8.0
        %vm2561 = vcmp.lt.f32.partialorder %v1665, -8.0
        %vm2562 = vcmp.lt.f32.partialorder %v1666, -8.0
        %vm2563 = vcmp.lt.f32.partialorder %v1667, -8.0
        %vm2564 = vcmp.lt.f32.partialorder %v1668, -8.0
        %vm2565 = vcmp.lt.f32.partialorder %v1669, -8.0
        %vm2566 = vcmp.lt.f32.partialorder %v1670, -8.0
        %vm2567 = vcmp.lt.f32.partialorder %v1671, -8.0
        %vm2568 = vcmp.lt.f32.partialorder %v1672, -8.0
        %vm2569 = vcmp.lt.f32.partialorder %v1673, -8.0
        %vm2570 = vcmp.lt.f32.partialorder %v1674, -8.0
        %vm2571 = vcmp.lt.f32.partialorder %v1675, -8.0
        %vm2572 = vcmp.lt.f32.partialorder %v1676, -8.0
        %vm2573 = vcmp.lt.f32.partialorder %v1677, -8.0
        %vm2574 = vcmp.lt.f32.partialorder %v1678, -8.0
        %vm2575 = vcmp.lt.f32.partialorder %v1679, -8.0
        %vm2576 = vcmp.lt.f32.partialorder %v1680, -8.0
        %vm2577 = vcmp.lt.f32.partialorder %v1681, -8.0
        %vm2578 = vcmp.lt.f32.partialorder %v1682, -8.0
        %vm2579 = vcmp.lt.f32.partialorder %v1683, -8.0
        %vm2580 = vcmp.lt.f32.partialorder %v1684, -8.0
        %vm2581 = vcmp.lt.f32.partialorder %v1685, -8.0
        %vm2582 = vcmp.lt.f32.partialorder %v1686, -8.0
        %vm2583 = vcmp.lt.f32.partialorder %v1687, -8.0
        %vm2584 = vcmp.lt.f32.partialorder %v1688, -8.0
        %vm2585 = vcmp.lt.f32.partialorder %v1689, -8.0
        %vm2586 = vcmp.lt.f32.partialorder %v1690, -8.0
        %vm2587 = vcmp.lt.f32.partialorder %v1691, -8.0
        %vm2588 = vcmp.lt.f32.partialorder %v1692, -8.0
        %vm2589 = vcmp.lt.f32.partialorder %v1693, -8.0
        %vm2590 = vcmp.lt.f32.partialorder %v1694, -8.0
        %vm2591 = vcmp.lt.f32.partialorder %v1695, -8.0
        %vm2592 = vcmp.lt.f32.partialorder %v1696, -8.0
        %vm2593 = vcmp.lt.f32.partialorder %v1697, -8.0
        %vm2594 = vcmp.lt.f32.partialorder %v1698, -8.0
        %vm2595 = vcmp.lt.f32.partialorder %v1699, -8.0
        %vm2596 = vcmp.lt.f32.partialorder %v1700, -8.0
        %vm2597 = vcmp.lt.f32.partialorder %v1701, -8.0
        %vm2598 = vcmp.lt.f32.partialorder %v1702, -8.0
        %vm2599 = vcmp.lt.f32.partialorder %v1703, -8.0
        %vm2600 = vcmp.lt.f32.partialorder %v1704, -8.0
        %vm2601 = vcmp.lt.f32.partialorder %v1705, -8.0
        %vm2602 = vcmp.lt.f32.partialorder %v1706, -8.0
        %vm2603 = vcmp.lt.f32.partialorder %v1707, -8.0
        %vm2604 = vcmp.lt.f32.partialorder %v1708, -8.0
        %vm2605 = vcmp.lt.f32.partialorder %v1709, -8.0
        %vm2606 = vcmp.lt.f32.partialorder %v1710, -8.0
        %vm2607 = vcmp.lt.f32.partialorder %v1711, -8.0
        %vm2608 = vcmp.lt.f32.partialorder %v1712, -8.0
        %vm2609 = vcmp.lt.f32.partialorder %v1713, -8.0
        %vm2610 = vcmp.lt.f32.partialorder %v1714, -8.0
        %vm2611 = vcmp.lt.f32.partialorder %v1715, -8.0
        %vm2612 = vcmp.lt.f32.partialorder %v1716, -8.0
        %vm2613 = vcmp.lt.f32.partialorder %v1717, -8.0
        %vm2614 = vcmp.lt.f32.partialorder %v1718, -8.0
        %vm2615 = vcmp.lt.f32.partialorder %v1719, -8.0
        %vm2616 = vcmp.lt.f32.partialorder %v1720, -8.0
        %vm2617 = vcmp.lt.f32.partialorder %v1721, -8.0
        %vm2618 = vcmp.lt.f32.partialorder %v1722, -8.0
        %vm2619 = vcmp.lt.f32.partialorder %v1723, -8.0
        %vm2620 = vcmp.lt.f32.partialorder %v1724, -8.0
        %vm2621 = vcmp.lt.f32.partialorder %v1725, -8.0
        %vm2622 = vcmp.lt.f32.partialorder %v1726, -8.0
        %vm2623 = vcmp.lt.f32.partialorder %v1727, -8.0
        %vm2624 = vcmp.lt.f32.partialorder %v1728, -8.0
        %vm2625 = vcmp.lt.f32.partialorder %v1729, -8.0
        %vm2626 = vcmp.lt.f32.partialorder %v1730, -8.0
        %vm2627 = vcmp.lt.f32.partialorder %v1731, -8.0
        %vm2628 = vcmp.lt.f32.partialorder %v1732, -8.0
        %vm2629 = vcmp.lt.f32.partialorder %v1733, -8.0
        %vm2630 = vcmp.lt.f32.partialorder %v1734, -8.0
        %vm2631 = vcmp.lt.f32.partialorder %v1735, -8.0
        %vm2632 = vcmp.lt.f32.partialorder %v1736, -8.0
        %vm2633 = vcmp.lt.f32.partialorder %v1737, -8.0
        %vm2634 = vcmp.lt.f32.partialorder %v1738, -8.0
        %vm2635 = vcmp.lt.f32.partialorder %v1739, -8.0
        %vm2636 = vcmp.lt.f32.partialorder %v1740, -8.0
        %vm2637 = vcmp.lt.f32.partialorder %v1741, -8.0
        %vm2638 = vcmp.lt.f32.partialorder %v1742, -8.0
        %vm2639 = vcmp.lt.f32.partialorder %v1743, -8.0
        %vm2640 = vcmp.lt.f32.partialorder %v1744, -8.0
        %vm2641 = vcmp.lt.f32.partialorder %v1745, -8.0
        %vm2642 = vcmp.lt.f32.partialorder %v1746, -8.0
        %vm2643 = vcmp.lt.f32.partialorder %v1747, -8.0
        %vm2644 = vcmp.lt.f32.partialorder %v1748, -8.0
        %vm2645 = vcmp.lt.f32.partialorder %v1749, -8.0
        %vm2646 = vcmp.lt.f32.partialorder %v1750, -8.0
        %vm2647 = vcmp.lt.f32.partialorder %v1751, -8.0
        %vm2648 = vcmp.lt.f32.partialorder %v1752, -8.0
        %vm2649 = vcmp.lt.f32.partialorder %v1753, -8.0
        %vm2650 = vcmp.lt.f32.partialorder %v1754, -8.0
        %vm2651 = vcmp.lt.f32.partialorder %v1755, -8.0
        %vm2652 = vcmp.lt.f32.partialorder %v1756, -8.0
        %vm2653 = vcmp.lt.f32.partialorder %v1757, -8.0
        %vm2654 = vcmp.lt.f32.partialorder %v1758, -8.0
        %vm2655 = vcmp.lt.f32.partialorder %v1759, -8.0
        %vm2656 = vcmp.lt.f32.partialorder %v1760, -8.0
        %vm2657 = vcmp.lt.f32.partialorder %v1761, -8.0
        %vm2658 = vcmp.lt.f32.partialorder %v1762, -8.0
        %vm2659 = vcmp.lt.f32.partialorder %v1763, -8.0
        %v2660 = vsel %vm2532, 2980.958, %v2404
        %v2661 = vsel %vm2533, 2980.958, %v2405
        %v2662 = vsel %vm2534, 2980.958, %v2406
        %v2663 = vsel %vm2535, 2980.958, %v2407
        %v2664 = vsel %vm2536, 2980.958, %v2408
        %v2665 = vsel %vm2537, 2980.958, %v2409
        %v2666 = vsel %vm2538, 2980.958, %v2410
        %v2667 = vsel %vm2539, 2980.958, %v2411
        %v2668 = vsel %vm2540, 2980.958, %v2412
        %v2669 = vsel %vm2541, 2980.958, %v2413
        %v2670 = vsel %vm2542, 2980.958, %v2414
        %v2671 = vsel %vm2543, 2980.958, %v2415
        %v2672 = vsel %vm2544, 2980.958, %v2416
        %v2673 = vsel %vm2545, 2980.958, %v2417
        %v2674 = vsel %vm2546, 2980.958, %v2418
        %v2675 = vsel %vm2547, 2980.958, %v2419
        %v2676 = vsel %vm2548, 2980.958, %v2420
        %v2677 = vsel %vm2549, 2980.958, %v2421
        %v2678 = vsel %vm2550, 2980.958, %v2422
        %v2679 = vsel %vm2551, 2980.958, %v2423
        %v2680 = vsel %vm2552, 2980.958, %v2424
        %v2681 = vsel %vm2553, 2980.958, %v2425
        %v2682 = vsel %vm2554, 2980.958, %v2426
        %v2683 = vsel %vm2555, 2980.958, %v2427
        %v2684 = vsel %vm2556, 2980.958, %v2428
        %v2685 = vsel %vm2557, 2980.958, %v2429
        %v2686 = vsel %vm2558, 2980.958, %v2430
        %v2687 = vsel %vm2559, 2980.958, %v2431
        %v2688 = vsel %vm2560, 2980.958, %v2432
        %v2689 = vsel %vm2561, 2980.958, %v2433
        %v2690 = vsel %vm2562, 2980.958, %v2434
        %v2691 = vsel %vm2563, 2980.958, %v2435
        %v2692 = vsel %vm2564, 2980.958, %v2436
        %v2693 = vsel %vm2565, 2980.958, %v2437
        %v2694 = vsel %vm2566, 2980.958, %v2438
        %v2695 = vsel %vm2567, 2980.958, %v2439
        %v2696 = vsel %vm2568, 2980.958, %v2440
        %v2697 = vsel %vm2569, 2980.958, %v2441
        %v2698 = vsel %vm2570, 2980.958, %v2442
        %v2699 = vsel %vm2571, 2980.958, %v2443
        %v2700 = vsel %vm2572, 2980.958, %v2444
        %v2701 = vsel %vm2573, 2980.958, %v2445
        %v2702 = vsel %vm2574, 2980.958, %v2446
        %v2703 = vsel %vm2575, 2980.958, %v2447
        %v2704 = vsel %vm2576, 2980.958, %v2448
        %v2705 = vsel %vm2577, 2980.958, %v2449
        %v2706 = vsel %vm2578, 2980.958, %v2450
        %v2707 = vsel %vm2579, 2980.958, %v2451
        %v2708 = vsel %vm2580, 2980.958, %v2452
        %v2709 = vsel %vm2581, 2980.958, %v2453
        %v2710 = vsel %vm2582, 2980.958, %v2454
        %v2711 = vsel %vm2583, 2980.958, %v2455
        %v2712 = vsel %vm2584, 2980.958, %v2456
        %v2713 = vsel %vm2585, 2980.958, %v2457
        %v2714 = vsel %vm2586, 2980.958, %v2458
        %v2715 = vsel %vm2587, 2980.958, %v2459
        %v2716 = vsel %vm2588, 2980.958, %v2460
        %v2717 = vsel %vm2589, 2980.958, %v2461
        %v2718 = vsel %vm2590, 2980.958, %v2462
        %v2719 = vsel %vm2591, 2980.958, %v2463
        %v2720 = vsel %vm2592, 2980.958, %v2464
        %v2721 = vsel %vm2593, 2980.958, %v2465
        %v2722 = vsel %vm2594, 2980.958, %v2466
        %v2723 = vsel %vm2595, 2980.958, %v2467
        %v2724 = vsel %vm2596, 2980.958, %v2468
        %v2725 = vsel %vm2597, 2980.958, %v2469
        %v2726 = vsel %vm2598, 2980.958, %v2470
        %v2727 = vsel %vm2599, 2980.958, %v2471
        %v2728 = vsel %vm2600, 2980.958, %v2472
        %v2729 = vsel %vm2601, 2980.958, %v2473
        %v2730 = vsel %vm2602, 2980.958, %v2474
        %v2731 = vsel %vm2603, 2980.958, %v2475
        %v2732 = vsel %vm2604, 2980.958, %v2476
        %v2733 = vsel %vm2605, 2980.958, %v2477
        %v2734 = vsel %vm2606, 2980.958, %v2478
        %v2735 = vsel %vm2607, 2980.958, %v2479
        %v2736 = vsel %vm2608, 2980.958, %v2480
        %v2737 = vsel %vm2609, 2980.958, %v2481
        %v2738 = vsel %vm2610, 2980.958, %v2482
        %v2739 = vsel %vm2611, 2980.958, %v2483
        %v2740 = vsel %vm2612, 2980.958, %v2484
        %v2741 = vsel %vm2613, 2980.958, %v2485
        %v2742 = vsel %vm2614, 2980.958, %v2486
        %v2743 = vsel %vm2615, 2980.958, %v2487
        %v2744 = vsel %vm2616, 2980.958, %v2488
        %v2745 = vsel %vm2617, 2980.958, %v2489
        %v2746 = vsel %vm2618, 2980.958, %v2490
        %v2747 = vsel %vm2619, 2980.958, %v2491
        %v2748 = vsel %vm2620, 2980.958, %v2492
        %v2749 = vsel %vm2621, 2980.958, %v2493
        %v2750 = vsel %vm2622, 2980.958, %v2494
        %v2751 = vsel %vm2623, 2980.958, %v2495
        %v2752 = vsel %vm2624, 2980.958, %v2496
        %v2753 = vsel %vm2625, 2980.958, %v2497
        %v2754 = vsel %vm2626, 2980.958, %v2498
        %v2755 = vsel %vm2627, 2980.958, %v2499
        %v2756 = vsel %vm2628, 2980.958, %v2500
        %v2757 = vsel %vm2629, 2980.958, %v2501
        %v2758 = vsel %vm2630, 2980.958, %v2502
        %v2759 = vsel %vm2631, 2980.958, %v2503
        %v2760 = vsel %vm2632, 2980.958, %v2504
        %v2761 = vsel %vm2633, 2980.958, %v2505
        %v2762 = vsel %vm2634, 2980.958, %v2506
        %v2763 = vsel %vm2635, 2980.958, %v2507
        %v2764 = vsel %vm2636, 2980.958, %v2508
        %v2765 = vsel %vm2637, 2980.958, %v2509
        %v2766 = vsel %vm2638, 2980.958, %v2510
        %v2767 = vsel %vm2639, 2980.958, %v2511
        %v2768 = vsel %vm2640, 2980.958, %v2512
        %v2769 = vsel %vm2641, 2980.958, %v2513
        %v2770 = vsel %vm2642, 2980.958, %v2514
        %v2771 = vsel %vm2643, 2980.958, %v2515
        %v2772 = vsel %vm2644, 2980.958, %v2516
        %v2773 = vsel %vm2645, 2980.958, %v2517
        %v2774 = vsel %vm2646, 2980.958, %v2518
        %v2775 = vsel %vm2647, 2980.958, %v2519
        %v2776 = vsel %vm2648, 2980.958, %v2520
        %v2777 = vsel %vm2649, 2980.958, %v2521
        %v2778 = vsel %vm2650, 2980.958, %v2522
        %v2779 = vsel %vm2651, 2980.958, %v2523
        %v2780 = vsel %vm2652, 2980.958, %v2524
        %v2781 = vsel %vm2653, 2980.958, %v2525
        %v2782 = vsel %vm2654, 2980.958, %v2526
        %v2783 = vsel %vm2655, 2980.958, %v2527
        %v2784 = vsel %vm2656, 2980.958, %v2528
        %v2785 = vsel %vm2657, 2980.958, %v2529
        %v2786 = vsel %vm2658, 2980.958, %v2530
        %v2787 = vsel %vm2659, 2980.958, %v2531
        %v2788 = vmul.f32 %v1892, 1.48695
        %v2789 = vmul.f32 %v1893, 1.48695
        %v2790 = vmul.f32 %v1894, 1.48695
        %v2791 = vmul.f32 %v1895, 1.48695
        %v2792 = vmul.f32 %v1896, 1.48695
        %v2793 = vmul.f32 %v1897, 1.48695
        %v2794 = vmul.f32 %v1898, 1.48695
        %v2795 = vmul.f32 %v1899, 1.48695
        %v2796 = vmul.f32 %v1900, 1.48695
        %v2797 = vmul.f32 %v1901, 1.48695
        %v2798 = vmul.f32 %v1902, 1.48695
        %v2799 = vmul.f32 %v1903, 1.48695
        %v2800 = vmul.f32 %v1904, 1.48695
        %v2801 = vmul.f32 %v1905, 1.48695
        %v2802 = vmul.f32 %v1906, 1.48695
        %v2803 = vmul.f32 %v1907, 1.48695
        %v2804 = vmul.f32 %v1908, 1.48695
        %v2805 = vmul.f32 %v1909, 1.48695
        %v2806 = vmul.f32 %v1910, 1.48695
        %v2807 = vmul.f32 %v1911, 1.48695
        %v2808 = vmul.f32 %v1912, 1.48695
        %v2809 = vmul.f32 %v1913, 1.48695
        %v2810 = vmul.f32 %v1914, 1.48695
        %v2811 = vmul.f32 %v1915, 1.48695
        %v2812 = vmul.f32 %v1916, 1.48695
        %v2813 = vmul.f32 %v1917, 1.48695
        %v2814 = vmul.f32 %v1918, 1.48695
        %v2815 = vmul.f32 %v1919, 1.48695
        %v2816 = vmul.f32 %v1920, 1.48695
        %v2817 = vmul.f32 %v1921, 1.48695
        %v2818 = vmul.f32 %v1922, 1.48695
        %v2819 = vmul.f32 %v1923, 1.48695
        %v2820 = vmul.f32 %v1924, 1.48695
        %v2821 = vmul.f32 %v1925, 1.48695
        %v2822 = vmul.f32 %v1926, 1.48695
        %v2823 = vmul.f32 %v1927, 1.48695
        %v2824 = vmul.f32 %v1928, 1.48695
        %v2825 = vmul.f32 %v1929, 1.48695
        %v2826 = vmul.f32 %v1930, 1.48695
        %v2827 = vmul.f32 %v1931, 1.48695
        %v2828 = vmul.f32 %v1932, 1.48695
        %v2829 = vmul.f32 %v1933, 1.48695
        %v2830 = vmul.f32 %v1934, 1.48695
        %v2831 = vmul.f32 %v1935, 1.48695
        %v2832 = vmul.f32 %v1936, 1.48695
        %v2833 = vmul.f32 %v1937, 1.48695
        %v2834 = vmul.f32 %v1938, 1.48695
        %v2835 = vmul.f32 %v1939, 1.48695
        %v2836 = vmul.f32 %v1940, 1.48695
        %v2837 = vmul.f32 %v1941, 1.48695
        %v2838 = vmul.f32 %v1942, 1.48695
        %v2839 = vmul.f32 %v1943, 1.48695
        %v2840 = vmul.f32 %v1944, 1.48695
        %v2841 = vmul.f32 %v1945, 1.48695
        %v2842 = vmul.f32 %v1946, 1.48695
        %v2843 = vmul.f32 %v1947, 1.48695
        %v2844 = vmul.f32 %v1948, 1.48695
        %v2845 = vmul.f32 %v1949, 1.48695
        %v2846 = vmul.f32 %v1950, 1.48695
        %v2847 = vmul.f32 %v1951, 1.48695
        %v2848 = vmul.f32 %v1952, 1.48695
        %v2849 = vmul.f32 %v1953, 1.48695
        %v2850 = vmul.f32 %v1954, 1.48695
        %v2851 = vmul.f32 %v1955, 1.48695
        %v2852 = vmul.f32 %v1956, 1.48695
        %v2853 = vmul.f32 %v1957, 1.48695
        %v2854 = vmul.f32 %v1958, 1.48695
        %v2855 = vmul.f32 %v1959, 1.48695
        %v2856 = vmul.f32 %v1960, 1.48695
        %v2857 = vmul.f32 %v1961, 1.48695
        %v2858 = vmul.f32 %v1962, 1.48695
        %v2859 = vmul.f32 %v1963, 1.48695
        %v2860 = vmul.f32 %v1964, 1.48695
        %v2861 = vmul.f32 %v1965, 1.48695
        %v2862 = vmul.f32 %v1966, 1.48695
        %v2863 = vmul.f32 %v1967, 1.48695
        %v2864 = vmul.f32 %v1968, 1.48695
        %v2865 = vmul.f32 %v1969, 1.48695
        %v2866 = vmul.f32 %v1970, 1.48695
        %v2867 = vmul.f32 %v1971, 1.48695
        %v2868 = vmul.f32 %v1972, 1.48695
        %v2869 = vmul.f32 %v1973, 1.48695
        %v2870 = vmul.f32 %v1974, 1.48695
        %v2871 = vmul.f32 %v1975, 1.48695
        %v2872 = vmul.f32 %v1976, 1.48695
        %v2873 = vmul.f32 %v1977, 1.48695
        %v2874 = vmul.f32 %v1978, 1.48695
        %v2875 = vmul.f32 %v1979, 1.48695
        %v2876 = vmul.f32 %v1980, 1.48695
        %v2877 = vmul.f32 %v1981, 1.48695
        %v2878 = vmul.f32 %v1982, 1.48695
        %v2879 = vmul.f32 %v1983, 1.48695
        %v2880 = vmul.f32 %v1984, 1.48695
        %v2881 = vmul.f32 %v1985, 1.48695
        %v2882 = vmul.f32 %v1986, 1.48695
        %v2883 = vmul.f32 %v1987, 1.48695
        %v2884 = vmul.f32 %v1988, 1.48695
        %v2885 = vmul.f32 %v1989, 1.48695
        %v2886 = vmul.f32 %v1990, 1.48695
        %v2887 = vmul.f32 %v1991, 1.48695
        %v2888 = vmul.f32 %v1992, 1.48695
        %v2889 = vmul.f32 %v1993, 1.48695
        %v2890 = vmul.f32 %v1994, 1.48695
        %v2891 = vmul.f32 %v1995, 1.48695
        %v2892 = vmul.f32 %v1996, 1.48695
        %v2893 = vmul.f32 %v1997, 1.48695
        %v2894 = vmul.f32 %v1998, 1.48695
        %v2895 = vmul.f32 %v1999, 1.48695
        %v2896 = vmul.f32 %v2000, 1.48695
        %v2897 = vmul.f32 %v2001, 1.48695
        %v2898 = vmul.f32 %v2002, 1.48695
        %v2899 = vmul.f32 %v2003, 1.48695
        %v2900 = vmul.f32 %v2004, 1.48695
        %v2901 = vmul.f32 %v2005, 1.48695
        %v2902 = vmul.f32 %v2006, 1.48695
        %v2903 = vmul.f32 %v2007, 1.48695
        %v2904 = vmul.f32 %v2008, 1.48695
        %v2905 = vmul.f32 %v2009, 1.48695
        %v2906 = vmul.f32 %v2010, 1.48695
        %v2907 = vmul.f32 %v2011, 1.48695
        %v2908 = vmul.f32 %v2012, 1.48695
        %v2909 = vmul.f32 %v2013, 1.48695
        %v2910 = vmul.f32 %v2014, 1.48695
        %v2911 = vmul.f32 %v2015, 1.48695
        %v2912 = vmul.f32 %v2016, 1.48695
        %v2913 = vmul.f32 %v2017, 1.48695
        %v2914 = vmul.f32 %v2018, 1.48695
        %v2915 = vmul.f32 %v2019, 1.48695
        %v2916 = vadd.f32 %v2788, 1.8732
        %v2917 = vadd.f32 %v2789, 1.8732
        %v2918 = vadd.f32 %v2790, 1.8732
        %v2919 = vadd.f32 %v2791, 1.8732
        %v2920 = vadd.f32 %v2792, 1.8732
        %v2921 = vadd.f32 %v2793, 1.8732
        %v2922 = vadd.f32 %v2794, 1.8732
        %v2923 = vadd.f32 %v2795, 1.8732
        %v2924 = vadd.f32 %v2796, 1.8732
        %v2925 = vadd.f32 %v2797, 1.8732
        %v2926 = vadd.f32 %v2798, 1.8732
        %v2927 = vadd.f32 %v2799, 1.8732
        %v2928 = vadd.f32 %v2800, 1.8732
        %v2929 = vadd.f32 %v2801, 1.8732
        %v2930 = vadd.f32 %v2802, 1.8732
        %v2931 = vadd.f32 %v2803, 1.8732
        %v2932 = vadd.f32 %v2804, 1.8732
        %v2933 = vadd.f32 %v2805, 1.8732
        %v2934 = vadd.f32 %v2806, 1.8732
        %v2935 = vadd.f32 %v2807, 1.8732
        %v2936 = vadd.f32 %v2808, 1.8732
        %v2937 = vadd.f32 %v2809, 1.8732
        %v2938 = vadd.f32 %v2810, 1.8732
        %v2939 = vadd.f32 %v2811, 1.8732
        %v2940 = vadd.f32 %v2812, 1.8732
        %v2941 = vadd.f32 %v2813, 1.8732
        %v2942 = vadd.f32 %v2814, 1.8732
        %v2943 = vadd.f32 %v2815, 1.8732
        %v2944 = vadd.f32 %v2816, 1.8732
        %v2945 = vadd.f32 %v2817, 1.8732
        %v2946 = vadd.f32 %v2818, 1.8732
        %v2947 = vadd.f32 %v2819, 1.8732
        %v2948 = vadd.f32 %v2820, 1.8732
        %v2949 = vadd.f32 %v2821, 1.8732
        %v2950 = vadd.f32 %v2822, 1.8732
        %v2951 = vadd.f32 %v2823, 1.8732
        %v2952 = vadd.f32 %v2824, 1.8732
        %v2953 = vadd.f32 %v2825, 1.8732
        %v2954 = vadd.f32 %v2826, 1.8732
        %v2955 = vadd.f32 %v2827, 1.8732
        %v2956 = vadd.f32 %v2828, 1.8732
        %v2957 = vadd.f32 %v2829, 1.8732
        %v2958 = vadd.f32 %v2830, 1.8732
        %v2959 = vadd.f32 %v2831, 1.8732
        %v2960 = vadd.f32 %v2832, 1.8732
        %v2961 = vadd.f32 %v2833, 1.8732
        %v2962 = vadd.f32 %v2834, 1.8732
        %v2963 = vadd.f32 %v2835, 1.8732
        %v2964 = vadd.f32 %v2836, 1.8732
        %v2965 = vadd.f32 %v2837, 1.8732
        %v2966 = vadd.f32 %v2838, 1.8732
        %v2967 = vadd.f32 %v2839, 1.8732
        %v2968 = vadd.f32 %v2840, 1.8732
        %v2969 = vadd.f32 %v2841, 1.8732
        %v2970 = vadd.f32 %v2842, 1.8732
        %v2971 = vadd.f32 %v2843, 1.8732
        %v2972 = vadd.f32 %v2844, 1.8732
        %v2973 = vadd.f32 %v2845, 1.8732
        %v2974 = vadd.f32 %v2846, 1.8732
        %v2975 = vadd.f32 %v2847, 1.8732
        %v2976 = vadd.f32 %v2848, 1.8732
        %v2977 = vadd.f32 %v2849, 1.8732
        %v2978 = vadd.f32 %v2850, 1.8732
        %v2979 = vadd.f32 %v2851, 1.8732
        %v2980 = vadd.f32 %v2852, 1.8732
        %v2981 = vadd.f32 %v2853, 1.8732
        %v2982 = vadd.f32 %v2854, 1.8732
        %v2983 = vadd.f32 %v2855, 1.8732
        %v2984 = vadd.f32 %v2856, 1.8732
        %v2985 = vadd.f32 %v2857, 1.8732
        %v2986 = vadd.f32 %v2858, 1.8732
        %v2987 = vadd.f32 %v2859, 1.8732
        %v2988 = vadd.f32 %v2860, 1.8732
        %v2989 = vadd.f32 %v2861, 1.8732
        %v2990 = vadd.f32 %v2862, 1.8732
        %v2991 = vadd.f32 %v2863, 1.8732
        %v2992 = vadd.f32 %v2864, 1.8732
        %v2993 = vadd.f32 %v2865, 1.8732
        %v2994 = vadd.f32 %v2866, 1.8732
        %v2995 = vadd.f32 %v2867, 1.8732
        %v2996 = vadd.f32 %v2868, 1.8732
        %v2997 = vadd.f32 %v2869, 1.8732
        %v2998 = vadd.f32 %v2870, 1.8732
        %v2999 = vadd.f32 %v2871, 1.8732
        %v3000 = vadd.f32 %v2872, 1.8732
        %v3001 = vadd.f32 %v2873, 1.8732
        %v3002 = vadd.f32 %v2874, 1.8732
        %v3003 = vadd.f32 %v2875, 1.8732
        %v3004 = vadd.f32 %v2876, 1.8732
        %v3005 = vadd.f32 %v2877, 1.8732
        %v3006 = vadd.f32 %v2878, 1.8732
        %v3007 = vadd.f32 %v2879, 1.8732
        %v3008 = vadd.f32 %v2880, 1.8732
        %v3009 = vadd.f32 %v2881, 1.8732
        %v3010 = vadd.f32 %v2882, 1.8732
        %v3011 = vadd.f32 %v2883, 1.8732
        %v3012 = vadd.f32 %v2884, 1.8732
        %v3013 = vadd.f32 %v2885, 1.8732
        %v3014 = vadd.f32 %v2886, 1.8732
        %v3015 = vadd.f32 %v2887, 1.8732
        %v3016 = vadd.f32 %v2888, 1.8732
        %v3017 = vadd.f32 %v2889, 1.8732
        %v3018 = vadd.f32 %v2890, 1.8732
        %v3019 = vadd.f32 %v2891, 1.8732
        %v3020 = vadd.f32 %v2892, 1.8732
        %v3021 = vadd.f32 %v2893, 1.8732
        %v3022 = vadd.f32 %v2894, 1.8732
        %v3023 = vadd.f32 %v2895, 1.8732
        %v3024 = vadd.f32 %v2896, 1.8732
        %v3025 = vadd.f32 %v2897, 1.8732
        %v3026 = vadd.f32 %v2898, 1.8732
        %v3027 = vadd.f32 %v2899, 1.8732
        %v3028 = vadd.f32 %v2900, 1.8732
        %v3029 = vadd.f32 %v2901, 1.8732
        %v3030 = vadd.f32 %v2902, 1.8732
        %v3031 = vadd.f32 %v2903, 1.8732
        %v3032 = vadd.f32 %v2904, 1.8732
        %v3033 = vadd.f32 %v2905, 1.8732
        %v3034 = vadd.f32 %v2906, 1.8732
        %v3035 = vadd.f32 %v2907, 1.8732
        %v3036 = vadd.f32 %v2908, 1.8732
        %v3037 = vadd.f32 %v2909, 1.8732
        %v3038 = vadd.f32 %v2910, 1.8732
        %v3039 = vadd.f32 %v2911, 1.8732
        %v3040 = vadd.f32 %v2912, 1.8732
        %v3041 = vadd.f32 %v2913, 1.8732
        %v3042 = vadd.f32 %v2914, 1.8732
        %v3043 = vadd.f32 %v2915, 1.8732
        %v3044 = vsub.f32 0.0, %v2916
        %v3045 = vsub.f32 0.0, %v2917
        %v3046 = vsub.f32 0.0, %v2918
        %v3047 = vsub.f32 0.0, %v2919
        %v3048 = vsub.f32 0.0, %v2920
        %v3049 = vsub.f32 0.0, %v2921
        %v3050 = vsub.f32 0.0, %v2922
        %v3051 = vsub.f32 0.0, %v2923
        %v3052 = vsub.f32 0.0, %v2924
        %v3053 = vsub.f32 0.0, %v2925
        %v3054 = vsub.f32 0.0, %v2926
        %v3055 = vsub.f32 0.0, %v2927
        %v3056 = vsub.f32 0.0, %v2928
        %v3057 = vsub.f32 0.0, %v2929
        %v3058 = vsub.f32 0.0, %v2930
        %v3059 = vsub.f32 0.0, %v2931
        %v3060 = vsub.f32 0.0, %v2932
        %v3061 = vsub.f32 0.0, %v2933
        %v3062 = vsub.f32 0.0, %v2934
        %v3063 = vsub.f32 0.0, %v2935
        %v3064 = vsub.f32 0.0, %v2936
        %v3065 = vsub.f32 0.0, %v2937
        %v3066 = vsub.f32 0.0, %v2938
        %v3067 = vsub.f32 0.0, %v2939
        %v3068 = vsub.f32 0.0, %v2940
        %v3069 = vsub.f32 0.0, %v2941
        %v3070 = vsub.f32 0.0, %v2942
        %v3071 = vsub.f32 0.0, %v2943
        %v3072 = vsub.f32 0.0, %v2944
        %v3073 = vsub.f32 0.0, %v2945
        %v3074 = vsub.f32 0.0, %v2946
        %v3075 = vsub.f32 0.0, %v2947
        %v3076 = vsub.f32 0.0, %v2948
        %v3077 = vsub.f32 0.0, %v2949
        %v3078 = vsub.f32 0.0, %v2950
        %v3079 = vsub.f32 0.0, %v2951
        %v3080 = vsub.f32 0.0, %v2952
        %v3081 = vsub.f32 0.0, %v2953
        %v3082 = vsub.f32 0.0, %v2954
        %v3083 = vsub.f32 0.0, %v2955
        %v3084 = vsub.f32 0.0, %v2956
        %v3085 = vsub.f32 0.0, %v2957
        %v3086 = vsub.f32 0.0, %v2958
        %v3087 = vsub.f32 0.0, %v2959
        %v3088 = vsub.f32 0.0, %v2960
        %v3089 = vsub.f32 0.0, %v2961
        %v3090 = vsub.f32 0.0, %v2962
        %v3091 = vsub.f32 0.0, %v2963
        %v3092 = vsub.f32 0.0, %v2964
        %v3093 = vsub.f32 0.0, %v2965
        %v3094 = vsub.f32 0.0, %v2966
        %v3095 = vsub.f32 0.0, %v2967
        %v3096 = vsub.f32 0.0, %v2968
        %v3097 = vsub.f32 0.0, %v2969
        %v3098 = vsub.f32 0.0, %v2970
        %v3099 = vsub.f32 0.0, %v2971
        %v3100 = vsub.f32 0.0, %v2972
        %v3101 = vsub.f32 0.0, %v2973
        %v3102 = vsub.f32 0.0, %v2974
        %v3103 = vsub.f32 0.0, %v2975
        %v3104 = vsub.f32 0.0, %v2976
        %v3105 = vsub.f32 0.0, %v2977
        %v3106 = vsub.f32 0.0, %v2978
        %v3107 = vsub.f32 0.0, %v2979
        %v3108 = vsub.f32 0.0, %v2980
        %v3109 = vsub.f32 0.0, %v2981
        %v3110 = vsub.f32 0.0, %v2982
        %v3111 = vsub.f32 0.0, %v2983
        %v3112 = vsub.f32 0.0, %v2984
        %v3113 = vsub.f32 0.0, %v2985
        %v3114 = vsub.f32 0.0, %v2986
        %v3115 = vsub.f32 0.0, %v2987
        %v3116 = vsub.f32 0.0, %v2988
        %v3117 = vsub.f32 0.0, %v2989
        %v3118 = vsub.f32 0.0, %v2990
        %v3119 = vsub.f32 0.0, %v2991
        %v3120 = vsub.f32 0.0, %v2992
        %v3121 = vsub.f32 0.0, %v2993
        %v3122 = vsub.f32 0.0, %v2994
        %v3123 = vsub.f32 0.0, %v2995
        %v3124 = vsub.f32 0.0, %v2996
        %v3125 = vsub.f32 0.0, %v2997
        %v3126 = vsub.f32 0.0, %v2998
        %v3127 = vsub.f32 0.0, %v2999
        %v3128 = vsub.f32 0.0, %v3000
        %v3129 = vsub.f32 0.0, %v3001
        %v3130 = vsub.f32 0.0, %v3002
        %v3131 = vsub.f32 0.0, %v3003
        %v3132 = vsub.f32 0.0, %v3004
        %v3133 = vsub.f32 0.0, %v3005
        %v3134 = vsub.f32 0.0, %v3006
        %v3135 = vsub.f32 0.0, %v3007
        %v3136 = vsub.f32 0.0, %v3008
        %v3137 = vsub.f32 0.0, %v3009
        %v3138 = vsub.f32 0.0, %v3010
        %v3139 = vsub.f32 0.0, %v3011
        %v3140 = vsub.f32 0.0, %v3012
        %v3141 = vsub.f32 0.0, %v3013
        %v3142 = vsub.f32 0.0, %v3014
        %v3143 = vsub.f32 0.0, %v3015
        %v3144 = vsub.f32 0.0, %v3016
        %v3145 = vsub.f32 0.0, %v3017
        %v3146 = vsub.f32 0.0, %v3018
        %v3147 = vsub.f32 0.0, %v3019
        %v3148 = vsub.f32 0.0, %v3020
        %v3149 = vsub.f32 0.0, %v3021
        %v3150 = vsub.f32 0.0, %v3022
        %v3151 = vsub.f32 0.0, %v3023
        %v3152 = vsub.f32 0.0, %v3024
        %v3153 = vsub.f32 0.0, %v3025
        %v3154 = vsub.f32 0.0, %v3026
        %v3155 = vsub.f32 0.0, %v3027
        %v3156 = vsub.f32 0.0, %v3028
        %v3157 = vsub.f32 0.0, %v3029
        %v3158 = vsub.f32 0.0, %v3030
        %v3159 = vsub.f32 0.0, %v3031
        %v3160 = vsub.f32 0.0, %v3032
        %v3161 = vsub.f32 0.0, %v3033
        %v3162 = vsub.f32 0.0, %v3034
        %v3163 = vsub.f32 0.0, %v3035
        %v3164 = vsub.f32 0.0, %v3036
        %v3165 = vsub.f32 0.0, %v3037
        %v3166 = vsub.f32 0.0, %v3038
        %v3167 = vsub.f32 0.0, %v3039
        %v3168 = vsub.f32 0.0, %v3040
        %v3169 = vsub.f32 0.0, %v3041
        %v3170 = vsub.f32 0.0, %v3042
        %v3171 = vsub.f32 0.0, %v3043
        %v3172 = vmul.f32 %v3044, 1.442695
        %v3173 = vpow.pop %v3172
        %v3174 = vmul.f32 %v3045, 1.442695
        %v3175 = vpow.pop %v3174
        %v3176 = vmul.f32 %v3046, 1.442695
        %v3177 = vpow.pop %v3176
        %v3178 = vmul.f32 %v3047, 1.442695
        %v3179 = vpow.pop %v3178
        %v3180 = vmul.f32 %v3048, 1.442695
        %v3181 = vpow.pop %v3180
        %v3182 = vmul.f32 %v3049, 1.442695
        %v3183 = vpow.pop %v3182
        %v3184 = vmul.f32 %v3050, 1.442695
        %v3185 = vpow.pop %v3184
        %v3186 = vmul.f32 %v3051, 1.442695
        %v3187 = vpow.pop %v3186
        %v3188 = vmul.f32 %v3052, 1.442695
        %v3189 = vpow.pop %v3188
        %v3190 = vmul.f32 %v3053, 1.442695
        %v3191 = vpow.pop %v3190
        %v3192 = vmul.f32 %v3054, 1.442695
        %v3193 = vpow.pop %v3192
        %v3194 = vmul.f32 %v3055, 1.442695
        %v3195 = vpow.pop %v3194
        %v3196 = vmul.f32 %v3056, 1.442695
        %v3197 = vpow.pop %v3196
        %v3198 = vmul.f32 %v3057, 1.442695
        %v3199 = vpow.pop %v3198
        %v3200 = vmul.f32 %v3058, 1.442695
        %v3201 = vpow.pop %v3200
        %v3202 = vmul.f32 %v3059, 1.442695
        %v3203 = vpow.pop %v3202
        %v3204 = vmul.f32 %v3060, 1.442695
        %v3205 = vpow.pop %v3204
        %v3206 = vmul.f32 %v3061, 1.442695
        %v3207 = vpow.pop %v3206
        %v3208 = vmul.f32 %v3062, 1.442695
        %v3209 = vpow.pop %v3208
        %v3210 = vmul.f32 %v3063, 1.442695
        %v3211 = vpow.pop %v3210
        %v3212 = vmul.f32 %v3064, 1.442695
        %v3213 = vpow.pop %v3212
        %v3214 = vmul.f32 %v3065, 1.442695
        %v3215 = vpow.pop %v3214
        %v3216 = vmul.f32 %v3066, 1.442695
        %v3217 = vpow.pop %v3216
        %v3218 = vmul.f32 %v3067, 1.442695
        %v3219 = vpow.pop %v3218
        %v3220 = vmul.f32 %v3068, 1.442695
        %v3221 = vpow.pop %v3220
        %v3222 = vmul.f32 %v3069, 1.442695
        %v3223 = vpow.pop %v3222
        %v3224 = vmul.f32 %v3070, 1.442695
        %v3225 = vpow.pop %v3224
        %v3226 = vmul.f32 %v3071, 1.442695
        %v3227 = vpow.pop %v3226
        %v3228 = vmul.f32 %v3072, 1.442695
        %v3229 = vpow.pop %v3228
        %v3230 = vmul.f32 %v3073, 1.442695
        %v3231 = vpow.pop %v3230
        %v3232 = vmul.f32 %v3074, 1.442695
        %v3233 = vpow.pop %v3232
        %v3234 = vmul.f32 %v3075, 1.442695
        %v3235 = vpow.pop %v3234
        %v3236 = vmul.f32 %v3076, 1.442695
        %v3237 = vpow.pop %v3236
        %v3238 = vmul.f32 %v3077, 1.442695
        %v3239 = vpow.pop %v3238
        %v3240 = vmul.f32 %v3078, 1.442695
        %v3241 = vpow.pop %v3240
        %v3242 = vmul.f32 %v3079, 1.442695
        %v3243 = vpow.pop %v3242
        %v3244 = vmul.f32 %v3080, 1.442695
        %v3245 = vpow.pop %v3244
        %v3246 = vmul.f32 %v3081, 1.442695
        %v3247 = vpow.pop %v3246
        %v3248 = vmul.f32 %v3082, 1.442695
        %v3249 = vpow.pop %v3248
        %v3250 = vmul.f32 %v3083, 1.442695
        %v3251 = vpow.pop %v3250
        %v3252 = vmul.f32 %v3084, 1.442695
        %v3253 = vpow.pop %v3252
        %v3254 = vmul.f32 %v3085, 1.442695
        %v3255 = vpow.pop %v3254
        %v3256 = vmul.f32 %v3086, 1.442695
        %v3257 = vpow.pop %v3256
        %v3258 = vmul.f32 %v3087, 1.442695
        %v3259 = vpow.pop %v3258
        %v3260 = vmul.f32 %v3088, 1.442695
        %v3261 = vpow.pop %v3260
        %v3262 = vmul.f32 %v3089, 1.442695
        %v3263 = vpow.pop %v3262
        %v3264 = vmul.f32 %v3090, 1.442695
        %v3265 = vpow.pop %v3264
        %v3266 = vmul.f32 %v3091, 1.442695
        %v3267 = vpow.pop %v3266
        %v3268 = vmul.f32 %v3092, 1.442695
        %v3269 = vpow.pop %v3268
        %v3270 = vmul.f32 %v3093, 1.442695
        %v3271 = vpow.pop %v3270
        %v3272 = vmul.f32 %v3094, 1.442695
        %v3273 = vpow.pop %v3272
        %v3274 = vmul.f32 %v3095, 1.442695
        %v3275 = vpow.pop %v3274
        %v3276 = vmul.f32 %v3096, 1.442695
        %v3277 = vpow.pop %v3276
        %v3278 = vmul.f32 %v3097, 1.442695
        %v3279 = vpow.pop %v3278
        %v3280 = vmul.f32 %v3098, 1.442695
        %v3281 = vpow.pop %v3280
        %v3282 = vmul.f32 %v3099, 1.442695
        %v3283 = vpow.pop %v3282
        %v3284 = vmul.f32 %v3100, 1.442695
        %v3285 = vpow.pop %v3284
        %v3286 = vmul.f32 %v3101, 1.442695
        %v3287 = vpow.pop %v3286
        %v3288 = vmul.f32 %v3102, 1.442695
        %v3289 = vpow.pop %v3288
        %v3290 = vmul.f32 %v3103, 1.442695
        %v3291 = vpow.pop %v3290
        %v3292 = vmul.f32 %v3104, 1.442695
        %v3293 = vpow.pop %v3292
        %v3294 = vmul.f32 %v3105, 1.442695
        %v3295 = vpow.pop %v3294
        %v3296 = vmul.f32 %v3106, 1.442695
        %v3297 = vpow.pop %v3296
        %v3298 = vmul.f32 %v3107, 1.442695
        %v3299 = vpow.pop %v3298
        %v3300 = vmul.f32 %v3108, 1.442695
        %v3301 = vpow.pop %v3300
        %v3302 = vmul.f32 %v3109, 1.442695
        %v3303 = vpow.pop %v3302
        %v3304 = vmul.f32 %v3110, 1.442695
        %v3305 = vpow.pop %v3304
        %v3306 = vmul.f32 %v3111, 1.442695
        %v3307 = vpow.pop %v3306
        %v3308 = vmul.f32 %v3112, 1.442695
        %v3309 = vpow.pop %v3308
        %v3310 = vmul.f32 %v3113, 1.442695
        %v3311 = vpow.pop %v3310
        %v3312 = vmul.f32 %v3114, 1.442695
        %v3313 = vpow.pop %v3312
        %v3314 = vmul.f32 %v3115, 1.442695
        %v3315 = vpow.pop %v3314
        %v3316 = vmul.f32 %v3116, 1.442695
        %v3317 = vpow.pop %v3316
        %v3318 = vmul.f32 %v3117, 1.442695
        %v3319 = vpow.pop %v3318
        %v3320 = vmul.f32 %v3118, 1.442695
        %v3321 = vpow.pop %v3320
        %v3322 = vmul.f32 %v3119, 1.442695
        %v3323 = vpow.pop %v3322
        %v3324 = vmul.f32 %v3120, 1.442695
        %v3325 = vpow.pop %v3324
        %v3326 = vmul.f32 %v3121, 1.442695
        %v3327 = vpow.pop %v3326
        %v3328 = vmul.f32 %v3122, 1.442695
        %v3329 = vpow.pop %v3328
        %v3330 = vmul.f32 %v3123, 1.442695
        %v3331 = vpow.pop %v3330
        %v3332 = vmul.f32 %v3124, 1.442695
        %v3333 = vpow.pop %v3332
        %v3334 = vmul.f32 %v3125, 1.442695
        %v3335 = vpow.pop %v3334
        %v3336 = vmul.f32 %v3126, 1.442695
        %v3337 = vpow.pop %v3336
        %v3338 = vmul.f32 %v3127, 1.442695
        %v3339 = vpow.pop %v3338
        %v3340 = vmul.f32 %v3128, 1.442695
        %v3341 = vpow.pop %v3340
        %v3342 = vmul.f32 %v3129, 1.442695
        %v3343 = vpow.pop %v3342
        %v3344 = vmul.f32 %v3130, 1.442695
        %v3345 = vpow.pop %v3344
        %v3346 = vmul.f32 %v3131, 1.442695
        %v3347 = vpow.pop %v3346
        %v3348 = vmul.f32 %v3132, 1.442695
        %v3349 = vpow.pop %v3348
        %v3350 = vmul.f32 %v3133, 1.442695
        %v3351 = vpow.pop %v3350
        %v3352 = vmul.f32 %v3134, 1.442695
        %v3353 = vpow.pop %v3352
        %v3354 = vmul.f32 %v3135, 1.442695
        %v3355 = vpow.pop %v3354
        %v3356 = vmul.f32 %v3136, 1.442695
        %v3357 = vpow.pop %v3356
        %v3358 = vmul.f32 %v3137, 1.442695
        %v3359 = vpow.pop %v3358
        %v3360 = vmul.f32 %v3138, 1.442695
        %v3361 = vpow.pop %v3360
        %v3362 = vmul.f32 %v3139, 1.442695
        %v3363 = vpow.pop %v3362
        %v3364 = vmul.f32 %v3140, 1.442695
        %v3365 = vpow.pop %v3364
        %v3366 = vmul.f32 %v3141, 1.442695
        %v3367 = vpow.pop %v3366
        %v3368 = vmul.f32 %v3142, 1.442695
        %v3369 = vpow.pop %v3368
        %v3370 = vmul.f32 %v3143, 1.442695
        %v3371 = vpow.pop %v3370
        %v3372 = vmul.f32 %v3144, 1.442695
        %v3373 = vpow.pop %v3372
        %v3374 = vmul.f32 %v3145, 1.442695
        %v3375 = vpow.pop %v3374
        %v3376 = vmul.f32 %v3146, 1.442695
        %v3377 = vpow.pop %v3376
        %v3378 = vmul.f32 %v3147, 1.442695
        %v3379 = vpow.pop %v3378
        %v3380 = vmul.f32 %v3148, 1.442695
        %v3381 = vpow.pop %v3380
        %v3382 = vmul.f32 %v3149, 1.442695
        %v3383 = vpow.pop %v3382
        %v3384 = vmul.f32 %v3150, 1.442695
        %v3385 = vpow.pop %v3384
        %v3386 = vmul.f32 %v3151, 1.442695
        %v3387 = vpow.pop %v3386
        %v3388 = vmul.f32 %v3152, 1.442695
        %v3389 = vpow.pop %v3388
        %v3390 = vmul.f32 %v3153, 1.442695
        %v3391 = vpow.pop %v3390
        %v3392 = vmul.f32 %v3154, 1.442695
        %v3393 = vpow.pop %v3392
        %v3394 = vmul.f32 %v3155, 1.442695
        %v3395 = vpow.pop %v3394
        %v3396 = vmul.f32 %v3156, 1.442695
        %v3397 = vpow.pop %v3396
        %v3398 = vmul.f32 %v3157, 1.442695
        %v3399 = vpow.pop %v3398
        %v3400 = vmul.f32 %v3158, 1.442695
        %v3401 = vpow.pop %v3400
        %v3402 = vmul.f32 %v3159, 1.442695
        %v3403 = vpow.pop %v3402
        %v3404 = vmul.f32 %v3160, 1.442695
        %v3405 = vpow.pop %v3404
        %v3406 = vmul.f32 %v3161, 1.442695
        %v3407 = vpow.pop %v3406
        %v3408 = vmul.f32 %v3162, 1.442695
        %v3409 = vpow.pop %v3408
        %v3410 = vmul.f32 %v3163, 1.442695
        %v3411 = vpow.pop %v3410
        %v3412 = vmul.f32 %v3164, 1.442695
        %v3413 = vpow.pop %v3412
        %v3414 = vmul.f32 %v3165, 1.442695
        %v3415 = vpow.pop %v3414
        %v3416 = vmul.f32 %v3166, 1.442695
        %v3417 = vpow.pop %v3416
        %v3418 = vmul.f32 %v3167, 1.442695
        %v3419 = vpow.pop %v3418
        %v3420 = vmul.f32 %v3168, 1.442695
        %v3421 = vpow.pop %v3420
        %v3422 = vmul.f32 %v3169, 1.442695
        %v3423 = vpow.pop %v3422
        %v3424 = vmul.f32 %v3170, 1.442695
        %v3425 = vpow.pop %v3424
        %v3426 = vmul.f32 %v3171, 1.442695
        %v3427 = vpow.pop %v3426
        %v3428 = vadd.f32 %v3173, 1.0
        %v3429 = vadd.f32 %v3175, 1.0
        %v3430 = vadd.f32 %v3177, 1.0
        %v3431 = vadd.f32 %v3179, 1.0
        %v3432 = vadd.f32 %v3181, 1.0
        %v3433 = vadd.f32 %v3183, 1.0
        %v3434 = vadd.f32 %v3185, 1.0
        %v3435 = vadd.f32 %v3187, 1.0
        %v3436 = vadd.f32 %v3189, 1.0
        %v3437 = vadd.f32 %v3191, 1.0
        %v3438 = vadd.f32 %v3193, 1.0
        %v3439 = vadd.f32 %v3195, 1.0
        %v3440 = vadd.f32 %v3197, 1.0
        %v3441 = vadd.f32 %v3199, 1.0
        %v3442 = vadd.f32 %v3201, 1.0
        %v3443 = vadd.f32 %v3203, 1.0
        %v3444 = vadd.f32 %v3205, 1.0
        %v3445 = vadd.f32 %v3207, 1.0
        %v3446 = vadd.f32 %v3209, 1.0
        %v3447 = vadd.f32 %v3211, 1.0
        %v3448 = vadd.f32 %v3213, 1.0
        %v3449 = vadd.f32 %v3215, 1.0
        %v3450 = vadd.f32 %v3217, 1.0
        %v3451 = vadd.f32 %v3219, 1.0
        %v3452 = vadd.f32 %v3221, 1.0
        %v3453 = vadd.f32 %v3223, 1.0
        %v3454 = vadd.f32 %v3225, 1.0
        %v3455 = vadd.f32 %v3227, 1.0
        %v3456 = vadd.f32 %v3229, 1.0
        %v3457 = vadd.f32 %v3231, 1.0
        %v3458 = vadd.f32 %v3233, 1.0
        %v3459 = vadd.f32 %v3235, 1.0
        %v3460 = vadd.f32 %v3237, 1.0
        %v3461 = vadd.f32 %v3239, 1.0
        %v3462 = vadd.f32 %v3241, 1.0
        %v3463 = vadd.f32 %v3243, 1.0
        %v3464 = vadd.f32 %v3245, 1.0
        %v3465 = vadd.f32 %v3247, 1.0
        %v3466 = vadd.f32 %v3249, 1.0
        %v3467 = vadd.f32 %v3251, 1.0
        %v3468 = vadd.f32 %v3253, 1.0
        %v3469 = vadd.f32 %v3255, 1.0
        %v3470 = vadd.f32 %v3257, 1.0
        %v3471 = vadd.f32 %v3259, 1.0
        %v3472 = vadd.f32 %v3261, 1.0
        %v3473 = vadd.f32 %v3263, 1.0
        %v3474 = vadd.f32 %v3265, 1.0
        %v3475 = vadd.f32 %v3267, 1.0
        %v3476 = vadd.f32 %v3269, 1.0
        %v3477 = vadd.f32 %v3271, 1.0
        %v3478 = vadd.f32 %v3273, 1.0
        %v3479 = vadd.f32 %v3275, 1.0
        %v3480 = vadd.f32 %v3277, 1.0
        %v3481 = vadd.f32 %v3279, 1.0
        %v3482 = vadd.f32 %v3281, 1.0
        %v3483 = vadd.f32 %v3283, 1.0
        %v3484 = vadd.f32 %v3285, 1.0
        %v3485 = vadd.f32 %v3287, 1.0
        %v3486 = vadd.f32 %v3289, 1.0
        %v3487 = vadd.f32 %v3291, 1.0
        %v3488 = vadd.f32 %v3293, 1.0
        %v3489 = vadd.f32 %v3295, 1.0
        %v3490 = vadd.f32 %v3297, 1.0
        %v3491 = vadd.f32 %v3299, 1.0
        %v3492 = vadd.f32 %v3301, 1.0
        %v3493 = vadd.f32 %v3303, 1.0
        %v3494 = vadd.f32 %v3305, 1.0
        %v3495 = vadd.f32 %v3307, 1.0
        %v3496 = vadd.f32 %v3309, 1.0
        %v3497 = vadd.f32 %v3311, 1.0
        %v3498 = vadd.f32 %v3313, 1.0
        %v3499 = vadd.f32 %v3315, 1.0
        %v3500 = vadd.f32 %v3317, 1.0
        %v3501 = vadd.f32 %v3319, 1.0
        %v3502 = vadd.f32 %v3321, 1.0
        %v3503 = vadd.f32 %v3323, 1.0
        %v3504 = vadd.f32 %v3325, 1.0
        %v3505 = vadd.f32 %v3327, 1.0
        %v3506 = vadd.f32 %v3329, 1.0
        %v3507 = vadd.f32 %v3331, 1.0
        %v3508 = vadd.f32 %v3333, 1.0
        %v3509 = vadd.f32 %v3335, 1.0
        %v3510 = vadd.f32 %v3337, 1.0
        %v3511 = vadd.f32 %v3339, 1.0
        %v3512 = vadd.f32 %v3341, 1.0
        %v3513 = vadd.f32 %v3343, 1.0
        %v3514 = vadd.f32 %v3345, 1.0
        %v3515 = vadd.f32 %v3347, 1.0
        %v3516 = vadd.f32 %v3349, 1.0
        %v3517 = vadd.f32 %v3351, 1.0
        %v3518 = vadd.f32 %v3353, 1.0
        %v3519 = vadd.f32 %v3355, 1.0
        %v3520 = vadd.f32 %v3357, 1.0
        %v3521 = vadd.f32 %v3359, 1.0
        %v3522 = vadd.f32 %v3361, 1.0
        %v3523 = vadd.f32 %v3363, 1.0
        %v3524 = vadd.f32 %v3365, 1.0
        %v3525 = vadd.f32 %v3367, 1.0
        %v3526 = vadd.f32 %v3369, 1.0
        %v3527 = vadd.f32 %v3371, 1.0
        %v3528 = vadd.f32 %v3373, 1.0
        %v3529 = vadd.f32 %v3375, 1.0
        %v3530 = vadd.f32 %v3377, 1.0
        %v3531 = vadd.f32 %v3379, 1.0
        %v3532 = vadd.f32 %v3381, 1.0
        %v3533 = vadd.f32 %v3383, 1.0
        %v3534 = vadd.f32 %v3385, 1.0
        %v3535 = vadd.f32 %v3387, 1.0
        %v3536 = vadd.f32 %v3389, 1.0
        %v3537 = vadd.f32 %v3391, 1.0
        %v3538 = vadd.f32 %v3393, 1.0
        %v3539 = vadd.f32 %v3395, 1.0
        %v3540 = vadd.f32 %v3397, 1.0
        %v3541 = vadd.f32 %v3399, 1.0
        %v3542 = vadd.f32 %v3401, 1.0
        %v3543 = vadd.f32 %v3403, 1.0
        %v3544 = vadd.f32 %v3405, 1.0
        %v3545 = vadd.f32 %v3407, 1.0
        %v3546 = vadd.f32 %v3409, 1.0
        %v3547 = vadd.f32 %v3411, 1.0
        %v3548 = vadd.f32 %v3413, 1.0
        %v3549 = vadd.f32 %v3415, 1.0
        %v3550 = vadd.f32 %v3417, 1.0
        %v3551 = vadd.f32 %v3419, 1.0
        %v3552 = vadd.f32 %v3421, 1.0
        %v3553 = vadd.f32 %v3423, 1.0
        %v3554 = vadd.f32 %v3425, 1.0
        %v3555 = vadd.f32 %v3427, 1.0
        %v3556 = vrcp.pop %v3428
        %v3557 = vrcp.pop %v3429
        %v3558 = vrcp.pop %v3430
        %v3559 = vrcp.pop %v3431
        %v3560 = vrcp.pop %v3432
        %v3561 = vrcp.pop %v3433
        %v3562 = vrcp.pop %v3434
        %v3563 = vrcp.pop %v3435
        %v3564 = vrcp.pop %v3436
        %v3565 = vrcp.pop %v3437
        %v3566 = vrcp.pop %v3438
        %v3567 = vrcp.pop %v3439
        %v3568 = vrcp.pop %v3440
        %v3569 = vrcp.pop %v3441
        %v3570 = vrcp.pop %v3442
        %v3571 = vrcp.pop %v3443
        %v3572 = vrcp.pop %v3444
        %v3573 = vrcp.pop %v3445
        %v3574 = vrcp.pop %v3446
        %v3575 = vrcp.pop %v3447
        %v3576 = vrcp.pop %v3448
        %v3577 = vrcp.pop %v3449
        %v3578 = vrcp.pop %v3450
        %v3579 = vrcp.pop %v3451
        %v3580 = vrcp.pop %v3452
        %v3581 = vrcp.pop %v3453
        %v3582 = vrcp.pop %v3454
        %v3583 = vrcp.pop %v3455
        %v3584 = vrcp.pop %v3456
        %v3585 = vrcp.pop %v3457
        %v3586 = vrcp.pop %v3458
        %v3587 = vrcp.pop %v3459
        %v3588 = vrcp.pop %v3460
        %v3589 = vrcp.pop %v3461
        %v3590 = vrcp.pop %v3462
        %v3591 = vrcp.pop %v3463
        %v3592 = vrcp.pop %v3464
        %v3593 = vrcp.pop %v3465
        %v3594 = vrcp.pop %v3466
        %v3595 = vrcp.pop %v3467
        %v3596 = vrcp.pop %v3468
        %v3597 = vrcp.pop %v3469
        %v3598 = vrcp.pop %v3470
        %v3599 = vrcp.pop %v3471
        %v3600 = vrcp.pop %v3472
        %v3601 = vrcp.pop %v3473
        %v3602 = vrcp.pop %v3474
        %v3603 = vrcp.pop %v3475
        %v3604 = vrcp.pop %v3476
        %v3605 = vrcp.pop %v3477
        %v3606 = vrcp.pop %v3478
        %v3607 = vrcp.pop %v3479
        %v3608 = vrcp.pop %v3480
        %v3609 = vrcp.pop %v3481
        %v3610 = vrcp.pop %v3482
        %v3611 = vrcp.pop %v3483
        %v3612 = vrcp.pop %v3484
        %v3613 = vrcp.pop %v3485
        %v3614 = vrcp.pop %v3486
        %v3615 = vrcp.pop %v3487
        %v3616 = vrcp.pop %v3488
        %v3617 = vrcp.pop %v3489
        %v3618 = vrcp.pop %v3490
        %v3619 = vrcp.pop %v3491
        %v3620 = vrcp.pop %v3492
        %v3621 = vrcp.pop %v3493
        %v3622 = vrcp.pop %v3494
        %v3623 = vrcp.pop %v3495
        %v3624 = vrcp.pop %v3496
        %v3625 = vrcp.pop %v3497
        %v3626 = vrcp.pop %v3498
        %v3627 = vrcp.pop %v3499
        %v3628 = vrcp.pop %v3500
        %v3629 = vrcp.pop %v3501
        %v3630 = vrcp.pop %v3502
        %v3631 = vrcp.pop %v3503
        %v3632 = vrcp.pop %v3504
        %v3633 = vrcp.pop %v3505
        %v3634 = vrcp.pop %v3506
        %v3635 = vrcp.pop %v3507
        %v3636 = vrcp.pop %v3508
        %v3637 = vrcp.pop %v3509
        %v3638 = vrcp.pop %v3510
        %v3639 = vrcp.pop %v3511
        %v3640 = vrcp.pop %v3512
        %v3641 = vrcp.pop %v3513
        %v3642 = vrcp.pop %v3514
        %v3643 = vrcp.pop %v3515
        %v3644 = vrcp.pop %v3516
        %v3645 = vrcp.pop %v3517
        %v3646 = vrcp.pop %v3518
        %v3647 = vrcp.pop %v3519
        %v3648 = vrcp.pop %v3520
        %v3649 = vrcp.pop %v3521
        %v3650 = vrcp.pop %v3522
        %v3651 = vrcp.pop %v3523
        %v3652 = vrcp.pop %v3524
        %v3653 = vrcp.pop %v3525
        %v3654 = vrcp.pop %v3526
        %v3655 = vrcp.pop %v3527
        %v3656 = vrcp.pop %v3528
        %v3657 = vrcp.pop %v3529
        %v3658 = vrcp.pop %v3530
        %v3659 = vrcp.pop %v3531
        %v3660 = vrcp.pop %v3532
        %v3661 = vrcp.pop %v3533
        %v3662 = vrcp.pop %v3534
        %v3663 = vrcp.pop %v3535
        %v3664 = vrcp.pop %v3536
        %v3665 = vrcp.pop %v3537
        %v3666 = vrcp.pop %v3538
        %v3667 = vrcp.pop %v3539
        %v3668 = vrcp.pop %v3540
        %v3669 = vrcp.pop %v3541
        %v3670 = vrcp.pop %v3542
        %v3671 = vrcp.pop %v3543
        %v3672 = vrcp.pop %v3544
        %v3673 = vrcp.pop %v3545
        %v3674 = vrcp.pop %v3546
        %v3675 = vrcp.pop %v3547
        %v3676 = vrcp.pop %v3548
        %v3677 = vrcp.pop %v3549
        %v3678 = vrcp.pop %v3550
        %v3679 = vrcp.pop %v3551
        %v3680 = vrcp.pop %v3552
        %v3681 = vrcp.pop %v3553
        %v3682 = vrcp.pop %v3554
        %v3683 = vrcp.pop %v3555
        %v3684 = vadd.f32 %v2660, 1.0
        %v3685 = vadd.f32 %v2661, 1.0
        %v3686 = vadd.f32 %v2662, 1.0
        %v3687 = vadd.f32 %v2663, 1.0
        %v3688 = vadd.f32 %v2664, 1.0
        %v3689 = vadd.f32 %v2665, 1.0
        %v3690 = vadd.f32 %v2666, 1.0
        %v3691 = vadd.f32 %v2667, 1.0
        %v3692 = vadd.f32 %v2668, 1.0
        %v3693 = vadd.f32 %v2669, 1.0
        %v3694 = vadd.f32 %v2670, 1.0
        %v3695 = vadd.f32 %v2671, 1.0
        %v3696 = vadd.f32 %v2672, 1.0
        %v3697 = vadd.f32 %v2673, 1.0
        %v3698 = vadd.f32 %v2674, 1.0
        %v3699 = vadd.f32 %v2675, 1.0
        %v3700 = vadd.f32 %v2676, 1.0
        %v3701 = vadd.f32 %v2677, 1.0
        %v3702 = vadd.f32 %v2678, 1.0
        %v3703 = vadd.f32 %v2679, 1.0
        %v3704 = vadd.f32 %v2680, 1.0
        %v3705 = vadd.f32 %v2681, 1.0
        %v3706 = vadd.f32 %v2682, 1.0
        %v3707 = vadd.f32 %v2683, 1.0
        %v3708 = vadd.f32 %v2684, 1.0
        %v3709 = vadd.f32 %v2685, 1.0
        %v3710 = vadd.f32 %v2686, 1.0
        %v3711 = vadd.f32 %v2687, 1.0
        %v3712 = vadd.f32 %v2688, 1.0
        %v3713 = vadd.f32 %v2689, 1.0
        %v3714 = vadd.f32 %v2690, 1.0
        %v3715 = vadd.f32 %v2691, 1.0
        %v3716 = vadd.f32 %v2692, 1.0
        %v3717 = vadd.f32 %v2693, 1.0
        %v3718 = vadd.f32 %v2694, 1.0
        %v3719 = vadd.f32 %v2695, 1.0
        %v3720 = vadd.f32 %v2696, 1.0
        %v3721 = vadd.f32 %v2697, 1.0
        %v3722 = vadd.f32 %v2698, 1.0
        %v3723 = vadd.f32 %v2699, 1.0
        %v3724 = vadd.f32 %v2700, 1.0
        %v3725 = vadd.f32 %v2701, 1.0
        %v3726 = vadd.f32 %v2702, 1.0
        %v3727 = vadd.f32 %v2703, 1.0
        %v3728 = vadd.f32 %v2704, 1.0
        %v3729 = vadd.f32 %v2705, 1.0
        %v3730 = vadd.f32 %v2706, 1.0
        %v3731 = vadd.f32 %v2707, 1.0
        %v3732 = vadd.f32 %v2708, 1.0
        %v3733 = vadd.f32 %v2709, 1.0
        %v3734 = vadd.f32 %v2710, 1.0
        %v3735 = vadd.f32 %v2711, 1.0
        %v3736 = vadd.f32 %v2712, 1.0
        %v3737 = vadd.f32 %v2713, 1.0
        %v3738 = vadd.f32 %v2714, 1.0
        %v3739 = vadd.f32 %v2715, 1.0
        %v3740 = vadd.f32 %v2716, 1.0
        %v3741 = vadd.f32 %v2717, 1.0
        %v3742 = vadd.f32 %v2718, 1.0
        %v3743 = vadd.f32 %v2719, 1.0
        %v3744 = vadd.f32 %v2720, 1.0
        %v3745 = vadd.f32 %v2721, 1.0
        %v3746 = vadd.f32 %v2722, 1.0
        %v3747 = vadd.f32 %v2723, 1.0
        %v3748 = vadd.f32 %v2724, 1.0
        %v3749 = vadd.f32 %v2725, 1.0
        %v3750 = vadd.f32 %v2726, 1.0
        %v3751 = vadd.f32 %v2727, 1.0
        %v3752 = vadd.f32 %v2728, 1.0
        %v3753 = vadd.f32 %v2729, 1.0
        %v3754 = vadd.f32 %v2730, 1.0
        %v3755 = vadd.f32 %v2731, 1.0
        %v3756 = vadd.f32 %v2732, 1.0
        %v3757 = vadd.f32 %v2733, 1.0
        %v3758 = vadd.f32 %v2734, 1.0
        %v3759 = vadd.f32 %v2735, 1.0
        %v3760 = vadd.f32 %v2736, 1.0
        %v3761 = vadd.f32 %v2737, 1.0
        %v3762 = vadd.f32 %v2738, 1.0
        %v3763 = vadd.f32 %v2739, 1.0
        %v3764 = vadd.f32 %v2740, 1.0
        %v3765 = vadd.f32 %v2741, 1.0
        %v3766 = vadd.f32 %v2742, 1.0
        %v3767 = vadd.f32 %v2743, 1.0
        %v3768 = vadd.f32 %v2744, 1.0
        %v3769 = vadd.f32 %v2745, 1.0
        %v3770 = vadd.f32 %v2746, 1.0
        %v3771 = vadd.f32 %v2747, 1.0
        %v3772 = vadd.f32 %v2748, 1.0
        %v3773 = vadd.f32 %v2749, 1.0
        %v3774 = vadd.f32 %v2750, 1.0
        %v3775 = vadd.f32 %v2751, 1.0
        %v3776 = vadd.f32 %v2752, 1.0
        %v3777 = vadd.f32 %v2753, 1.0
        %v3778 = vadd.f32 %v2754, 1.0
        %v3779 = vadd.f32 %v2755, 1.0
        %v3780 = vadd.f32 %v2756, 1.0
        %v3781 = vadd.f32 %v2757, 1.0
        %v3782 = vadd.f32 %v2758, 1.0
        %v3783 = vadd.f32 %v2759, 1.0
        %v3784 = vadd.f32 %v2760, 1.0
        %v3785 = vadd.f32 %v2761, 1.0
        %v3786 = vadd.f32 %v2762, 1.0
        %v3787 = vadd.f32 %v2763, 1.0
        %v3788 = vadd.f32 %v2764, 1.0
        %v3789 = vadd.f32 %v2765, 1.0
        %v3790 = vadd.f32 %v2766, 1.0
        %v3791 = vadd.f32 %v2767, 1.0
        %v3792 = vadd.f32 %v2768, 1.0
        %v3793 = vadd.f32 %v2769, 1.0
        %v3794 = vadd.f32 %v2770, 1.0
        %v3795 = vadd.f32 %v2771, 1.0
        %v3796 = vadd.f32 %v2772, 1.0
        %v3797 = vadd.f32 %v2773, 1.0
        %v3798 = vadd.f32 %v2774, 1.0
        %v3799 = vadd.f32 %v2775, 1.0
        %v3800 = vadd.f32 %v2776, 1.0
        %v3801 = vadd.f32 %v2777, 1.0
        %v3802 = vadd.f32 %v2778, 1.0
        %v3803 = vadd.f32 %v2779, 1.0
        %v3804 = vadd.f32 %v2780, 1.0
        %v3805 = vadd.f32 %v2781, 1.0
        %v3806 = vadd.f32 %v2782, 1.0
        %v3807 = vadd.f32 %v2783, 1.0
        %v3808 = vadd.f32 %v2784, 1.0
        %v3809 = vadd.f32 %v2785, 1.0
        %v3810 = vadd.f32 %v2786, 1.0
        %v3811 = vadd.f32 %v2787, 1.0
        %v3812 = vlog2.pop %v3684
        %v3813 = vmul.f32 %v3812, 0.6931472
        %v3814 = vlog2.pop %v3685
        %v3815 = vmul.f32 %v3814, 0.6931472
        %v3816 = vlog2.pop %v3686
        %v3817 = vmul.f32 %v3816, 0.6931472
        %v3818 = vlog2.pop %v3687
        %v3819 = vmul.f32 %v3818, 0.6931472
        %v3820 = vlog2.pop %v3688
        %v3821 = vmul.f32 %v3820, 0.6931472
        %v3822 = vlog2.pop %v3689
        %v3823 = vmul.f32 %v3822, 0.6931472
        %v3824 = vlog2.pop %v3690
        %v3825 = vmul.f32 %v3824, 0.6931472
        %v3826 = vlog2.pop %v3691
        %v3827 = vmul.f32 %v3826, 0.6931472
        %v3828 = vlog2.pop %v3692
        %v3829 = vmul.f32 %v3828, 0.6931472
        %v3830 = vlog2.pop %v3693
        %v3831 = vmul.f32 %v3830, 0.6931472
        %v3832 = vlog2.pop %v3694
        %v3833 = vmul.f32 %v3832, 0.6931472
        %v3834 = vlog2.pop %v3695
        %v3835 = vmul.f32 %v3834, 0.6931472
        %v3836 = vlog2.pop %v3696
        %v3837 = vmul.f32 %v3836, 0.6931472
        %v3838 = vlog2.pop %v3697
        %v3839 = vmul.f32 %v3838, 0.6931472
        %v3840 = vlog2.pop %v3698
        %v3841 = vmul.f32 %v3840, 0.6931472
        %v3842 = vlog2.pop %v3699
        %v3843 = vmul.f32 %v3842, 0.6931472
        %v3844 = vlog2.pop %v3700
        %v3845 = vmul.f32 %v3844, 0.6931472
        %v3846 = vlog2.pop %v3701
        %v3847 = vmul.f32 %v3846, 0.6931472
        %v3848 = vlog2.pop %v3702
        %v3849 = vmul.f32 %v3848, 0.6931472
        %v3850 = vlog2.pop %v3703
        %v3851 = vmul.f32 %v3850, 0.6931472
        %v3852 = vlog2.pop %v3704
        %v3853 = vmul.f32 %v3852, 0.6931472
        %v3854 = vlog2.pop %v3705
        %v3855 = vmul.f32 %v3854, 0.6931472
        %v3856 = vlog2.pop %v3706
        %v3857 = vmul.f32 %v3856, 0.6931472
        %v3858 = vlog2.pop %v3707
        %v3859 = vmul.f32 %v3858, 0.6931472
        %v3860 = vlog2.pop %v3708
        %v3861 = vmul.f32 %v3860, 0.6931472
        %v3862 = vlog2.pop %v3709
        %v3863 = vmul.f32 %v3862, 0.6931472
        %v3864 = vlog2.pop %v3710
        %v3865 = vmul.f32 %v3864, 0.6931472
        %v3866 = vlog2.pop %v3711
        %v3867 = vmul.f32 %v3866, 0.6931472
        %v3868 = vlog2.pop %v3712
        %v3869 = vmul.f32 %v3868, 0.6931472
        %v3870 = vlog2.pop %v3713
        %v3871 = vmul.f32 %v3870, 0.6931472
        %v3872 = vlog2.pop %v3714
        %v3873 = vmul.f32 %v3872, 0.6931472
        %v3874 = vlog2.pop %v3715
        %v3875 = vmul.f32 %v3874, 0.6931472
        %v3876 = vlog2.pop %v3716
        %v3877 = vmul.f32 %v3876, 0.6931472
        %v3878 = vlog2.pop %v3717
        %v3879 = vmul.f32 %v3878, 0.6931472
        %v3880 = vlog2.pop %v3718
        %v3881 = vmul.f32 %v3880, 0.6931472
        %v3882 = vlog2.pop %v3719
        %v3883 = vmul.f32 %v3882, 0.6931472
        %v3884 = vlog2.pop %v3720
        %v3885 = vmul.f32 %v3884, 0.6931472
        %v3886 = vlog2.pop %v3721
        %v3887 = vmul.f32 %v3886, 0.6931472
        %v3888 = vlog2.pop %v3722
        %v3889 = vmul.f32 %v3888, 0.6931472
        %v3890 = vlog2.pop %v3723
        %v3891 = vmul.f32 %v3890, 0.6931472
        %v3892 = vlog2.pop %v3724
        %v3893 = vmul.f32 %v3892, 0.6931472
        %v3894 = vlog2.pop %v3725
        %v3895 = vmul.f32 %v3894, 0.6931472
        %v3896 = vlog2.pop %v3726
        %v3897 = vmul.f32 %v3896, 0.6931472
        %v3898 = vlog2.pop %v3727
        %v3899 = vmul.f32 %v3898, 0.6931472
        %v3900 = vlog2.pop %v3728
        %v3901 = vmul.f32 %v3900, 0.6931472
        %v3902 = vlog2.pop %v3729
        %v3903 = vmul.f32 %v3902, 0.6931472
        %v3904 = vlog2.pop %v3730
        %v3905 = vmul.f32 %v3904, 0.6931472
        %v3906 = vlog2.pop %v3731
        %v3907 = vmul.f32 %v3906, 0.6931472
        %v3908 = vlog2.pop %v3732
        %v3909 = vmul.f32 %v3908, 0.6931472
        %v3910 = vlog2.pop %v3733
        %v3911 = vmul.f32 %v3910, 0.6931472
        %v3912 = vlog2.pop %v3734
        %v3913 = vmul.f32 %v3912, 0.6931472
        %v3914 = vlog2.pop %v3735
        %v3915 = vmul.f32 %v3914, 0.6931472
        %v3916 = vlog2.pop %v3736
        %v3917 = vmul.f32 %v3916, 0.6931472
        %v3918 = vlog2.pop %v3737
        %v3919 = vmul.f32 %v3918, 0.6931472
        %v3920 = vlog2.pop %v3738
        %v3921 = vmul.f32 %v3920, 0.6931472
        %v3922 = vlog2.pop %v3739
        %v3923 = vmul.f32 %v3922, 0.6931472
        %v3924 = vlog2.pop %v3740
        %v3925 = vmul.f32 %v3924, 0.6931472
        %v3926 = vlog2.pop %v3741
        %v3927 = vmul.f32 %v3926, 0.6931472
        %v3928 = vlog2.pop %v3742
        %v3929 = vmul.f32 %v3928, 0.6931472
        %v3930 = vlog2.pop %v3743
        %v3931 = vmul.f32 %v3930, 0.6931472
        %v3932 = vlog2.pop %v3744
        %v3933 = vmul.f32 %v3932, 0.6931472
        %v3934 = vlog2.pop %v3745
        %v3935 = vmul.f32 %v3934, 0.6931472
        %v3936 = vlog2.pop %v3746
        %v3937 = vmul.f32 %v3936, 0.6931472
        %v3938 = vlog2.pop %v3747
        %v3939 = vmul.f32 %v3938, 0.6931472
        %v3940 = vlog2.pop %v3748
        %v3941 = vmul.f32 %v3940, 0.6931472
        %v3942 = vlog2.pop %v3749
        %v3943 = vmul.f32 %v3942, 0.6931472
        %v3944 = vlog2.pop %v3750
        %v3945 = vmul.f32 %v3944, 0.6931472
        %v3946 = vlog2.pop %v3751
        %v3947 = vmul.f32 %v3946, 0.6931472
        %v3948 = vlog2.pop %v3752
        %v3949 = vmul.f32 %v3948, 0.6931472
        %v3950 = vlog2.pop %v3753
        %v3951 = vmul.f32 %v3950, 0.6931472
        %v3952 = vlog2.pop %v3754
        %v3953 = vmul.f32 %v3952, 0.6931472
        %v3954 = vlog2.pop %v3755
        %v3955 = vmul.f32 %v3954, 0.6931472
        %v3956 = vlog2.pop %v3756
        %v3957 = vmul.f32 %v3956, 0.6931472
        %v3958 = vlog2.pop %v3757
        %v3959 = vmul.f32 %v3958, 0.6931472
        %v3960 = vlog2.pop %v3758
        %v3961 = vmul.f32 %v3960, 0.6931472
        %v3962 = vlog2.pop %v3759
        %v3963 = vmul.f32 %v3962, 0.6931472
        %v3964 = vlog2.pop %v3760
        %v3965 = vmul.f32 %v3964, 0.6931472
        %v3966 = vlog2.pop %v3761
        %v3967 = vmul.f32 %v3966, 0.6931472
        %v3968 = vlog2.pop %v3762
        %v3969 = vmul.f32 %v3968, 0.6931472
        %v3970 = vlog2.pop %v3763
        %v3971 = vmul.f32 %v3970, 0.6931472
        %v3972 = vlog2.pop %v3764
        %v3973 = vmul.f32 %v3972, 0.6931472
        %v3974 = vlog2.pop %v3765
        %v3975 = vmul.f32 %v3974, 0.6931472
        %v3976 = vlog2.pop %v3766
        %v3977 = vmul.f32 %v3976, 0.6931472
        %v3978 = vlog2.pop %v3767
        %v3979 = vmul.f32 %v3978, 0.6931472
        %v3980 = vlog2.pop %v3768
        %v3981 = vmul.f32 %v3980, 0.6931472
        %v3982 = vlog2.pop %v3769
        %v3983 = vmul.f32 %v3982, 0.6931472
        %v3984 = vlog2.pop %v3770
        %v3985 = vmul.f32 %v3984, 0.6931472
        %v3986 = vlog2.pop %v3771
        %v3987 = vmul.f32 %v3986, 0.6931472
        %v3988 = vlog2.pop %v3772
        %v3989 = vmul.f32 %v3988, 0.6931472
        %v3990 = vlog2.pop %v3773
        %v3991 = vmul.f32 %v3990, 0.6931472
        %v3992 = vlog2.pop %v3774
        %v3993 = vmul.f32 %v3992, 0.6931472
        %v3994 = vlog2.pop %v3775
        %v3995 = vmul.f32 %v3994, 0.6931472
        %v3996 = vlog2.pop %v3776
        %v3997 = vmul.f32 %v3996, 0.6931472
        %v3998 = vlog2.pop %v3777
        %v3999 = vmul.f32 %v3998, 0.6931472
        %v4000 = vlog2.pop %v3778
        %v4001 = vmul.f32 %v4000, 0.6931472
        %v4002 = vlog2.pop %v3779
        %v4003 = vmul.f32 %v4002, 0.6931472
        %v4004 = vlog2.pop %v3780
        %v4005 = vmul.f32 %v4004, 0.6931472
        %v4006 = vlog2.pop %v3781
        %v4007 = vmul.f32 %v4006, 0.6931472
        %v4008 = vlog2.pop %v3782
        %v4009 = vmul.f32 %v4008, 0.6931472
        %v4010 = vlog2.pop %v3783
        %v4011 = vmul.f32 %v4010, 0.6931472
        %v4012 = vlog2.pop %v3784
        %v4013 = vmul.f32 %v4012, 0.6931472
        %v4014 = vlog2.pop %v3785
        %v4015 = vmul.f32 %v4014, 0.6931472
        %v4016 = vlog2.pop %v3786
        %v4017 = vmul.f32 %v4016, 0.6931472
        %v4018 = vlog2.pop %v3787
        %v4019 = vmul.f32 %v4018, 0.6931472
        %v4020 = vlog2.pop %v3788
        %v4021 = vmul.f32 %v4020, 0.6931472
        %v4022 = vlog2.pop %v3789
        %v4023 = vmul.f32 %v4022, 0.6931472
        %v4024 = vlog2.pop %v3790
        %v4025 = vmul.f32 %v4024, 0.6931472
        %v4026 = vlog2.pop %v3791
        %v4027 = vmul.f32 %v4026, 0.6931472
        %v4028 = vlog2.pop %v3792
        %v4029 = vmul.f32 %v4028, 0.6931472
        %v4030 = vlog2.pop %v3793
        %v4031 = vmul.f32 %v4030, 0.6931472
        %v4032 = vlog2.pop %v3794
        %v4033 = vmul.f32 %v4032, 0.6931472
        %v4034 = vlog2.pop %v3795
        %v4035 = vmul.f32 %v4034, 0.6931472
        %v4036 = vlog2.pop %v3796
        %v4037 = vmul.f32 %v4036, 0.6931472
        %v4038 = vlog2.pop %v3797
        %v4039 = vmul.f32 %v4038, 0.6931472
        %v4040 = vlog2.pop %v3798
        %v4041 = vmul.f32 %v4040, 0.6931472
        %v4042 = vlog2.pop %v3799
        %v4043 = vmul.f32 %v4042, 0.6931472
        %v4044 = vlog2.pop %v3800
        %v4045 = vmul.f32 %v4044, 0.6931472
        %v4046 = vlog2.pop %v3801
        %v4047 = vmul.f32 %v4046, 0.6931472
        %v4048 = vlog2.pop %v3802
        %v4049 = vmul.f32 %v4048, 0.6931472
        %v4050 = vlog2.pop %v3803
        %v4051 = vmul.f32 %v4050, 0.6931472
        %v4052 = vlog2.pop %v3804
        %v4053 = vmul.f32 %v4052, 0.6931472
        %v4054 = vlog2.pop %v3805
        %v4055 = vmul.f32 %v4054, 0.6931472
        %v4056 = vlog2.pop %v3806
        %v4057 = vmul.f32 %v4056, 0.6931472
        %v4058 = vlog2.pop %v3807
        %v4059 = vmul.f32 %v4058, 0.6931472
        %v4060 = vlog2.pop %v3808
        %v4061 = vmul.f32 %v4060, 0.6931472
        %v4062 = vlog2.pop %v3809
        %v4063 = vmul.f32 %v4062, 0.6931472
        %v4064 = vlog2.pop %v3810
        %v4065 = vmul.f32 %v4064, 0.6931472
        %v4066 = vlog2.pop %v3811
        %v4067 = vmul.f32 %v4066, 0.6931472
        %v4068 = vmul.f32 %v3556, 0.63576
        %v4069 = vmul.f32 %v3557, 0.63576
        %v4070 = vmul.f32 %v3558, 0.63576
        %v4071 = vmul.f32 %v3559, 0.63576
        %v4072 = vmul.f32 %v3560, 0.63576
        %v4073 = vmul.f32 %v3561, 0.63576
        %v4074 = vmul.f32 %v3562, 0.63576
        %v4075 = vmul.f32 %v3563, 0.63576
        %v4076 = vmul.f32 %v3564, 0.63576
        %v4077 = vmul.f32 %v3565, 0.63576
        %v4078 = vmul.f32 %v3566, 0.63576
        %v4079 = vmul.f32 %v3567, 0.63576
        %v4080 = vmul.f32 %v3568, 0.63576
        %v4081 = vmul.f32 %v3569, 0.63576
        %v4082 = vmul.f32 %v3570, 0.63576
        %v4083 = vmul.f32 %v3571, 0.63576
        %v4084 = vmul.f32 %v3572, 0.63576
        %v4085 = vmul.f32 %v3573, 0.63576
        %v4086 = vmul.f32 %v3574, 0.63576
        %v4087 = vmul.f32 %v3575, 0.63576
        %v4088 = vmul.f32 %v3576, 0.63576
        %v4089 = vmul.f32 %v3577, 0.63576
        %v4090 = vmul.f32 %v3578, 0.63576
        %v4091 = vmul.f32 %v3579, 0.63576
        %v4092 = vmul.f32 %v3580, 0.63576
        %v4093 = vmul.f32 %v3581, 0.63576
        %v4094 = vmul.f32 %v3582, 0.63576
        %v4095 = vmul.f32 %v3583, 0.63576
        %v4096 = vmul.f32 %v3584, 0.63576
        %v4097 = vmul.f32 %v3585, 0.63576
        %v4098 = vmul.f32 %v3586, 0.63576
        %v4099 = vmul.f32 %v3587, 0.63576
        %v4100 = vmul.f32 %v3588, 0.63576
        %v4101 = vmul.f32 %v3589, 0.63576
        %v4102 = vmul.f32 %v3590, 0.63576
        %v4103 = vmul.f32 %v3591, 0.63576
        %v4104 = vmul.f32 %v3592, 0.63576
        %v4105 = vmul.f32 %v3593, 0.63576
        %v4106 = vmul.f32 %v3594, 0.63576
        %v4107 = vmul.f32 %v3595, 0.63576
        %v4108 = vmul.f32 %v3596, 0.63576
        %v4109 = vmul.f32 %v3597, 0.63576
        %v4110 = vmul.f32 %v3598, 0.63576
        %v4111 = vmul.f32 %v3599, 0.63576
        %v4112 = vmul.f32 %v3600, 0.63576
        %v4113 = vmul.f32 %v3601, 0.63576
        %v4114 = vmul.f32 %v3602, 0.63576
        %v4115 = vmul.f32 %v3603, 0.63576
        %v4116 = vmul.f32 %v3604, 0.63576
        %v4117 = vmul.f32 %v3605, 0.63576
        %v4118 = vmul.f32 %v3606, 0.63576
        %v4119 = vmul.f32 %v3607, 0.63576
        %v4120 = vmul.f32 %v3608, 0.63576
        %v4121 = vmul.f32 %v3609, 0.63576
        %v4122 = vmul.f32 %v3610, 0.63576
        %v4123 = vmul.f32 %v3611, 0.63576
        %v4124 = vmul.f32 %v3612, 0.63576
        %v4125 = vmul.f32 %v3613, 0.63576
        %v4126 = vmul.f32 %v3614, 0.63576
        %v4127 = vmul.f32 %v3615, 0.63576
        %v4128 = vmul.f32 %v3616, 0.63576
        %v4129 = vmul.f32 %v3617, 0.63576
        %v4130 = vmul.f32 %v3618, 0.63576
        %v4131 = vmul.f32 %v3619, 0.63576
        %v4132 = vmul.f32 %v3620, 0.63576
        %v4133 = vmul.f32 %v3621, 0.63576
        %v4134 = vmul.f32 %v3622, 0.63576
        %v4135 = vmul.f32 %v3623, 0.63576
        %v4136 = vmul.f32 %v3624, 0.63576
        %v4137 = vmul.f32 %v3625, 0.63576
        %v4138 = vmul.f32 %v3626, 0.63576
        %v4139 = vmul.f32 %v3627, 0.63576
        %v4140 = vmul.f32 %v3628, 0.63576
        %v4141 = vmul.f32 %v3629, 0.63576
        %v4142 = vmul.f32 %v3630, 0.63576
        %v4143 = vmul.f32 %v3631, 0.63576
        %v4144 = vmul.f32 %v3632, 0.63576
        %v4145 = vmul.f32 %v3633, 0.63576
        %v4146 = vmul.f32 %v3634, 0.63576
        %v4147 = vmul.f32 %v3635, 0.63576
        %v4148 = vmul.f32 %v3636, 0.63576
        %v4149 = vmul.f32 %v3637, 0.63576
        %v4150 = vmul.f32 %v3638, 0.63576
        %v4151 = vmul.f32 %v3639, 0.63576
        %v4152 = vmul.f32 %v3640, 0.63576
        %v4153 = vmul.f32 %v3641, 0.63576
        %v4154 = vmul.f32 %v3642, 0.63576
        %v4155 = vmul.f32 %v3643, 0.63576
        %v4156 = vmul.f32 %v3644, 0.63576
        %v4157 = vmul.f32 %v3645, 0.63576
        %v4158 = vmul.f32 %v3646, 0.63576
        %v4159 = vmul.f32 %v3647, 0.63576
        %v4160 = vmul.f32 %v3648, 0.63576
        %v4161 = vmul.f32 %v3649, 0.63576
        %v4162 = vmul.f32 %v3650, 0.63576
        %v4163 = vmul.f32 %v3651, 0.63576
        %v4164 = vmul.f32 %v3652, 0.63576
        %v4165 = vmul.f32 %v3653, 0.63576
        %v4166 = vmul.f32 %v3654, 0.63576
        %v4167 = vmul.f32 %v3655, 0.63576
        %v4168 = vmul.f32 %v3656, 0.63576
        %v4169 = vmul.f32 %v3657, 0.63576
        %v4170 = vmul.f32 %v3658, 0.63576
        %v4171 = vmul.f32 %v3659, 0.63576
        %v4172 = vmul.f32 %v3660, 0.63576
        %v4173 = vmul.f32 %v3661, 0.63576
        %v4174 = vmul.f32 %v3662, 0.63576
        %v4175 = vmul.f32 %v3663, 0.63576
        %v4176 = vmul.f32 %v3664, 0.63576
        %v4177 = vmul.f32 %v3665, 0.63576
        %v4178 = vmul.f32 %v3666, 0.63576
        %v4179 = vmul.f32 %v3667, 0.63576
        %v4180 = vmul.f32 %v3668, 0.63576
        %v4181 = vmul.f32 %v3669, 0.63576
        %v4182 = vmul.f32 %v3670, 0.63576
        %v4183 = vmul.f32 %v3671, 0.63576
        %v4184 = vmul.f32 %v3672, 0.63576
        %v4185 = vmul.f32 %v3673, 0.63576
        %v4186 = vmul.f32 %v3674, 0.63576
        %v4187 = vmul.f32 %v3675, 0.63576
        %v4188 = vmul.f32 %v3676, 0.63576
        %v4189 = vmul.f32 %v3677, 0.63576
        %v4190 = vmul.f32 %v3678, 0.63576
        %v4191 = vmul.f32 %v3679, 0.63576
        %v4192 = vmul.f32 %v3680, 0.63576
        %v4193 = vmul.f32 %v3681, 0.63576
        %v4194 = vmul.f32 %v3682, 0.63576
        %v4195 = vmul.f32 %v3683, 0.63576
        %v4196 = vmul.f32 %v3813, 0.5
        %v4197 = vmul.f32 %v3815, 0.5
        %v4198 = vmul.f32 %v3817, 0.5
        %v4199 = vmul.f32 %v3819, 0.5
        %v4200 = vmul.f32 %v3821, 0.5
        %v4201 = vmul.f32 %v3823, 0.5
        %v4202 = vmul.f32 %v3825, 0.5
        %v4203 = vmul.f32 %v3827, 0.5
        %v4204 = vmul.f32 %v3829, 0.5
        %v4205 = vmul.f32 %v3831, 0.5
        %v4206 = vmul.f32 %v3833, 0.5
        %v4207 = vmul.f32 %v3835, 0.5
        %v4208 = vmul.f32 %v3837, 0.5
        %v4209 = vmul.f32 %v3839, 0.5
        %v4210 = vmul.f32 %v3841, 0.5
        %v4211 = vmul.f32 %v3843, 0.5
        %v4212 = vmul.f32 %v3845, 0.5
        %v4213 = vmul.f32 %v3847, 0.5
        %v4214 = vmul.f32 %v3849, 0.5
        %v4215 = vmul.f32 %v3851, 0.5
        %v4216 = vmul.f32 %v3853, 0.5
        %v4217 = vmul.f32 %v3855, 0.5
        %v4218 = vmul.f32 %v3857, 0.5
        %v4219 = vmul.f32 %v3859, 0.5
        %v4220 = vmul.f32 %v3861, 0.5
        %v4221 = vmul.f32 %v3863, 0.5
        %v4222 = vmul.f32 %v3865, 0.5
        %v4223 = vmul.f32 %v3867, 0.5
        %v4224 = vmul.f32 %v3869, 0.5
        %v4225 = vmul.f32 %v3871, 0.5
        %v4226 = vmul.f32 %v3873, 0.5
        %v4227 = vmul.f32 %v3875, 0.5
        %v4228 = vmul.f32 %v3877, 0.5
        %v4229 = vmul.f32 %v3879, 0.5
        %v4230 = vmul.f32 %v3881, 0.5
        %v4231 = vmul.f32 %v3883, 0.5
        %v4232 = vmul.f32 %v3885, 0.5
        %v4233 = vmul.f32 %v3887, 0.5
        %v4234 = vmul.f32 %v3889, 0.5
        %v4235 = vmul.f32 %v3891, 0.5
        %v4236 = vmul.f32 %v3893, 0.5
        %v4237 = vmul.f32 %v3895, 0.5
        %v4238 = vmul.f32 %v3897, 0.5
        %v4239 = vmul.f32 %v3899, 0.5
        %v4240 = vmul.f32 %v3901, 0.5
        %v4241 = vmul.f32 %v3903, 0.5
        %v4242 = vmul.f32 %v3905, 0.5
        %v4243 = vmul.f32 %v3907, 0.5
        %v4244 = vmul.f32 %v3909, 0.5
        %v4245 = vmul.f32 %v3911, 0.5
        %v4246 = vmul.f32 %v3913, 0.5
        %v4247 = vmul.f32 %v3915, 0.5
        %v4248 = vmul.f32 %v3917, 0.5
        %v4249 = vmul.f32 %v3919, 0.5
        %v4250 = vmul.f32 %v3921, 0.5
        %v4251 = vmul.f32 %v3923, 0.5
        %v4252 = vmul.f32 %v3925, 0.5
        %v4253 = vmul.f32 %v3927, 0.5
        %v4254 = vmul.f32 %v3929, 0.5
        %v4255 = vmul.f32 %v3931, 0.5
        %v4256 = vmul.f32 %v3933, 0.5
        %v4257 = vmul.f32 %v3935, 0.5
        %v4258 = vmul.f32 %v3937, 0.5
        %v4259 = vmul.f32 %v3939, 0.5
        %v4260 = vmul.f32 %v3941, 0.5
        %v4261 = vmul.f32 %v3943, 0.5
        %v4262 = vmul.f32 %v3945, 0.5
        %v4263 = vmul.f32 %v3947, 0.5
        %v4264 = vmul.f32 %v3949, 0.5
        %v4265 = vmul.f32 %v3951, 0.5
        %v4266 = vmul.f32 %v3953, 0.5
        %v4267 = vmul.f32 %v3955, 0.5
        %v4268 = vmul.f32 %v3957, 0.5
        %v4269 = vmul.f32 %v3959, 0.5
        %v4270 = vmul.f32 %v3961, 0.5
        %v4271 = vmul.f32 %v3963, 0.5
        %v4272 = vmul.f32 %v3965, 0.5
        %v4273 = vmul.f32 %v3967, 0.5
        %v4274 = vmul.f32 %v3969, 0.5
        %v4275 = vmul.f32 %v3971, 0.5
        %v4276 = vmul.f32 %v3973, 0.5
        %v4277 = vmul.f32 %v3975, 0.5
        %v4278 = vmul.f32 %v3977, 0.5
        %v4279 = vmul.f32 %v3979, 0.5
        %v4280 = vmul.f32 %v3981, 0.5
        %v4281 = vmul.f32 %v3983, 0.5
        %v4282 = vmul.f32 %v3985, 0.5
        %v4283 = vmul.f32 %v3987, 0.5
        %v4284 = vmul.f32 %v3989, 0.5
        %v4285 = vmul.f32 %v3991, 0.5
        %v4286 = vmul.f32 %v3993, 0.5
        %v4287 = vmul.f32 %v3995, 0.5
        %v4288 = vmul.f32 %v3997, 0.5
        %v4289 = vmul.f32 %v3999, 0.5
        %v4290 = vmul.f32 %v4001, 0.5
        %v4291 = vmul.f32 %v4003, 0.5
        %v4292 = vmul.f32 %v4005, 0.5
        %v4293 = vmul.f32 %v4007, 0.5
        %v4294 = vmul.f32 %v4009, 0.5
        %v4295 = vmul.f32 %v4011, 0.5
        %v4296 = vmul.f32 %v4013, 0.5
        %v4297 = vmul.f32 %v4015, 0.5
        %v4298 = vmul.f32 %v4017, 0.5
        %v4299 = vmul.f32 %v4019, 0.5
        %v4300 = vmul.f32 %v4021, 0.5
        %v4301 = vmul.f32 %v4023, 0.5
        %v4302 = vmul.f32 %v4025, 0.5
        %v4303 = vmul.f32 %v4027, 0.5
        %v4304 = vmul.f32 %v4029, 0.5
        %v4305 = vmul.f32 %v4031, 0.5
        %v4306 = vmul.f32 %v4033, 0.5
        %v4307 = vmul.f32 %v4035, 0.5
        %v4308 = vmul.f32 %v4037, 0.5
        %v4309 = vmul.f32 %v4039, 0.5
        %v4310 = vmul.f32 %v4041, 0.5
        %v4311 = vmul.f32 %v4043, 0.5
        %v4312 = vmul.f32 %v4045, 0.5
        %v4313 = vmul.f32 %v4047, 0.5
        %v4314 = vmul.f32 %v4049, 0.5
        %v4315 = vmul.f32 %v4051, 0.5
        %v4316 = vmul.f32 %v4053, 0.5
        %v4317 = vmul.f32 %v4055, 0.5
        %v4318 = vmul.f32 %v4057, 0.5
        %v4319 = vmul.f32 %v4059, 0.5
        %v4320 = vmul.f32 %v4061, 0.5
        %v4321 = vmul.f32 %v4063, 0.5
        %v4322 = vmul.f32 %v4065, 0.5
        %v4323 = vmul.f32 %v4067, 0.5
        %v4324 = vsub.f32 %v4068, %v4196
        %v4325 = vsub.f32 %v4069, %v4197
        %v4326 = vsub.f32 %v4070, %v4198
        %v4327 = vsub.f32 %v4071, %v4199
        %v4328 = vsub.f32 %v4072, %v4200
        %v4329 = vsub.f32 %v4073, %v4201
        %v4330 = vsub.f32 %v4074, %v4202
        %v4331 = vsub.f32 %v4075, %v4203
        %v4332 = vsub.f32 %v4076, %v4204
        %v4333 = vsub.f32 %v4077, %v4205
        %v4334 = vsub.f32 %v4078, %v4206
        %v4335 = vsub.f32 %v4079, %v4207
        %v4336 = vsub.f32 %v4080, %v4208
        %v4337 = vsub.f32 %v4081, %v4209
        %v4338 = vsub.f32 %v4082, %v4210
        %v4339 = vsub.f32 %v4083, %v4211
        %v4340 = vsub.f32 %v4084, %v4212
        %v4341 = vsub.f32 %v4085, %v4213
        %v4342 = vsub.f32 %v4086, %v4214
        %v4343 = vsub.f32 %v4087, %v4215
        %v4344 = vsub.f32 %v4088, %v4216
        %v4345 = vsub.f32 %v4089, %v4217
        %v4346 = vsub.f32 %v4090, %v4218
        %v4347 = vsub.f32 %v4091, %v4219
        %v4348 = vsub.f32 %v4092, %v4220
        %v4349 = vsub.f32 %v4093, %v4221
        %v4350 = vsub.f32 %v4094, %v4222
        %v4351 = vsub.f32 %v4095, %v4223
        %v4352 = vsub.f32 %v4096, %v4224
        %v4353 = vsub.f32 %v4097, %v4225
        %v4354 = vsub.f32 %v4098, %v4226
        %v4355 = vsub.f32 %v4099, %v4227
        %v4356 = vsub.f32 %v4100, %v4228
        %v4357 = vsub.f32 %v4101, %v4229
        %v4358 = vsub.f32 %v4102, %v4230
        %v4359 = vsub.f32 %v4103, %v4231
        %v4360 = vsub.f32 %v4104, %v4232
        %v4361 = vsub.f32 %v4105, %v4233
        %v4362 = vsub.f32 %v4106, %v4234
        %v4363 = vsub.f32 %v4107, %v4235
        %v4364 = vsub.f32 %v4108, %v4236
        %v4365 = vsub.f32 %v4109, %v4237
        %v4366 = vsub.f32 %v4110, %v4238
        %v4367 = vsub.f32 %v4111, %v4239
        %v4368 = vsub.f32 %v4112, %v4240
        %v4369 = vsub.f32 %v4113, %v4241
        %v4370 = vsub.f32 %v4114, %v4242
        %v4371 = vsub.f32 %v4115, %v4243
        %v4372 = vsub.f32 %v4116, %v4244
        %v4373 = vsub.f32 %v4117, %v4245
        %v4374 = vsub.f32 %v4118, %v4246
        %v4375 = vsub.f32 %v4119, %v4247
        %v4376 = vsub.f32 %v4120, %v4248
        %v4377 = vsub.f32 %v4121, %v4249
        %v4378 = vsub.f32 %v4122, %v4250
        %v4379 = vsub.f32 %v4123, %v4251
        %v4380 = vsub.f32 %v4124, %v4252
        %v4381 = vsub.f32 %v4125, %v4253
        %v4382 = vsub.f32 %v4126, %v4254
        %v4383 = vsub.f32 %v4127, %v4255
        %v4384 = vsub.f32 %v4128, %v4256
        %v4385 = vsub.f32 %v4129, %v4257
        %v4386 = vsub.f32 %v4130, %v4258
        %v4387 = vsub.f32 %v4131, %v4259
        %v4388 = vsub.f32 %v4132, %v4260
        %v4389 = vsub.f32 %v4133, %v4261
        %v4390 = vsub.f32 %v4134, %v4262
        %v4391 = vsub.f32 %v4135, %v4263
        %v4392 = vsub.f32 %v4136, %v4264
        %v4393 = vsub.f32 %v4137, %v4265
        %v4394 = vsub.f32 %v4138, %v4266
        %v4395 = vsub.f32 %v4139, %v4267
        %v4396 = vsub.f32 %v4140, %v4268
        %v4397 = vsub.f32 %v4141, %v4269
        %v4398 = vsub.f32 %v4142, %v4270
        %v4399 = vsub.f32 %v4143, %v4271
        %v4400 = vsub.f32 %v4144, %v4272
        %v4401 = vsub.f32 %v4145, %v4273
        %v4402 = vsub.f32 %v4146, %v4274
        %v4403 = vsub.f32 %v4147, %v4275
        %v4404 = vsub.f32 %v4148, %v4276
        %v4405 = vsub.f32 %v4149, %v4277
        %v4406 = vsub.f32 %v4150, %v4278
        %v4407 = vsub.f32 %v4151, %v4279
        %v4408 = vsub.f32 %v4152, %v4280
        %v4409 = vsub.f32 %v4153, %v4281
        %v4410 = vsub.f32 %v4154, %v4282
        %v4411 = vsub.f32 %v4155, %v4283
        %v4412 = vsub.f32 %v4156, %v4284
        %v4413 = vsub.f32 %v4157, %v4285
        %v4414 = vsub.f32 %v4158, %v4286
        %v4415 = vsub.f32 %v4159, %v4287
        %v4416 = vsub.f32 %v4160, %v4288
        %v4417 = vsub.f32 %v4161, %v4289
        %v4418 = vsub.f32 %v4162, %v4290
        %v4419 = vsub.f32 %v4163, %v4291
        %v4420 = vsub.f32 %v4164, %v4292
        %v4421 = vsub.f32 %v4165, %v4293
        %v4422 = vsub.f32 %v4166, %v4294
        %v4423 = vsub.f32 %v4167, %v4295
        %v4424 = vsub.f32 %v4168, %v4296
        %v4425 = vsub.f32 %v4169, %v4297
        %v4426 = vsub.f32 %v4170, %v4298
        %v4427 = vsub.f32 %v4171, %v4299
        %v4428 = vsub.f32 %v4172, %v4300
        %v4429 = vsub.f32 %v4173, %v4301
        %v4430 = vsub.f32 %v4174, %v4302
        %v4431 = vsub.f32 %v4175, %v4303
        %v4432 = vsub.f32 %v4176, %v4304
        %v4433 = vsub.f32 %v4177, %v4305
        %v4434 = vsub.f32 %v4178, %v4306
        %v4435 = vsub.f32 %v4179, %v4307
        %v4436 = vsub.f32 %v4180, %v4308
        %v4437 = vsub.f32 %v4181, %v4309
        %v4438 = vsub.f32 %v4182, %v4310
        %v4439 = vsub.f32 %v4183, %v4311
        %v4440 = vsub.f32 %v4184, %v4312
        %v4441 = vsub.f32 %v4185, %v4313
        %v4442 = vsub.f32 %v4186, %v4314
        %v4443 = vsub.f32 %v4187, %v4315
        %v4444 = vsub.f32 %v4188, %v4316
        %v4445 = vsub.f32 %v4189, %v4317
        %v4446 = vsub.f32 %v4190, %v4318
        %v4447 = vsub.f32 %v4191, %v4319
        %v4448 = vsub.f32 %v4192, %v4320
        %v4449 = vsub.f32 %v4193, %v4321
        %v4450 = vsub.f32 %v4194, %v4322
        %v4451 = vsub.f32 %v4195, %v4323
        %v4452 = vsub.f32 %v4324, 0.63576
        %v4453 = vsub.f32 %v4325, 0.63576
        %v4454 = vsub.f32 %v4326, 0.63576
        %v4455 = vsub.f32 %v4327, 0.63576
        %v4456 = vsub.f32 %v4328, 0.63576
        %v4457 = vsub.f32 %v4329, 0.63576
        %v4458 = vsub.f32 %v4330, 0.63576
        %v4459 = vsub.f32 %v4331, 0.63576
        %v4460 = vsub.f32 %v4332, 0.63576
        %v4461 = vsub.f32 %v4333, 0.63576
        %v4462 = vsub.f32 %v4334, 0.63576
        %v4463 = vsub.f32 %v4335, 0.63576
        %v4464 = vsub.f32 %v4336, 0.63576
        %v4465 = vsub.f32 %v4337, 0.63576
        %v4466 = vsub.f32 %v4338, 0.63576
        %v4467 = vsub.f32 %v4339, 0.63576
        %v4468 = vsub.f32 %v4340, 0.63576
        %v4469 = vsub.f32 %v4341, 0.63576
        %v4470 = vsub.f32 %v4342, 0.63576
        %v4471 = vsub.f32 %v4343, 0.63576
        %v4472 = vsub.f32 %v4344, 0.63576
        %v4473 = vsub.f32 %v4345, 0.63576
        %v4474 = vsub.f32 %v4346, 0.63576
        %v4475 = vsub.f32 %v4347, 0.63576
        %v4476 = vsub.f32 %v4348, 0.63576
        %v4477 = vsub.f32 %v4349, 0.63576
        %v4478 = vsub.f32 %v4350, 0.63576
        %v4479 = vsub.f32 %v4351, 0.63576
        %v4480 = vsub.f32 %v4352, 0.63576
        %v4481 = vsub.f32 %v4353, 0.63576
        %v4482 = vsub.f32 %v4354, 0.63576
        %v4483 = vsub.f32 %v4355, 0.63576
        %v4484 = vsub.f32 %v4356, 0.63576
        %v4485 = vsub.f32 %v4357, 0.63576
        %v4486 = vsub.f32 %v4358, 0.63576
        %v4487 = vsub.f32 %v4359, 0.63576
        %v4488 = vsub.f32 %v4360, 0.63576
        %v4489 = vsub.f32 %v4361, 0.63576
        %v4490 = vsub.f32 %v4362, 0.63576
        %v4491 = vsub.f32 %v4363, 0.63576
        %v4492 = vsub.f32 %v4364, 0.63576
        %v4493 = vsub.f32 %v4365, 0.63576
        %v4494 = vsub.f32 %v4366, 0.63576
        %v4495 = vsub.f32 %v4367, 0.63576
        %v4496 = vsub.f32 %v4368, 0.63576
        %v4497 = vsub.f32 %v4369, 0.63576
        %v4498 = vsub.f32 %v4370, 0.63576
        %v4499 = vsub.f32 %v4371, 0.63576
        %v4500 = vsub.f32 %v4372, 0.63576
        %v4501 = vsub.f32 %v4373, 0.63576
        %v4502 = vsub.f32 %v4374, 0.63576
        %v4503 = vsub.f32 %v4375, 0.63576
        %v4504 = vsub.f32 %v4376, 0.63576
        %v4505 = vsub.f32 %v4377, 0.63576
        %v4506 = vsub.f32 %v4378, 0.63576
        %v4507 = vsub.f32 %v4379, 0.63576
        %v4508 = vsub.f32 %v4380, 0.63576
        %v4509 = vsub.f32 %v4381, 0.63576
        %v4510 = vsub.f32 %v4382, 0.63576
        %v4511 = vsub.f32 %v4383, 0.63576
        %v4512 = vsub.f32 %v4384, 0.63576
        %v4513 = vsub.f32 %v4385, 0.63576
        %v4514 = vsub.f32 %v4386, 0.63576
        %v4515 = vsub.f32 %v4387, 0.63576
        %v4516 = vsub.f32 %v4388, 0.63576
        %v4517 = vsub.f32 %v4389, 0.63576
        %v4518 = vsub.f32 %v4390, 0.63576
        %v4519 = vsub.f32 %v4391, 0.63576
        %v4520 = vsub.f32 %v4392, 0.63576
        %v4521 = vsub.f32 %v4393, 0.63576
        %v4522 = vsub.f32 %v4394, 0.63576
        %v4523 = vsub.f32 %v4395, 0.63576
        %v4524 = vsub.f32 %v4396, 0.63576
        %v4525 = vsub.f32 %v4397, 0.63576
        %v4526 = vsub.f32 %v4398, 0.63576
        %v4527 = vsub.f32 %v4399, 0.63576
        %v4528 = vsub.f32 %v4400, 0.63576
        %v4529 = vsub.f32 %v4401, 0.63576
        %v4530 = vsub.f32 %v4402, 0.63576
        %v4531 = vsub.f32 %v4403, 0.63576
        %v4532 = vsub.f32 %v4404, 0.63576
        %v4533 = vsub.f32 %v4405, 0.63576
        %v4534 = vsub.f32 %v4406, 0.63576
        %v4535 = vsub.f32 %v4407, 0.63576
        %v4536 = vsub.f32 %v4408, 0.63576
        %v4537 = vsub.f32 %v4409, 0.63576
        %v4538 = vsub.f32 %v4410, 0.63576
        %v4539 = vsub.f32 %v4411, 0.63576
        %v4540 = vsub.f32 %v4412, 0.63576
        %v4541 = vsub.f32 %v4413, 0.63576
        %v4542 = vsub.f32 %v4414, 0.63576
        %v4543 = vsub.f32 %v4415, 0.63576
        %v4544 = vsub.f32 %v4416, 0.63576
        %v4545 = vsub.f32 %v4417, 0.63576
        %v4546 = vsub.f32 %v4418, 0.63576
        %v4547 = vsub.f32 %v4419, 0.63576
        %v4548 = vsub.f32 %v4420, 0.63576
        %v4549 = vsub.f32 %v4421, 0.63576
        %v4550 = vsub.f32 %v4422, 0.63576
        %v4551 = vsub.f32 %v4423, 0.63576
        %v4552 = vsub.f32 %v4424, 0.63576
        %v4553 = vsub.f32 %v4425, 0.63576
        %v4554 = vsub.f32 %v4426, 0.63576
        %v4555 = vsub.f32 %v4427, 0.63576
        %v4556 = vsub.f32 %v4428, 0.63576
        %v4557 = vsub.f32 %v4429, 0.63576
        %v4558 = vsub.f32 %v4430, 0.63576
        %v4559 = vsub.f32 %v4431, 0.63576
        %v4560 = vsub.f32 %v4432, 0.63576
        %v4561 = vsub.f32 %v4433, 0.63576
        %v4562 = vsub.f32 %v4434, 0.63576
        %v4563 = vsub.f32 %v4435, 0.63576
        %v4564 = vsub.f32 %v4436, 0.63576
        %v4565 = vsub.f32 %v4437, 0.63576
        %v4566 = vsub.f32 %v4438, 0.63576
        %v4567 = vsub.f32 %v4439, 0.63576
        %v4568 = vsub.f32 %v4440, 0.63576
        %v4569 = vsub.f32 %v4441, 0.63576
        %v4570 = vsub.f32 %v4442, 0.63576
        %v4571 = vsub.f32 %v4443, 0.63576
        %v4572 = vsub.f32 %v4444, 0.63576
        %v4573 = vsub.f32 %v4445, 0.63576
        %v4574 = vsub.f32 %v4446, 0.63576
        %v4575 = vsub.f32 %v4447, 0.63576
        %v4576 = vsub.f32 %v4448, 0.63576
        %v4577 = vsub.f32 %v4449, 0.63576
        %v4578 = vsub.f32 %v4450, 0.63576
        %v4579 = vsub.f32 %v4451, 0.63576
        %v4580 = vadd.f32 %v4452, %v4454
        %v4581 = vadd.f32 %v4580, %v4456
        %v4582 = vadd.f32 %v4581, %v4458
        %v4583 = vadd.f32 %v4582, %v4460
        %v4584 = vadd.f32 %v4583, %v4462
        %v4585 = vadd.f32 %v4584, %v4464
        %v4586 = vadd.f32 %v4585, %v4466
        %v4587 = vadd.f32 %v4586, %v4468
        %v4588 = vadd.f32 %v4587, %v4470
        %v4589 = vadd.f32 %v4588, %v4472
        %v4590 = vadd.f32 %v4589, %v4474
        %v4591 = vadd.f32 %v4590, %v4476
        %v4592 = vadd.f32 %v4591, %v4478
        %v4593 = vadd.f32 %v4592, %v4480
        %v4594 = vadd.f32 %v4593, %v4482
        %v4595 = vadd.f32 %v4594, %v4484
        %v4596 = vadd.f32 %v4595, %v4486
        %v4597 = vadd.f32 %v4596, %v4488
        %v4598 = vadd.f32 %v4597, %v4490
        %v4599 = vadd.f32 %v4598, %v4492
        %v4600 = vadd.f32 %v4599, %v4494
        %v4601 = vadd.f32 %v4600, %v4496
        %v4602 = vadd.f32 %v4601, %v4498
        %v4603 = vadd.f32 %v4602, %v4500
        %v4604 = vadd.f32 %v4603, %v4502
        %v4605 = vadd.f32 %v4604, %v4504
        %v4606 = vadd.f32 %v4605, %v4506
        %v4607 = vadd.f32 %v4606, %v4508
        %v4608 = vadd.f32 %v4607, %v4510
        %v4609 = vadd.f32 %v4608, %v4512
        %v4610 = vadd.f32 %v4609, %v4514
        %v4611 = vadd.f32 %v4610, %v4516
        %v4612 = vadd.f32 %v4611, %v4518
        %v4613 = vadd.f32 %v4612, %v4520
        %v4614 = vadd.f32 %v4613, %v4522
        %v4615 = vadd.f32 %v4614, %v4524
        %v4616 = vadd.f32 %v4615, %v4526
        %v4617 = vadd.f32 %v4616, %v4528
        %v4618 = vadd.f32 %v4617, %v4530
        %v4619 = vadd.f32 %v4618, %v4532
        %v4620 = vadd.f32 %v4619, %v4534
        %v4621 = vadd.f32 %v4620, %v4536
        %v4622 = vadd.f32 %v4621, %v4538
        %v4623 = vadd.f32 %v4622, %v4540
        %v4624 = vadd.f32 %v4623, %v4542
        %v4625 = vadd.f32 %v4624, %v4544
        %v4626 = vadd.f32 %v4625, %v4546
        %v4627 = vadd.f32 %v4626, %v4548
        %v4628 = vadd.f32 %v4627, %v4550
        %v4629 = vadd.f32 %v4628, %v4552
        %v4630 = vadd.f32 %v4629, %v4554
        %v4631 = vadd.f32 %v4630, %v4556
        %v4632 = vadd.f32 %v4631, %v4558
        %v4633 = vadd.f32 %v4632, %v4560
        %v4634 = vadd.f32 %v4633, %v4562
        %v4635 = vadd.f32 %v4634, %v4564
        %v4636 = vadd.f32 %v4635, %v4566
        %v4637 = vadd.f32 %v4636, %v4568
        %v4638 = vadd.f32 %v4637, %v4570
        %v4639 = vadd.f32 %v4638, %v4572
        %v4640 = vadd.f32 %v4639, %v4574
        %v4641 = vadd.f32 %v4640, %v4576
        %v4642 = vadd.f32 %v4641, %v4578
        %v4643 = vrot.slane %v4642, 4
        %v4644 = vadd.f32 %v4642, %v4643
        %v4645 = vrot.slane %v4644, 2
        %v4646 = vadd.f32 %v4644, %v4645
        %v4647 = vrot.slane %v4646, 1
        %v4648 = vadd.f32 %v4646, %v4647
        %v4649 = vadd.f32 %v4453, %v4455
        %v4650 = vadd.f32 %v4649, %v4457
        %v4651 = vadd.f32 %v4650, %v4459
        %v4652 = vadd.f32 %v4651, %v4461
        %v4653 = vadd.f32 %v4652, %v4463
        %v4654 = vadd.f32 %v4653, %v4465
        %v4655 = vadd.f32 %v4654, %v4467
        %v4656 = vadd.f32 %v4655, %v4469
        %v4657 = vadd.f32 %v4656, %v4471
        %v4658 = vadd.f32 %v4657, %v4473
        %v4659 = vadd.f32 %v4658, %v4475
        %v4660 = vadd.f32 %v4659, %v4477
        %v4661 = vadd.f32 %v4660, %v4479
        %v4662 = vadd.f32 %v4661, %v4481
        %v4663 = vadd.f32 %v4662, %v4483
        %v4664 = vadd.f32 %v4663, %v4485
        %v4665 = vadd.f32 %v4664, %v4487
        %v4666 = vadd.f32 %v4665, %v4489
        %v4667 = vadd.f32 %v4666, %v4491
        %v4668 = vadd.f32 %v4667, %v4493
        %v4669 = vadd.f32 %v4668, %v4495
        %v4670 = vadd.f32 %v4669, %v4497
        %v4671 = vadd.f32 %v4670, %v4499
        %v4672 = vadd.f32 %v4671, %v4501
        %v4673 = vadd.f32 %v4672, %v4503
        %v4674 = vadd.f32 %v4673, %v4505
        %v4675 = vadd.f32 %v4674, %v4507
        %v4676 = vadd.f32 %v4675, %v4509
        %v4677 = vadd.f32 %v4676, %v4511
        %v4678 = vadd.f32 %v4677, %v4513
        %v4679 = vadd.f32 %v4678, %v4515
        %v4680 = vadd.f32 %v4679, %v4517
        %v4681 = vadd.f32 %v4680, %v4519
        %v4682 = vadd.f32 %v4681, %v4521
        %v4683 = vadd.f32 %v4682, %v4523
        %v4684 = vadd.f32 %v4683, %v4525
        %v4685 = vadd.f32 %v4684, %v4527
        %v4686 = vadd.f32 %v4685, %v4529
        %v4687 = vadd.f32 %v4686, %v4531
        %v4688 = vadd.f32 %v4687, %v4533
        %v4689 = vadd.f32 %v4688, %v4535
        %v4690 = vadd.f32 %v4689, %v4537
        %v4691 = vadd.f32 %v4690, %v4539
        %v4692 = vadd.f32 %v4691, %v4541
        %v4693 = vadd.f32 %v4692, %v4543
        %v4694 = vadd.f32 %v4693, %v4545
        %v4695 = vadd.f32 %v4694, %v4547
        %v4696 = vadd.f32 %v4695, %v4549
        %v4697 = vadd.f32 %v4696, %v4551
        %v4698 = vadd.f32 %v4697, %v4553
        %v4699 = vadd.f32 %v4698, %v4555
        %v4700 = vadd.f32 %v4699, %v4557
        %v4701 = vadd.f32 %v4700, %v4559
        %v4702 = vadd.f32 %v4701, %v4561
        %v4703 = vadd.f32 %v4702, %v4563
        %v4704 = vadd.f32 %v4703, %v4565
        %v4705 = vadd.f32 %v4704, %v4567
        %v4706 = vadd.f32 %v4705, %v4569
        %v4707 = vadd.f32 %v4706, %v4571
        %v4708 = vadd.f32 %v4707, %v4573
        %v4709 = vadd.f32 %v4708, %v4575
        %v4710 = vadd.f32 %v4709, %v4577
        %v4711 = vadd.f32 %v4710, %v4579
        %v4712 = vrot.slane %v4711, 4
        %v4713 = vadd.f32 %v4711, %v4712
        %v4714 = vrot.slane %v4713, 2
        %v4715 = vadd.f32 %v4713, %v4714
        %v4716 = vrot.slane %v4715, 1
        %v4717 = vadd.f32 %v4715, %v4716
        %v4720 = vrot.slane %v4717, 7
        %vm4721 = vcmask 1040384
        %v4722 = vsel %vm4721, %v4648, %v4720
        %v4724 = vlaneseq
        %vm4725 = vcmp.ge.s32.totalorder %v4724, 0
        %vm4726 = vcmp.lt.s32.totalorder %v4724, 256
        %vm4727 = vmand %vm4725, %vm4726
        %4728 = vst.msk [vmem:[%s370] sm:$0x3] %vm4727, %v4722
        %s4729 = smul.u32 2, %s24
        %p4730 = scmp.lt.s32.totalorder %s4729, 3
        %s4731 = scalar_select %p4730, %s4729, 3
        %s4732 = smul.addr %s4731, 8
        %s4733 = scalar_lea.vmem %s5, %s4732
        %s4734 = smul.u32 2, %s24
        %p4735 = scmp.lt.s32.totalorder %s4734, 3
        %s4736 = scalar_select %p4735, %s4734, 3
        %s4737 = scalar_lea.vmem %s6, %s4736
        // Predicated region
        $region49: #{variational_dropout_train.1} parent=39 // pred_check
          %p4738 = pneg %p167
        $region50: #{variational_dropout_train.1} parent=39 // pred_check_branch
          %4740 = sbr.rel (%p4738) target = $region52
        $region51: #{variational_dropout_train.1} parent=39 // pred_region
          %s4741 = smul.u32 2, %s24
        $region52: #{variational_dropout_train.1} parent=39 // pred_fallthru
          _
        // Predicated region
        $region53: #{variational_dropout_train.1} parent=39 // pred_check
          %p4742 = pneg %p193
        $region54: #{variational_dropout_train.1} parent=39 // pred_check_branch
          %4744 = sbr.rel (%p4742) target = $region56
        $region55: #{variational_dropout_train.1} parent=39 // pred_region
          %s4745 = smul.u32 2, %s24
        $region56: #{variational_dropout_train.1} parent=39 // pred_fallthru
          _
      $region40: #{variational_dropout_train.1} parent=5 // pred_fallthru
        _
      %p4746 = scmp.le.s32.totalorder 2, %s19
      // Predicated region
      $region57: #{variational_dropout_train.1} parent=5 // pred_check
        %p4747 = pneg %p4746
      $region58: #{variational_dropout_train.1} parent=5 // pred_check_branch
        %4749 = sbr.rel (%p4747) target = $region60
      $region59: #{variational_dropout_train.1} parent=5 // pred_region
        %s4750 = ssub.s32 %s19, 2
        // Predicated region
        $region61: #{variational_dropout_train.1} parent=59 // pred_check
          %p4751 = pneg %p173
        $region62: #{variational_dropout_train.1} parent=59 // pred_check_branch
          %4753 = sbr.rel (%p4751) target = $region64
        $region63: #{variational_dropout_train.1} parent=59 // pred_region
          %s4754 = smul.u32 2, %s25
          %p4755 = scmp.lt.s32.totalorder %s4754, 3
          %s4756 = scalar_select %p4755, %s4754, 3
          %s4757 = smul.addr %s4756, 8
          %s4758 = scalar_lea.vmem %s5, %s4757
        $region64: #{variational_dropout_train.1} parent=59 // pred_fallthru
          _
        // Predicated region
        $region65: #{variational_dropout_train.1} parent=59 // pred_check
          %p4759 = pneg %p199
        $region66: #{variational_dropout_train.1} parent=59 // pred_check_branch
          %4761 = sbr.rel (%p4759) target = $region68
        $region67: #{variational_dropout_train.1} parent=59 // pred_region
          %s4762 = smul.u32 2, %s25
          %p4763 = scmp.lt.s32.totalorder %s4762, 3
          %s4764 = scalar_select %p4763, %s4762, 3
          %s4765 = scalar_lea.vmem %s6, %s4764
        $region68: #{variational_dropout_train.1} parent=59 // pred_fallthru
          _
      $region60: #{variational_dropout_train.1} parent=5 // pred_fallthru
        _
    $region6: #{variational_dropout_train.1} parent=1 // loop_footer
      %s23 = sadd.s32 1, %s19
    $region7: #{variational_dropout_train.1} parent=1 // loop_footer_branch
      %18 = sbr.rel target = $region3
    $region8: #{variational_dropout_train.1} parent=1 // loop_exit
      _
    %4766 = vsyncpa [#allocation3], 1
    %s4767 = scalar_lea.sflag [#allocation3], 1
    %4768 = vsyncpa %s4767, 1
    %4769 = vsyncpa [#allocation5], 1
    %s4770 = scalar_lea.sflag [#allocation5], 1
    %4771 = vsyncpa %s4770, 1

</llo_original>
